<compile_context>
chip_gen: v6e
topology: v6e:2x2x1
jax: 0.10.0
libtpu: 0.0.40
codegen_flags: <defaults>
</compile_context>

<pallas_src>
import functools

import jax
import jax.numpy as jnp
from jax.experimental import pallas as pl
from jax.experimental.pallas import tpu as pltpu


# ---------------------------------------------------------------------------
# Fused kernel
# ---------------------------------------------------------------------------
def _im2col_3x3(src_ref, dst_ref, h, w, c):
    """Gather 3x3 taps of a padded (h+2, w+2, c) ref into a (h*w, 9*c) patch matrix."""
    for kh in range(3):
        for kw in range(3):
            j = kh * 3 + kw
            dst_ref[:, j * c:(j + 1) * c] = (
                src_ref[kh:kh + h, kw:kw + w, :].reshape(h * w, c))


def _basenet_kernel(x_ref, w1_ref, w2_ref, w3_ref, aff_ref, psel_ref, wc_ref, bc_ref,
                    o_ref, xpad_ref, pc1_ref, ypad_ref, pc2_ref, flat_ref,
                    *, H, W, Cin):
    f32 = jnp.float32
    Hp, Wp = H // 2, W // 2
    HW, P = H * W, Hp * Wp

    # ---- conv1 (3x3, pad=1, bias folded) + bn1 + relu: im2col once + 1 MXU matmul ----
    xpad_ref[...] = jnp.zeros((H + 2, W + 2, 8), f32)          # spatial pad + Cin 5->8 pad
    xpad_ref[1:H + 1, 1:W + 1, 0:Cin] = x_ref[0]
    _im2col_3x3(xpad_ref, pc1_ref, H, W, 8)                    # (HW, 72)
    y = jnp.dot(pc1_ref[...], w1_ref[...], preferred_element_type=f32)   # (HW, 64)
    y = jnp.maximum(y * aff_ref[0:1, :] + aff_ref[1:2, :], 0.0)

    # ---- 2x2/2 max-pool, fused: 4 selection matmuls (MXU gather) + elementwise max ----
    p00 = jnp.dot(psel_ref[0], y, preferred_element_type=f32)  # (P, 64) each
    p01 = jnp.dot(psel_ref[1], y, preferred_element_type=f32)
    p10 = jnp.dot(psel_ref[2], y, preferred_element_type=f32)
    p11 = jnp.dot(psel_ref[3], y, preferred_element_type=f32)
    pooled = jnp.maximum(jnp.maximum(p00, p01), jnp.maximum(p10, p11))    # (P, 64)

    # ---- layer1 conv a + bn + relu ----
    ypad_ref[...] = jnp.zeros((Hp + 2, Wp + 2, 64), f32)
    ypad_ref[1:Hp + 1, 1:Wp + 1, :] = pooled.reshape(Hp, Wp, 64)
    _im2col_3x3(ypad_ref, pc2_ref, Hp, Wp, 64)                 # (P, 576)
    y = jnp.dot(pc2_ref[...], w2_ref[...], preferred_element_type=f32)    # (P, 64)
    y = jnp.maximum(y * aff_ref[2:3, :] + aff_ref[3:4, :], 0.0)

    # ---- layer1 conv b + bn + relu (reuse padded scratch; its zero border is intact) ----
    ypad_ref[1:Hp + 1, 1:Wp + 1, :] = y.reshape(Hp, Wp, 64)
    _im2col_3x3(ypad_ref, pc2_ref, Hp, Wp, 64)
    y = jnp.dot(pc2_ref[...], w3_ref[...], preferred_element_type=f32)    # (P, 64)
    y = jnp.maximum(y * aff_ref[4:5, :] + aff_ref[5:6, :], 0.0)

    # ---- flatten (NCHW order folded into wc at init) + dropout(identity) + cls linear ----
    for q in range(P):                                          # (P,64) -> (1, P*64)
        flat_ref[:, q * 64:(q + 1) * 64] = y[q:q + 1, :]
    logits = jnp.dot(flat_ref[...], wc_ref[...], preferred_element_type=f32) + bc_ref[...]
    o_ref[0] = logits                                           # lane-dense (1, 128)


# ---------------------------------------------------------------------------
# Wrapper
# ---------------------------------------------------------------------------
def basenet_forward(kp, x_nchw, *, class_num):
    """Eval-mode BaseNet.forward(x, mode='train') -> class logits."""
    B, Cin, H, W = x_nchw.shape
    Hp, Wp = H // 2, W // 2
    x = jnp.transpose(x_nchw, (0, 2, 3, 1))                     # NCHW -> NHWC (tiny, once)

    kernel = functools.partial(_basenet_kernel, H=H, W=W, Cin=Cin)
    out = pl.pallas_call(
        kernel,
        out_shape=jax.ShapeDtypeStruct((B, 1, 128), jnp.float32),
        grid=(B,),
        in_specs=[
            pl.BlockSpec((1, H, W, Cin), lambda b: (b, 0, 0, 0)),
            pl.BlockSpec((72, 64), lambda b: (0, 0)),                 # conv1 im2col weight
            pl.BlockSpec((576, 64), lambda b: (0, 0)),                # layer1 conv a
            pl.BlockSpec((576, 64), lambda b: (0, 0)),                # layer1 conv b
            pl.BlockSpec((6, 64), lambda b: (0, 0)),                  # folded BN scale/shift
            pl.BlockSpec((4, Hp * Wp, H * W), lambda b: (0, 0, 0)),   # maxpool selectors
            pl.BlockSpec((Hp * Wp * 64, 128), lambda b: (0, 0)),      # cls weight (perm+pad)
            pl.BlockSpec((1, 128), lambda b: (0, 0)),                 # cls bias (padded)
        ],
        out_specs=pl.BlockSpec((1, 1, 128), lambda b: (b, 0, 0)),
        scratch_shapes=[
            pltpu.VMEM((H + 2, W + 2, 8), jnp.float32),     # padded conv1 input
            pltpu.VMEM((H * W, 72), jnp.float32),           # conv1 im2col patches
            pltpu.VMEM((Hp + 2, Wp + 2, 64), jnp.float32),  # padded layer1 input (reused)
            pltpu.VMEM((Hp * Wp, 576), jnp.float32),        # layer1 im2col patches (reused)
            pltpu.VMEM((1, Hp * Wp * 64), jnp.float32),     # flattened feature row
        ],
        compiler_params=pltpu.CompilerParams(
            dimension_semantics=("parallel",)),             # v7x: one batch element per TC
    )(x, kp["w1"], kp["w2"], kp["w3"], kp["aff"], kp["pool_sel"], kp["wc"], kp["bc"])
    return out.reshape(B, 128)[:, :class_num]


# ---------------------------------------------------------------------------
# Parameters: deterministic synthetic init + one-time (offline) kernel-layout prep
# ---------------------------------------------------------------------------
def _bn_params(key, c):
    k1, k2, k3, k4 = jax.random.split(key, 4)
    return dict(
        gamma=1.0 + 0.1 * jax.random.normal(k1, (c,), jnp.float32),
        beta=0.1 * jax.random.normal(k2, (c,), jnp.float32),
        mean=0.1 * jax.random.normal(k3, (c,), jnp.float32),
        var=1.0 + 0.5 * jax.random.uniform(k4, (c,), jnp.float32),
    )


def _fold_bn(conv_bias, gamma, beta, mean, var, eps=1e-5):
    s = gamma / jnp.sqrt(var + eps)
    return s, conv_bias * s + beta - mean * s


def init_params(key, class_num=10):
    ks = jax.random.split(key, 10)
    p = {}
    # conv1: 5 -> 64, 3x3, bias=True (weights HWIO)
    p["conv1_w"] = 0.05 * jax.random.normal(ks[0], (3, 3, 5, 64), jnp.float32)
    p["conv1_b"] = 0.05 * jax.random.normal(ks[1], (64,), jnp.float32)
    p["bn1"] = _bn_params(ks[2], 64)
    # resnet18 layer1[0] convs: 64 -> 64, 3x3, bias=False (synthetic stand-ins)
    p["l1c1_w"] = 0.05 * jax.random.normal(ks[3], (3, 3, 64, 64), jnp.float32)
    p["l1bn1"] = _bn_params(ks[4], 64)
    p["l1c2_w"] = 0.05 * jax.random.normal(ks[5], (3, 3, 64, 64), jnp.float32)
    p["l1bn2"] = _bn_params(ks[6], 64)
    # cls: Linear(64*8*4, class_num); rows indexed in PyTorch NCHW-flatten order
    p["cls_w"] = 0.02 * jax.random.normal(ks[7], (64 * 8 * 4, class_num), jnp.float32)
    p["cls_b"] = 0.02 * jax.random.normal(ks[8], (class_num,), jnp.float32)
    return p


def prepare_params(p, class_num, H=16, W=8):
    """One-time weight preprocessing (done once, outside the forward)."""
    assert class_num <= 128
    Hp, Wp, C = H // 2, W // 2, 64
    kp = {}
    # folded BN scale/shift, packed as one (6, 64) array: rows s1,t1,s2,t2,s3,t3
    s1, t1 = _fold_bn(p["conv1_b"], **p["bn1"])
    zero = jnp.zeros((C,), jnp.float32)
    s2, t2 = _fold_bn(zero, **p["l1bn1"])
    s3, t3 = _fold_bn(zero, **p["l1bn2"])
    kp["aff"] = jnp.stack([s1, t1, s2, t2, s3, t3])
    # conv weights in im2col layout; conv1 Cin zero-padded 5 -> 8
    kp["w1"] = jnp.pad(p["conv1_w"], ((0, 0), (0, 0), (0, 3), (0, 0))).reshape(9 * 8, C)
    kp["w2"] = p["l1c1_w"].reshape(9 * C, C)
    kp["w3"] = p["l1c2_w"].reshape(9 * C, C)
    # 2x2 maxpool as 4 one-hot selection matrices (used as MXU gathers in-kernel)
    q = jnp.arange(Hp * Wp)
    ho, wo = q // Wp, q % Wp
    r = jnp.arange(H * W)
    sels = [(((2 * ho + dh) * W + (2 * wo + dw))[:, None] == r[None, :]).astype(jnp.float32)
            for dh in (0, 1) for dw in (0, 1)]
    kp["pool_sel"] = jnp.stack(sels)                            # (4, Hp*Wp, H*W)
    # fold the NCHW `view(B, -1)` permutation into the classifier weight; pad N -> 128
    jh, jw, jc = jnp.meshgrid(jnp.arange(Hp), jnp.arange(Wp), jnp.arange(C), indexing="ij")
    perm = (jc * (Hp * Wp) + jh * Wp + jw).reshape(-1)          # NHWC flat pos -> NCHW row
    kp["wc"] = jnp.pad(p["cls_w"][perm, :], ((0, 0), (0, 128 - class_num)))
    kp["bc"] = jnp.pad(p["cls_b"], (0, 128 - class_num)).reshape(1, 128)
    return kp


if __name__ == "__main__":
    key = jax.random.PRNGKey(0)
    kparam_key, kx = jax.random.split(key)
    class_num = 10
    params = init_params(kparam_key, class_num=class_num)
    kparams = prepare_params(params, class_num)                 # one-time offline prep

    # NCHW input: batch=2, channels=5, H=16, W=8  (so flat feature = 64*8*4 = 2048)
    x = jax.random.normal(kx, (2, 5, 16, 8), jnp.float32)

    fwd = jax.jit(functools.partial(basenet_forward, class_num=class_num))
    out = jax.block_until_ready(fwd(kparams, x))
    assert out.shape == (2, class_num)
    assert bool(jnp.all(jnp.isfinite(out)))
    print("KERNEL_OK")
</pallas_src>

<mosaic_0001>
module attributes {stable_mosaic.version = 11 : i64} {
  func.func @_basenet_kernel(%arg0: i32, %arg1: memref<1x16x8x5xf32, #tpu.memory_space<vmem>>, %arg2: memref<72x64xf32, #tpu.memory_space<vmem>>, %arg3: memref<576x64xf32, #tpu.memory_space<vmem>>, %arg4: memref<576x64xf32, #tpu.memory_space<vmem>>, %arg5: memref<6x64xf32, #tpu.memory_space<vmem>>, %arg6: memref<4x32x128xf32, #tpu.memory_space<vmem>>, %arg7: memref<2048x128xf32, #tpu.memory_space<vmem>>, %arg8: memref<1x128xf32, #tpu.memory_space<vmem>>, %arg9: memref<1x1x128xf32, #tpu.memory_space<vmem>>, %arg10: memref<18x10x8xf32, #tpu.memory_space<vmem>>, %arg11: memref<128x72xf32, #tpu.memory_space<vmem>>, %arg12: memref<10x6x64xf32, #tpu.memory_space<vmem>>, %arg13: memref<32x576xf32, #tpu.memory_space<vmem>>, %arg14: memref<1x2048xf32, #tpu.memory_space<vmem>>) attributes {dimension_semantics = [#tpu.dimension_semantics<parallel>], iteration_bounds = array<i64: 2>, scalar_prefetch = 0 : i64, scratch_operands = 5 : i64, tpu.core_type = #tpu.core_type<tc>, window_params = [{transform_indices = @transform_0, window_bounds = array<i64: 1, 16, 8, 5>}, {pipeline_mode = #tpu.pipeline_mode<synchronous>, transform_indices = @transform_1, window_bounds = array<i64: 72, 64>}, {pipeline_mode = #tpu.pipeline_mode<synchronous>, transform_indices = @transform_2, window_bounds = array<i64: 576, 64>}, {pipeline_mode = #tpu.pipeline_mode<synchronous>, transform_indices = @transform_3, window_bounds = array<i64: 576, 64>}, {pipeline_mode = #tpu.pipeline_mode<synchronous>, transform_indices = @transform_4, window_bounds = array<i64: 6, 64>}, {pipeline_mode = #tpu.pipeline_mode<synchronous>, transform_indices = @transform_5, window_bounds = array<i64: 4, 32, 128>}, {pipeline_mode = #tpu.pipeline_mode<synchronous>, transform_indices = @transform_6, window_bounds = array<i64: 2048, 128>}, {pipeline_mode = #tpu.pipeline_mode<synchronous>, transform_indices = @transform_7, window_bounds = array<i64: 1, 128>}, {transform_indices = @transform_8, window_bounds = array<i64: 1, 1, 128>}]} {
    %cst = arith.constant 0.000000e+00 : f32
    %0 = vector.broadcast %cst : f32 to vector<18x10x8xf32>
    %c0 = arith.constant 0 : index
    %c0_0 = arith.constant 0 : index
    %c0_1 = arith.constant 0 : index
    %1 = vector.load %arg10[%c0, %c0_0, %c0_1] : memref<18x10x8xf32, #tpu.memory_space<vmem>>, vector<18x10x8xf32>
    tpu.vector_store %arg10[%c0, %c0_0, %c0_1], %0 {strides = array<i32>} : memref<18x10x8xf32, #tpu.memory_space<vmem>>, vector<18x10x8xf32>,
    %c0_2 = arith.constant 0 : index
    %c0_3 = arith.constant 0 : index
    %c0_4 = arith.constant 0 : index
    %c0_5 = arith.constant 0 : index
    %2 = vector.load %arg1[%c0_2, %c0_3, %c0_4, %c0_5] : memref<1x16x8x5xf32, #tpu.memory_space<vmem>>, vector<1x16x8x5xf32>
    %3 = vector.shape_cast %2 : vector<1x16x8x5xf32> to vector<16x8x5xf32>
    %c1 = arith.constant 1 : index
    %c1_6 = arith.constant 1 : index
    %c0_7 = arith.constant 0 : index
    %4 = vector.load %arg10[%c1, %c1_6, %c0_7] : memref<18x10x8xf32, #tpu.memory_space<vmem>>, vector<16x8x5xf32>
    tpu.vector_store %arg10[%c1, %c1_6, %c0_7], %3 {strides = array<i32>} : memref<18x10x8xf32, #tpu.memory_space<vmem>>, vector<16x8x5xf32>,
    %c0_8 = arith.constant 0 : index
    %c0_9 = arith.constant 0 : index
    %c0_10 = arith.constant 0 : index
    %5 = vector.load %arg10[%c0_8, %c0_9, %c0_10] : memref<18x10x8xf32, #tpu.memory_space<vmem>>, vector<16x8x8xf32>
    %6 = vector.shape_cast %5 : vector<16x8x8xf32> to vector<128x8xf32>
    %c0_11 = arith.constant 0 : index
    %c0_12 = arith.constant 0 : index
    %7 = vector.load %arg11[%c0_11, %c0_12] : memref<128x72xf32, #tpu.memory_space<vmem>>, vector<128x8xf32>
    tpu.vector_store %arg11[%c0_11, %c0_12], %6 {strides = array<i32>} : memref<128x72xf32, #tpu.memory_space<vmem>>, vector<128x8xf32>,
    %c0_13 = arith.constant 0 : index
    %c1_14 = arith.constant 1 : index
    %c0_15 = arith.constant 0 : index
    %8 = vector.load %arg10[%c0_13, %c1_14, %c0_15] : memref<18x10x8xf32, #tpu.memory_space<vmem>>, vector<16x8x8xf32>
    %9 = vector.shape_cast %8 : vector<16x8x8xf32> to vector<128x8xf32>
    %c0_16 = arith.constant 0 : index
    %c8 = arith.constant 8 : index
    %10 = vector.load %arg11[%c0_16, %c8] : memref<128x72xf32, #tpu.memory_space<vmem>>, vector<128x8xf32>
    tpu.vector_store %arg11[%c0_16, %c8], %9 {strides = array<i32>} : memref<128x72xf32, #tpu.memory_space<vmem>>, vector<128x8xf32>,
    %c0_17 = arith.constant 0 : index
    %c2 = arith.constant 2 : index
    %c0_18 = arith.constant 0 : index
    %11 = vector.load %arg10[%c0_17, %c2, %c0_18] : memref<18x10x8xf32, #tpu.memory_space<vmem>>, vector<16x8x8xf32>
    %12 = vector.shape_cast %11 : vector<16x8x8xf32> to vector<128x8xf32>
    %c0_19 = arith.constant 0 : index
    %c16 = arith.constant 16 : index
    %13 = vector.load %arg11[%c0_19, %c16] : memref<128x72xf32, #tpu.memory_space<vmem>>, vector<128x8xf32>
    tpu.vector_store %arg11[%c0_19, %c16], %12 {strides = array<i32>} : memref<128x72xf32, #tpu.memory_space<vmem>>, vector<128x8xf32>,
    %c1_20 = arith.constant 1 : index
    %c0_21 = arith.constant 0 : index
    %c0_22 = arith.constant 0 : index
    %14 = vector.load %arg10[%c1_20, %c0_21, %c0_22] : memref<18x10x8xf32, #tpu.memory_space<vmem>>, vector<16x8x8xf32>
    %15 = vector.shape_cast %14 : vector<16x8x8xf32> to vector<128x8xf32>
    %c0_23 = arith.constant 0 : index
    %c24 = arith.constant 24 : index
    %16 = vector.load %arg11[%c0_23, %c24] : memref<128x72xf32, #tpu.memory_space<vmem>>, vector<128x8xf32>
    tpu.vector_store %arg11[%c0_23, %c24], %15 {strides = array<i32>} : memref<128x72xf32, #tpu.memory_space<vmem>>, vector<128x8xf32>,
    %c1_24 = arith.constant 1 : index
    %c1_25 = arith.constant 1 : index
    %c0_26 = arith.constant 0 : index
    %17 = vector.load %arg10[%c1_24, %c1_25, %c0_26] : memref<18x10x8xf32, #tpu.memory_space<vmem>>, vector<16x8x8xf32>
    %18 = vector.shape_cast %17 : vector<16x8x8xf32> to vector<128x8xf32>
    %c0_27 = arith.constant 0 : index
    %c32 = arith.constant 32 : index
    %19 = vector.load %arg11[%c0_27, %c32] : memref<128x72xf32, #tpu.memory_space<vmem>>, vector<128x8xf32>
    tpu.vector_store %arg11[%c0_27, %c32], %18 {strides = array<i32>} : memref<128x72xf32, #tpu.memory_space<vmem>>, vector<128x8xf32>,
    %c1_28 = arith.constant 1 : index
    %c2_29 = arith.constant 2 : index
    %c0_30 = arith.constant 0 : index
    %20 = vector.load %arg10[%c1_28, %c2_29, %c0_30] : memref<18x10x8xf32, #tpu.memory_space<vmem>>, vector<16x8x8xf32>
    %21 = vector.shape_cast %20 : vector<16x8x8xf32> to vector<128x8xf32>
    %c0_31 = arith.constant 0 : index
    %c40 = arith.constant 40 : index
    %22 = vector.load %arg11[%c0_31, %c40] : memref<128x72xf32, #tpu.memory_space<vmem>>, vector<128x8xf32>
    tpu.vector_store %arg11[%c0_31, %c40], %21 {strides = array<i32>} : memref<128x72xf32, #tpu.memory_space<vmem>>, vector<128x8xf32>,
    %c2_32 = arith.constant 2 : index
    %c0_33 = arith.constant 0 : index
    %c0_34 = arith.constant 0 : index
    %23 = vector.load %arg10[%c2_32, %c0_33, %c0_34] : memref<18x10x8xf32, #tpu.memory_space<vmem>>, vector<16x8x8xf32>
    %24 = vector.shape_cast %23 : vector<16x8x8xf32> to vector<128x8xf32>
    %c0_35 = arith.constant 0 : index
    %c48 = arith.constant 48 : index
    %25 = vector.load %arg11[%c0_35, %c48] : memref<128x72xf32, #tpu.memory_space<vmem>>, vector<128x8xf32>
    tpu.vector_store %arg11[%c0_35, %c48], %24 {strides = array<i32>} : memref<128x72xf32, #tpu.memory_space<vmem>>, vector<128x8xf32>,
    %c2_36 = arith.constant 2 : index
    %c1_37 = arith.constant 1 : index
    %c0_38 = arith.constant 0 : index
    %26 = vector.load %arg10[%c2_36, %c1_37, %c0_38] : memref<18x10x8xf32, #tpu.memory_space<vmem>>, vector<16x8x8xf32>
    %27 = vector.shape_cast %26 : vector<16x8x8xf32> to vector<128x8xf32>
    %c0_39 = arith.constant 0 : index
    %c56 = arith.constant 56 : index
    %28 = vector.load %arg11[%c0_39, %c56] : memref<128x72xf32, #tpu.memory_space<vmem>>, vector<128x8xf32>
    tpu.vector_store %arg11[%c0_39, %c56], %27 {strides = array<i32>} : memref<128x72xf32, #tpu.memory_space<vmem>>, vector<128x8xf32>,
    %c2_40 = arith.constant 2 : index
    %c2_41 = arith.constant 2 : index
    %c0_42 = arith.constant 0 : index
    %29 = vector.load %arg10[%c2_40, %c2_41, %c0_42] : memref<18x10x8xf32, #tpu.memory_space<vmem>>, vector<16x8x8xf32>
    %30 = vector.shape_cast %29 : vector<16x8x8xf32> to vector<128x8xf32>
    %c0_43 = arith.constant 0 : index
    %c64 = arith.constant 64 : index
    %31 = vector.load %arg11[%c0_43, %c64] : memref<128x72xf32, #tpu.memory_space<vmem>>, vector<128x8xf32>
    tpu.vector_store %arg11[%c0_43, %c64], %30 {strides = array<i32>} : memref<128x72xf32, #tpu.memory_space<vmem>>, vector<128x8xf32>,
    %c0_44 = arith.constant 0 : index
    %c0_45 = arith.constant 0 : index
    %32 = vector.load %arg11[%c0_44, %c0_45] : memref<128x72xf32, #tpu.memory_space<vmem>>, vector<128x72xf32>
    %c0_46 = arith.constant 0 : index
    %c0_47 = arith.constant 0 : index
    %33 = vector.load %arg2[%c0_46, %c0_47] : memref<72x64xf32, #tpu.memory_space<vmem>>, vector<72x64xf32>
    %cst_48 = arith.constant dense<0.000000e+00> : vector<128x64xf32>
    %34 = tpu.matmul %32, %33, %cst_48 {dimension_numbers = #tpu.dot_dimension_numbers<[1], [0], [0], [1], [0, 0, 1, 1], [], []>} : vector<128x72xf32>, vector<72x64xf32>, vector<128x64xf32> -> vector<128x64xf32>
    %c0_49 = arith.constant 0 : index
    %c0_50 = arith.constant 0 : index
    %35 = vector.load %arg5[%c0_49, %c0_50] : memref<6x64xf32, #tpu.memory_space<vmem>>, vector<1x64xf32>
    %36 = vector.broadcast %35 : vector<1x64xf32> to vector<128x64xf32>
    %37 = arith.mulf %34, %36 : vector<128x64xf32>
    %c1_51 = arith.constant 1 : index
    %c0_52 = arith.constant 0 : index
    %38 = vector.load %arg5[%c1_51, %c0_52] : memref<6x64xf32, #tpu.memory_space<vmem>>, vector<1x64xf32>
    %39 = vector.broadcast %38 : vector<1x64xf32> to vector<128x64xf32>
    %40 = arith.addf %37, %39 : vector<128x64xf32>
    %cst_53 = arith.constant 0.000000e+00 : f32
    %41 = vector.broadcast %cst_53 : f32 to vector<128x64xf32>
    %42 = arith.maximumf %40, %41 : vector<128x64xf32>
    %c0_54 = arith.constant 0 : index
    %c0_55 = arith.constant 0 : index
    %c0_56 = arith.constant 0 : index
    %43 = vector.load %arg6[%c0_54, %c0_55, %c0_56] : memref<4x32x128xf32, #tpu.memory_space<vmem>>, vector<1x32x128xf32>
    %44 = vector.shape_cast %43 : vector<1x32x128xf32> to vector<32x128xf32>
    %cst_57 = arith.constant dense<0.000000e+00> : vector<32x64xf32>
    %45 = tpu.matmul %44, %42, %cst_57 {dimension_numbers = #tpu.dot_dimension_numbers<[1], [0], [0], [1], [0, 0, 1, 1], [], []>} : vector<32x128xf32>, vector<128x64xf32>, vector<32x64xf32> -> vector<32x64xf32>
    %c1_58 = arith.constant 1 : index
    %c0_59 = arith.constant 0 : index
    %c0_60 = arith.constant 0 : index
    %46 = vector.load %arg6[%c1_58, %c0_59, %c0_60] : memref<4x32x128xf32, #tpu.memory_space<vmem>>, vector<1x32x128xf32>
    %47 = vector.shape_cast %46 : vector<1x32x128xf32> to vector<32x128xf32>
    %cst_61 = arith.constant dense<0.000000e+00> : vector<32x64xf32>
    %48 = tpu.matmul %47, %42, %cst_61 {dimension_numbers = #tpu.dot_dimension_numbers<[1], [0], [0], [1], [0, 0, 1, 1], [], []>} : vector<32x128xf32>, vector<128x64xf32>, vector<32x64xf32> -> vector<32x64xf32>
    %c2_62 = arith.constant 2 : index
    %c0_63 = arith.constant 0 : index
    %c0_64 = arith.constant 0 : index
    %49 = vector.load %arg6[%c2_62, %c0_63, %c0_64] : memref<4x32x128xf32, #tpu.memory_space<vmem>>, vector<1x32x128xf32>
    %50 = vector.shape_cast %49 : vector<1x32x128xf32> to vector<32x128xf32>
    %cst_65 = arith.constant dense<0.000000e+00> : vector<32x64xf32>
    %51 = tpu.matmul %50, %42, %cst_65 {dimension_numbers = #tpu.dot_dimension_numbers<[1], [0], [0], [1], [0, 0, 1, 1], [], []>} : vector<32x128xf32>, vector<128x64xf32>, vector<32x64xf32> -> vector<32x64xf32>
    %c3 = arith.constant 3 : index
    %c0_66 = arith.constant 0 : index
    %c0_67 = arith.constant 0 : index
    %52 = vector.load %arg6[%c3, %c0_66, %c0_67] : memref<4x32x128xf32, #tpu.memory_space<vmem>>, vector<1x32x128xf32>
    %53 = vector.shape_cast %52 : vector<1x32x128xf32> to vector<32x128xf32>
    %cst_68 = arith.constant dense<0.000000e+00> : vector<32x64xf32>
    %54 = tpu.matmul %53, %42, %cst_68 {dimension_numbers = #tpu.dot_dimension_numbers<[1], [0], [0], [1], [0, 0, 1, 1], [], []>} : vector<32x128xf32>, vector<128x64xf32>, vector<32x64xf32> -> vector<32x64xf32>
    %55 = arith.maximumf %45, %48 : vector<32x64xf32>
    %56 = arith.maximumf %51, %54 : vector<32x64xf32>
    %57 = arith.maximumf %55, %56 : vector<32x64xf32>
    %cst_69 = arith.constant 0.000000e+00 : f32
    %58 = vector.broadcast %cst_69 : f32 to vector<10x6x64xf32>
    %c0_70 = arith.constant 0 : index
    %c0_71 = arith.constant 0 : index
    %c0_72 = arith.constant 0 : index
    %59 = vector.load %arg12[%c0_70, %c0_71, %c0_72] : memref<10x6x64xf32, #tpu.memory_space<vmem>>, vector<10x6x64xf32>
    tpu.vector_store %arg12[%c0_70, %c0_71, %c0_72], %58 {strides = array<i32>} : memref<10x6x64xf32, #tpu.memory_space<vmem>>, vector<10x6x64xf32>,
    %60 = vector.shape_cast %57 : vector<32x64xf32> to vector<8x4x64xf32>
    %c1_73 = arith.constant 1 : index
    %c1_74 = arith.constant 1 : index
    %c0_75 = arith.constant 0 : index
    %61 = vector.load %arg12[%c1_73, %c1_74, %c0_75] : memref<10x6x64xf32, #tpu.memory_space<vmem>>, vector<8x4x64xf32>
    tpu.vector_store %arg12[%c1_73, %c1_74, %c0_75], %60 {strides = array<i32>} : memref<10x6x64xf32, #tpu.memory_space<vmem>>, vector<8x4x64xf32>,
    %c0_76 = arith.constant 0 : index
    %c0_77 = arith.constant 0 : index
    %c0_78 = arith.constant 0 : index
    %62 = vector.load %arg12[%c0_76, %c0_77, %c0_78] : memref<10x6x64xf32, #tpu.memory_space<vmem>>, vector<8x4x64xf32>
    %63 = vector.shape_cast %62 : vector<8x4x64xf32> to vector<32x64xf32>
    %c0_79 = arith.constant 0 : index
    %c0_80 = arith.constant 0 : index
    %64 = vector.load %arg13[%c0_79, %c0_80] : memref<32x576xf32, #tpu.memory_space<vmem>>, vector<32x64xf32>
    tpu.vector_store %arg13[%c0_79, %c0_80], %63 {strides = array<i32>} : memref<32x576xf32, #tpu.memory_space<vmem>>, vector<32x64xf32>,
    %c0_81 = arith.constant 0 : index
    %c1_82 = arith.constant 1 : index
    %c0_83 = arith.constant 0 : index
    %65 = vector.load %arg12[%c0_81, %c1_82, %c0_83] : memref<10x6x64xf32, #tpu.memory_space<vmem>>, vector<8x4x64xf32>
    %66 = vector.shape_cast %65 : vector<8x4x64xf32> to vector<32x64xf32>
    %c0_84 = arith.constant 0 : index
    %c64_85 = arith.constant 64 : index
    %67 = vector.load %arg13[%c0_84, %c64_85] : memref<32x576xf32, #tpu.memory_space<vmem>>, vector<32x64xf32>
    tpu.vector_store %arg13[%c0_84, %c64_85], %66 {strides = array<i32>} : memref<32x576xf32, #tpu.memory_space<vmem>>, vector<32x64xf32>,
    %c0_86 = arith.constant 0 : index
    %c2_87 = arith.constant 2 : index
    %c0_88 = arith.constant 0 : index
    %68 = vector.load %arg12[%c0_86, %c2_87, %c0_88] : memref<10x6x64xf32, #tpu.memory_space<vmem>>, vector<8x4x64xf32>
    %69 = vector.shape_cast %68 : vector<8x4x64xf32> to vector<32x64xf32>
    %c0_89 = arith.constant 0 : index
    %c128 = arith.constant 128 : index
    %70 = vector.load %arg13[%c0_89, %c128] : memref<32x576xf32, #tpu.memory_space<vmem>>, vector<32x64xf32>
    tpu.vector_store %arg13[%c0_89, %c128], %69 {strides = array<i32>} : memref<32x576xf32, #tpu.memory_space<vmem>>, vector<32x64xf32>,
    %c1_90 = arith.constant 1 : index
    %c0_91 = arith.constant 0 : index
    %c0_92 = arith.constant 0 : index
    %71 = vector.load %arg12[%c1_90, %c0_91, %c0_92] : memref<10x6x64xf32, #tpu.memory_space<vmem>>, vector<8x4x64xf32>
    %72 = vector.shape_cast %71 : vector<8x4x64xf32> to vector<32x64xf32>
    %c0_93 = arith.constant 0 : index
    %c192 = arith.constant 192 : index
    %73 = vector.load %arg13[%c0_93, %c192] : memref<32x576xf32, #tpu.memory_space<vmem>>, vector<32x64xf32>
    tpu.vector_store %arg13[%c0_93, %c192], %72 {strides = array<i32>} : memref<32x576xf32, #tpu.memory_space<vmem>>, vector<32x64xf32>,
    %c1_94 = arith.constant 1 : index
    %c1_95 = arith.constant 1 : index
    %c0_96 = arith.constant 0 : index
    %74 = vector.load %arg12[%c1_94, %c1_95, %c0_96] : memref<10x6x64xf32, #tpu.memory_space<vmem>>, vector<8x4x64xf32>
    %75 = vector.shape_cast %74 : vector<8x4x64xf32> to vector<32x64xf32>
    %c0_97 = arith.constant 0 : index
    %c256 = arith.constant 256 : index
    %76 = vector.load %arg13[%c0_97, %c256] : memref<32x576xf32, #tpu.memory_space<vmem>>, vector<32x64xf32>
    tpu.vector_store %arg13[%c0_97, %c256], %75 {strides = array<i32>} : memref<32x576xf32, #tpu.memory_space<vmem>>, vector<32x64xf32>,
    %c1_98 = arith.constant 1 : index
    %c2_99 = arith.constant 2 : index
    %c0_100 = arith.constant 0 : index
    %77 = vector.load %arg12[%c1_98, %c2_99, %c0_100] : memref<10x6x64xf32, #tpu.memory_space<vmem>>, vector<8x4x64xf32>
    %78 = vector.shape_cast %77 : vector<8x4x64xf32> to vector<32x64xf32>
    %c0_101 = arith.constant 0 : index
    %c320 = arith.constant 320 : index
    %79 = vector.load %arg13[%c0_101, %c320] : memref<32x576xf32, #tpu.memory_space<vmem>>, vector<32x64xf32>
    tpu.vector_store %arg13[%c0_101, %c320], %78 {strides = array<i32>} : memref<32x576xf32, #tpu.memory_space<vmem>>, vector<32x64xf32>,
    %c2_102 = arith.constant 2 : index
    %c0_103 = arith.constant 0 : index
    %c0_104 = arith.constant 0 : index
    %80 = vector.load %arg12[%c2_102, %c0_103, %c0_104] : memref<10x6x64xf32, #tpu.memory_space<vmem>>, vector<8x4x64xf32>
    %81 = vector.shape_cast %80 : vector<8x4x64xf32> to vector<32x64xf32>
    %c0_105 = arith.constant 0 : index
    %c384 = arith.constant 384 : index
    %82 = vector.load %arg13[%c0_105, %c384] : memref<32x576xf32, #tpu.memory_space<vmem>>, vector<32x64xf32>
    tpu.vector_store %arg13[%c0_105, %c384], %81 {strides = array<i32>} : memref<32x576xf32, #tpu.memory_space<vmem>>, vector<32x64xf32>,
    %c2_106 = arith.constant 2 : index
    %c1_107 = arith.constant 1 : index
    %c0_108 = arith.constant 0 : index
    %83 = vector.load %arg12[%c2_106, %c1_107, %c0_108] : memref<10x6x64xf32, #tpu.memory_space<vmem>>, vector<8x4x64xf32>
    %84 = vector.shape_cast %83 : vector<8x4x64xf32> to vector<32x64xf32>
    %c0_109 = arith.constant 0 : index
    %c448 = arith.constant 448 : index
    %85 = vector.load %arg13[%c0_109, %c448] : memref<32x576xf32, #tpu.memory_space<vmem>>, vector<32x64xf32>
    tpu.vector_store %arg13[%c0_109, %c448], %84 {strides = array<i32>} : memref<32x576xf32, #tpu.memory_space<vmem>>, vector<32x64xf32>,
    %c2_110 = arith.constant 2 : index
    %c2_111 = arith.constant 2 : index
    %c0_112 = arith.constant 0 : index
    %86 = vector.load %arg12[%c2_110, %c2_111, %c0_112] : memref<10x6x64xf32, #tpu.memory_space<vmem>>, vector<8x4x64xf32>
    %87 = vector.shape_cast %86 : vector<8x4x64xf32> to vector<32x64xf32>
    %c0_113 = arith.constant 0 : index
    %c512 = arith.constant 512 : index
    %88 = vector.load %arg13[%c0_113, %c512] : memref<32x576xf32, #tpu.memory_space<vmem>>, vector<32x64xf32>
    tpu.vector_store %arg13[%c0_113, %c512], %87 {strides = array<i32>} : memref<32x576xf32, #tpu.memory_space<vmem>>, vector<32x64xf32>,
    %c0_114 = arith.constant 0 : index
    %c0_115 = arith.constant 0 : index
    %89 = vector.load %arg13[%c0_114, %c0_115] : memref<32x576xf32, #tpu.memory_space<vmem>>, vector<32x576xf32>
    %c0_116 = arith.constant 0 : index
    %c0_117 = arith.constant 0 : index
    %90 = vector.load %arg3[%c0_116, %c0_117] : memref<576x64xf32, #tpu.memory_space<vmem>>, vector<576x64xf32>
    %cst_118 = arith.constant dense<0.000000e+00> : vector<32x64xf32>
    %91 = tpu.matmul %89, %90, %cst_118 {dimension_numbers = #tpu.dot_dimension_numbers<[1], [0], [0], [1], [0, 0, 1, 1], [], []>} : vector<32x576xf32>, vector<576x64xf32>, vector<32x64xf32> -> vector<32x64xf32>
    %c2_119 = arith.constant 2 : index
    %c0_120 = arith.constant 0 : index
    %92 = vector.load %arg5[%c2_119, %c0_120] : memref<6x64xf32, #tpu.memory_space<vmem>>, vector<1x64xf32>
    %93 = vector.broadcast %92 : vector<1x64xf32> to vector<32x64xf32>
    %94 = arith.mulf %91, %93 : vector<32x64xf32>
    %c3_121 = arith.constant 3 : index
    %c0_122 = arith.constant 0 : index
    %95 = vector.load %arg5[%c3_121, %c0_122] : memref<6x64xf32, #tpu.memory_space<vmem>>, vector<1x64xf32>
    %96 = vector.broadcast %95 : vector<1x64xf32> to vector<32x64xf32>
    %97 = arith.addf %94, %96 : vector<32x64xf32>
    %cst_123 = arith.constant 0.000000e+00 : f32
    %98 = vector.broadcast %cst_123 : f32 to vector<32x64xf32>
    %99 = arith.maximumf %97, %98 : vector<32x64xf32>
    %100 = vector.shape_cast %99 : vector<32x64xf32> to vector<8x4x64xf32>
    %c1_124 = arith.constant 1 : index
    %c1_125 = arith.constant 1 : index
    %c0_126 = arith.constant 0 : index
    %101 = vector.load %arg12[%c1_124, %c1_125, %c0_126] : memref<10x6x64xf32, #tpu.memory_space<vmem>>, vector<8x4x64xf32>
    tpu.vector_store %arg12[%c1_124, %c1_125, %c0_126], %100 {strides = array<i32>} : memref<10x6x64xf32, #tpu.memory_space<vmem>>, vector<8x4x64xf32>,
    %c0_127 = arith.constant 0 : index
    %c0_128 = arith.constant 0 : index
    %c0_129 = arith.constant 0 : index
    %102 = vector.load %arg12[%c0_127, %c0_128, %c0_129] : memref<10x6x64xf32, #tpu.memory_space<vmem>>, vector<8x4x64xf32>
    %103 = vector.shape_cast %102 : vector<8x4x64xf32> to vector<32x64xf32>
    %c0_130 = arith.constant 0 : index
    %c0_131 = arith.constant 0 : index
    %104 = vector.load %arg13[%c0_130, %c0_131] : memref<32x576xf32, #tpu.memory_space<vmem>>, vector<32x64xf32>
    tpu.vector_store %arg13[%c0_130, %c0_131], %103 {strides = array<i32>} : memref<32x576xf32, #tpu.memory_space<vmem>>, vector<32x64xf32>,
    %c0_132 = arith.constant 0 : index
    %c1_133 = arith.constant 1 : index
    %c0_134 = arith.constant 0 : index
    %105 = vector.load %arg12[%c0_132, %c1_133, %c0_134] : memref<10x6x64xf32, #tpu.memory_space<vmem>>, vector<8x4x64xf32>
    %106 = vector.shape_cast %105 : vector<8x4x64xf32> to vector<32x64xf32>
    %c0_135 = arith.constant 0 : index
    %c64_136 = arith.constant 64 : index
    %107 = vector.load %arg13[%c0_135, %c64_136] : memref<32x576xf32, #tpu.memory_space<vmem>>, vector<32x64xf32>
    tpu.vector_store %arg13[%c0_135, %c64_136], %106 {strides = array<i32>} : memref<32x576xf32, #tpu.memory_space<vmem>>, vector<32x64xf32>,
    %c0_137 = arith.constant 0 : index
    %c2_138 = arith.constant 2 : index
    %c0_139 = arith.constant 0 : index
    %108 = vector.load %arg12[%c0_137, %c2_138, %c0_139] : memref<10x6x64xf32, #tpu.memory_space<vmem>>, vector<8x4x64xf32>
    %109 = vector.shape_cast %108 : vector<8x4x64xf32> to vector<32x64xf32>
    %c0_140 = arith.constant 0 : index
    %c128_141 = arith.constant 128 : index
    %110 = vector.load %arg13[%c0_140, %c128_141] : memref<32x576xf32, #tpu.memory_space<vmem>>, vector<32x64xf32>
    tpu.vector_store %arg13[%c0_140, %c128_141], %109 {strides = array<i32>} : memref<32x576xf32, #tpu.memory_space<vmem>>, vector<32x64xf32>,
    %c1_142 = arith.constant 1 : index
    %c0_143 = arith.constant 0 : index
    %c0_144 = arith.constant 0 : index
    %111 = vector.load %arg12[%c1_142, %c0_143, %c0_144] : memref<10x6x64xf32, #tpu.memory_space<vmem>>, vector<8x4x64xf32>
    %112 = vector.shape_cast %111 : vector<8x4x64xf32> to vector<32x64xf32>
    %c0_145 = arith.constant 0 : index
    %c192_146 = arith.constant 192 : index
    %113 = vector.load %arg13[%c0_145, %c192_146] : memref<32x576xf32, #tpu.memory_space<vmem>>, vector<32x64xf32>
    tpu.vector_store %arg13[%c0_145, %c192_146], %112 {strides = array<i32>} : memref<32x576xf32, #tpu.memory_space<vmem>>, vector<32x64xf32>,
    %c1_147 = arith.constant 1 : index
    %c1_148 = arith.constant 1 : index
    %c0_149 = arith.constant 0 : index
    %114 = vector.load %arg12[%c1_147, %c1_148, %c0_149] : memref<10x6x64xf32, #tpu.memory_space<vmem>>, vector<8x4x64xf32>
    %115 = vector.shape_cast %114 : vector<8x4x64xf32> to vector<32x64xf32>
    %c0_150 = arith.constant 0 : index
    %c256_151 = arith.constant 256 : index
    %116 = vector.load %arg13[%c0_150, %c256_151] : memref<32x576xf32, #tpu.memory_space<vmem>>, vector<32x64xf32>
    tpu.vector_store %arg13[%c0_150, %c256_151], %115 {strides = array<i32>} : memref<32x576xf32, #tpu.memory_space<vmem>>, vector<32x64xf32>,
    %c1_152 = arith.constant 1 : index
    %c2_153 = arith.constant 2 : index
    %c0_154 = arith.constant 0 : index
    %117 = vector.load %arg12[%c1_152, %c2_153, %c0_154] : memref<10x6x64xf32, #tpu.memory_space<vmem>>, vector<8x4x64xf32>
    %118 = vector.shape_cast %117 : vector<8x4x64xf32> to vector<32x64xf32>
    %c0_155 = arith.constant 0 : index
    %c320_156 = arith.constant 320 : index
    %119 = vector.load %arg13[%c0_155, %c320_156] : memref<32x576xf32, #tpu.memory_space<vmem>>, vector<32x64xf32>
    tpu.vector_store %arg13[%c0_155, %c320_156], %118 {strides = array<i32>} : memref<32x576xf32, #tpu.memory_space<vmem>>, vector<32x64xf32>,
    %c2_157 = arith.constant 2 : index
    %c0_158 = arith.constant 0 : index
    %c0_159 = arith.constant 0 : index
    %120 = vector.load %arg12[%c2_157, %c0_158, %c0_159] : memref<10x6x64xf32, #tpu.memory_space<vmem>>, vector<8x4x64xf32>
    %121 = vector.shape_cast %120 : vector<8x4x64xf32> to vector<32x64xf32>
    %c0_160 = arith.constant 0 : index
    %c384_161 = arith.constant 384 : index
    %122 = vector.load %arg13[%c0_160, %c384_161] : memref<32x576xf32, #tpu.memory_space<vmem>>, vector<32x64xf32>
    tpu.vector_store %arg13[%c0_160, %c384_161], %121 {strides = array<i32>} : memref<32x576xf32, #tpu.memory_space<vmem>>, vector<32x64xf32>,
    %c2_162 = arith.constant 2 : index
    %c1_163 = arith.constant 1 : index
    %c0_164 = arith.constant 0 : index
    %123 = vector.load %arg12[%c2_162, %c1_163, %c0_164] : memref<10x6x64xf32, #tpu.memory_space<vmem>>, vector<8x4x64xf32>
    %124 = vector.shape_cast %123 : vector<8x4x64xf32> to vector<32x64xf32>
    %c0_165 = arith.constant 0 : index
    %c448_166 = arith.constant 448 : index
    %125 = vector.load %arg13[%c0_165, %c448_166] : memref<32x576xf32, #tpu.memory_space<vmem>>, vector<32x64xf32>
    tpu.vector_store %arg13[%c0_165, %c448_166], %124 {strides = array<i32>} : memref<32x576xf32, #tpu.memory_space<vmem>>, vector<32x64xf32>,
    %c2_167 = arith.constant 2 : index
    %c2_168 = arith.constant 2 : index
    %c0_169 = arith.constant 0 : index
    %126 = vector.load %arg12[%c2_167, %c2_168, %c0_169] : memref<10x6x64xf32, #tpu.memory_space<vmem>>, vector<8x4x64xf32>
    %127 = vector.shape_cast %126 : vector<8x4x64xf32> to vector<32x64xf32>
    %c0_170 = arith.constant 0 : index
    %c512_171 = arith.constant 512 : index
    %128 = vector.load %arg13[%c0_170, %c512_171] : memref<32x576xf32, #tpu.memory_space<vmem>>, vector<32x64xf32>
    tpu.vector_store %arg13[%c0_170, %c512_171], %127 {strides = array<i32>} : memref<32x576xf32, #tpu.memory_space<vmem>>, vector<32x64xf32>,
    %c0_172 = arith.constant 0 : index
    %c0_173 = arith.constant 0 : index
    %129 = vector.load %arg13[%c0_172, %c0_173] : memref<32x576xf32, #tpu.memory_space<vmem>>, vector<32x576xf32>
    %c0_174 = arith.constant 0 : index
    %c0_175 = arith.constant 0 : index
    %130 = vector.load %arg4[%c0_174, %c0_175] : memref<576x64xf32, #tpu.memory_space<vmem>>, vector<576x64xf32>
    %cst_176 = arith.constant dense<0.000000e+00> : vector<32x64xf32>
    %131 = tpu.matmul %129, %130, %cst_176 {dimension_numbers = #tpu.dot_dimension_numbers<[1], [0], [0], [1], [0, 0, 1, 1], [], []>} : vector<32x576xf32>, vector<576x64xf32>, vector<32x64xf32> -> vector<32x64xf32>
    %c4 = arith.constant 4 : index
    %c0_177 = arith.constant 0 : index
    %132 = vector.load %arg5[%c4, %c0_177] : memref<6x64xf32, #tpu.memory_space<vmem>>, vector<1x64xf32>
    %133 = vector.broadcast %132 : vector<1x64xf32> to vector<32x64xf32>
    %134 = arith.mulf %131, %133 : vector<32x64xf32>
    %c5 = arith.constant 5 : index
    %c0_178 = arith.constant 0 : index
    %135 = vector.load %arg5[%c5, %c0_178] : memref<6x64xf32, #tpu.memory_space<vmem>>, vector<1x64xf32>
    %136 = vector.broadcast %135 : vector<1x64xf32> to vector<32x64xf32>
    %137 = arith.addf %134, %136 : vector<32x64xf32>
    %cst_179 = arith.constant 0.000000e+00 : f32
    %138 = vector.broadcast %cst_179 : f32 to vector<32x64xf32>
    %139 = arith.maximumf %137, %138 : vector<32x64xf32>
    %140 = vector.extract_strided_slice %139 {offsets = [0, 0], sizes = [1, 64], strides = [1, 1]} : vector<32x64xf32> to vector<1x64xf32>
    %c0_180 = arith.constant 0 : index
    %c0_181 = arith.constant 0 : index
    %141 = vector.load %arg14[%c0_180, %c0_181] : memref<1x2048xf32, #tpu.memory_space<vmem>>, vector<1x64xf32>
    tpu.vector_store %arg14[%c0_180, %c0_181], %140 {strides = array<i32>} : memref<1x2048xf32, #tpu.memory_space<vmem>>, vector<1x64xf32>,
    %142 = vector.extract_strided_slice %139 {offsets = [1, 0], sizes = [1, 64], strides = [1, 1]} : vector<32x64xf32> to vector<1x64xf32>
    %c0_182 = arith.constant 0 : index
    %c64_183 = arith.constant 64 : index
    %143 = vector.load %arg14[%c0_182, %c64_183] : memref<1x2048xf32, #tpu.memory_space<vmem>>, vector<1x64xf32>
    tpu.vector_store %arg14[%c0_182, %c64_183], %142 {strides = array<i32>} : memref<1x2048xf32, #tpu.memory_space<vmem>>, vector<1x64xf32>,
    %144 = vector.extract_strided_slice %139 {offsets = [2, 0], sizes = [1, 64], strides = [1, 1]} : vector<32x64xf32> to vector<1x64xf32>
    %c0_184 = arith.constant 0 : index
    %c128_185 = arith.constant 128 : index
    %145 = vector.load %arg14[%c0_184, %c128_185] : memref<1x2048xf32, #tpu.memory_space<vmem>>, vector<1x64xf32>
    tpu.vector_store %arg14[%c0_184, %c128_185], %144 {strides = array<i32>} : memref<1x2048xf32, #tpu.memory_space<vmem>>, vector<1x64xf32>,
    %146 = vector.extract_strided_slice %139 {offsets = [3, 0], sizes = [1, 64], strides = [1, 1]} : vector<32x64xf32> to vector<1x64xf32>
    %c0_186 = arith.constant 0 : index
    %c192_187 = arith.constant 192 : index
    %147 = vector.load %arg14[%c0_186, %c192_187] : memref<1x2048xf32, #tpu.memory_space<vmem>>, vector<1x64xf32>
    tpu.vector_store %arg14[%c0_186, %c192_187], %146 {strides = array<i32>} : memref<1x2048xf32, #tpu.memory_space<vmem>>, vector<1x64xf32>,
    %148 = vector.extract_strided_slice %139 {offsets = [4, 0], sizes = [1, 64], strides = [1, 1]} : vector<32x64xf32> to vector<1x64xf32>
    %c0_188 = arith.constant 0 : index
    %c256_189 = arith.constant 256 : index
    %149 = vector.load %arg14[%c0_188, %c256_189] : memref<1x2048xf32, #tpu.memory_space<vmem>>, vector<1x64xf32>
    tpu.vector_store %arg14[%c0_188, %c256_189], %148 {strides = array<i32>} : memref<1x2048xf32, #tpu.memory_space<vmem>>, vector<1x64xf32>,
    %150 = vector.extract_strided_slice %139 {offsets = [5, 0], sizes = [1, 64], strides = [1, 1]} : vector<32x64xf32> to vector<1x64xf32>
    %c0_190 = arith.constant 0 : index
    %c320_191 = arith.constant 320 : index
    %151 = vector.load %arg14[%c0_190, %c320_191] : memref<1x2048xf32, #tpu.memory_space<vmem>>, vector<1x64xf32>
    tpu.vector_store %arg14[%c0_190, %c320_191], %150 {strides = array<i32>} : memref<1x2048xf32, #tpu.memory_space<vmem>>, vector<1x64xf32>,
    %152 = vector.extract_strided_slice %139 {offsets = [6, 0], sizes = [1, 64], strides = [1, 1]} : vector<32x64xf32> to vector<1x64xf32>
    %c0_192 = arith.constant 0 : index
    %c384_193 = arith.constant 384 : index
    %153 = vector.load %arg14[%c0_192, %c384_193] : memref<1x2048xf32, #tpu.memory_space<vmem>>, vector<1x64xf32>
    tpu.vector_store %arg14[%c0_192, %c384_193], %152 {strides = array<i32>} : memref<1x2048xf32, #tpu.memory_space<vmem>>, vector<1x64xf32>,
    %154 = vector.extract_strided_slice %139 {offsets = [7, 0], sizes = [1, 64], strides = [1, 1]} : vector<32x64xf32> to vector<1x64xf32>
    %c0_194 = arith.constant 0 : index
    %c448_195 = arith.constant 448 : index
    %155 = vector.load %arg14[%c0_194, %c448_195] : memref<1x2048xf32, #tpu.memory_space<vmem>>, vector<1x64xf32>
    tpu.vector_store %arg14[%c0_194, %c448_195], %154 {strides = array<i32>} : memref<1x2048xf32, #tpu.memory_space<vmem>>, vector<1x64xf32>,
    %156 = vector.extract_strided_slice %139 {offsets = [8, 0], sizes = [1, 64], strides = [1, 1]} : vector<32x64xf32> to vector<1x64xf32>
    %c0_196 = arith.constant 0 : index
    %c512_197 = arith.constant 512 : index
    %157 = vector.load %arg14[%c0_196, %c512_197] : memref<1x2048xf32, #tpu.memory_space<vmem>>, vector<1x64xf32>
    tpu.vector_store %arg14[%c0_196, %c512_197], %156 {strides = array<i32>} : memref<1x2048xf32, #tpu.memory_space<vmem>>, vector<1x64xf32>,
    %158 = vector.extract_strided_slice %139 {offsets = [9, 0], sizes = [1, 64], strides = [1, 1]} : vector<32x64xf32> to vector<1x64xf32>
    %c0_198 = arith.constant 0 : index
    %c576 = arith.constant 576 : index
    %159 = vector.load %arg14[%c0_198, %c576] : memref<1x2048xf32, #tpu.memory_space<vmem>>, vector<1x64xf32>
    tpu.vector_store %arg14[%c0_198, %c576], %158 {strides = array<i32>} : memref<1x2048xf32, #tpu.memory_space<vmem>>, vector<1x64xf32>,
    %160 = vector.extract_strided_slice %139 {offsets = [10, 0], sizes = [1, 64], strides = [1, 1]} : vector<32x64xf32> to vector<1x64xf32>
    %c0_199 = arith.constant 0 : index
    %c640 = arith.constant 640 : index
    %161 = vector.load %arg14[%c0_199, %c640] : memref<1x2048xf32, #tpu.memory_space<vmem>>, vector<1x64xf32>
    tpu.vector_store %arg14[%c0_199, %c640], %160 {strides = array<i32>} : memref<1x2048xf32, #tpu.memory_space<vmem>>, vector<1x64xf32>,
    %162 = vector.extract_strided_slice %139 {offsets = [11, 0], sizes = [1, 64], strides = [1, 1]} : vector<32x64xf32> to vector<1x64xf32>
    %c0_200 = arith.constant 0 : index
    %c704 = arith.constant 704 : index
    %163 = vector.load %arg14[%c0_200, %c704] : memref<1x2048xf32, #tpu.memory_space<vmem>>, vector<1x64xf32>
    tpu.vector_store %arg14[%c0_200, %c704], %162 {strides = array<i32>} : memref<1x2048xf32, #tpu.memory_space<vmem>>, vector<1x64xf32>,
    %164 = vector.extract_strided_slice %139 {offsets = [12, 0], sizes = [1, 64], strides = [1, 1]} : vector<32x64xf32> to vector<1x64xf32>
    %c0_201 = arith.constant 0 : index
    %c768 = arith.constant 768 : index
    %165 = vector.load %arg14[%c0_201, %c768] : memref<1x2048xf32, #tpu.memory_space<vmem>>, vector<1x64xf32>
    tpu.vector_store %arg14[%c0_201, %c768], %164 {strides = array<i32>} : memref<1x2048xf32, #tpu.memory_space<vmem>>, vector<1x64xf32>,
    %166 = vector.extract_strided_slice %139 {offsets = [13, 0], sizes = [1, 64], strides = [1, 1]} : vector<32x64xf32> to vector<1x64xf32>
    %c0_202 = arith.constant 0 : index
    %c832 = arith.constant 832 : index
    %167 = vector.load %arg14[%c0_202, %c832] : memref<1x2048xf32, #tpu.memory_space<vmem>>, vector<1x64xf32>
    tpu.vector_store %arg14[%c0_202, %c832], %166 {strides = array<i32>} : memref<1x2048xf32, #tpu.memory_space<vmem>>, vector<1x64xf32>,
    %168 = vector.extract_strided_slice %139 {offsets = [14, 0], sizes = [1, 64], strides = [1, 1]} : vector<32x64xf32> to vector<1x64xf32>
    %c0_203 = arith.constant 0 : index
    %c896 = arith.constant 896 : index
    %169 = vector.load %arg14[%c0_203, %c896] : memref<1x2048xf32, #tpu.memory_space<vmem>>, vector<1x64xf32>
    tpu.vector_store %arg14[%c0_203, %c896], %168 {strides = array<i32>} : memref<1x2048xf32, #tpu.memory_space<vmem>>, vector<1x64xf32>,
    %170 = vector.extract_strided_slice %139 {offsets = [15, 0], sizes = [1, 64], strides = [1, 1]} : vector<32x64xf32> to vector<1x64xf32>
    %c0_204 = arith.constant 0 : index
    %c960 = arith.constant 960 : index
    %171 = vector.load %arg14[%c0_204, %c960] : memref<1x2048xf32, #tpu.memory_space<vmem>>, vector<1x64xf32>
    tpu.vector_store %arg14[%c0_204, %c960], %170 {strides = array<i32>} : memref<1x2048xf32, #tpu.memory_space<vmem>>, vector<1x64xf32>,
    %172 = vector.extract_strided_slice %139 {offsets = [16, 0], sizes = [1, 64], strides = [1, 1]} : vector<32x64xf32> to vector<1x64xf32>
    %c0_205 = arith.constant 0 : index
    %c1024 = arith.constant 1024 : index
    %173 = vector.load %arg14[%c0_205, %c1024] : memref<1x2048xf32, #tpu.memory_space<vmem>>, vector<1x64xf32>
    tpu.vector_store %arg14[%c0_205, %c1024], %172 {strides = array<i32>} : memref<1x2048xf32, #tpu.memory_space<vmem>>, vector<1x64xf32>,
    %174 = vector.extract_strided_slice %139 {offsets = [17, 0], sizes = [1, 64], strides = [1, 1]} : vector<32x64xf32> to vector<1x64xf32>
    %c0_206 = arith.constant 0 : index
    %c1088 = arith.constant 1088 : index
    %175 = vector.load %arg14[%c0_206, %c1088] : memref<1x2048xf32, #tpu.memory_space<vmem>>, vector<1x64xf32>
    tpu.vector_store %arg14[%c0_206, %c1088], %174 {strides = array<i32>} : memref<1x2048xf32, #tpu.memory_space<vmem>>, vector<1x64xf32>,
    %176 = vector.extract_strided_slice %139 {offsets = [18, 0], sizes = [1, 64], strides = [1, 1]} : vector<32x64xf32> to vector<1x64xf32>
    %c0_207 = arith.constant 0 : index
    %c1152 = arith.constant 1152 : index
    %177 = vector.load %arg14[%c0_207, %c1152] : memref<1x2048xf32, #tpu.memory_space<vmem>>, vector<1x64xf32>
    tpu.vector_store %arg14[%c0_207, %c1152], %176 {strides = array<i32>} : memref<1x2048xf32, #tpu.memory_space<vmem>>, vector<1x64xf32>,
    %178 = vector.extract_strided_slice %139 {offsets = [19, 0], sizes = [1, 64], strides = [1, 1]} : vector<32x64xf32> to vector<1x64xf32>
    %c0_208 = arith.constant 0 : index
    %c1216 = arith.constant 1216 : index
    %179 = vector.load %arg14[%c0_208, %c1216] : memref<1x2048xf32, #tpu.memory_space<vmem>>, vector<1x64xf32>
    tpu.vector_store %arg14[%c0_208, %c1216], %178 {strides = array<i32>} : memref<1x2048xf32, #tpu.memory_space<vmem>>, vector<1x64xf32>,
    %180 = vector.extract_strided_slice %139 {offsets = [20, 0], sizes = [1, 64], strides = [1, 1]} : vector<32x64xf32> to vector<1x64xf32>
    %c0_209 = arith.constant 0 : index
    %c1280 = arith.constant 1280 : index
    %181 = vector.load %arg14[%c0_209, %c1280] : memref<1x2048xf32, #tpu.memory_space<vmem>>, vector<1x64xf32>
    tpu.vector_store %arg14[%c0_209, %c1280], %180 {strides = array<i32>} : memref<1x2048xf32, #tpu.memory_space<vmem>>, vector<1x64xf32>,
    %182 = vector.extract_strided_slice %139 {offsets = [21, 0], sizes = [1, 64], strides = [1, 1]} : vector<32x64xf32> to vector<1x64xf32>
    %c0_210 = arith.constant 0 : index
    %c1344 = arith.constant 1344 : index
    %183 = vector.load %arg14[%c0_210, %c1344] : memref<1x2048xf32, #tpu.memory_space<vmem>>, vector<1x64xf32>
    tpu.vector_store %arg14[%c0_210, %c1344], %182 {strides = array<i32>} : memref<1x2048xf32, #tpu.memory_space<vmem>>, vector<1x64xf32>,
    %184 = vector.extract_strided_slice %139 {offsets = [22, 0], sizes = [1, 64], strides = [1, 1]} : vector<32x64xf32> to vector<1x64xf32>
    %c0_211 = arith.constant 0 : index
    %c1408 = arith.constant 1408 : index
    %185 = vector.load %arg14[%c0_211, %c1408] : memref<1x2048xf32, #tpu.memory_space<vmem>>, vector<1x64xf32>
    tpu.vector_store %arg14[%c0_211, %c1408], %184 {strides = array<i32>} : memref<1x2048xf32, #tpu.memory_space<vmem>>, vector<1x64xf32>,
    %186 = vector.extract_strided_slice %139 {offsets = [23, 0], sizes = [1, 64], strides = [1, 1]} : vector<32x64xf32> to vector<1x64xf32>
    %c0_212 = arith.constant 0 : index
    %c1472 = arith.constant 1472 : index
    %187 = vector.load %arg14[%c0_212, %c1472] : memref<1x2048xf32, #tpu.memory_space<vmem>>, vector<1x64xf32>
    tpu.vector_store %arg14[%c0_212, %c1472], %186 {strides = array<i32>} : memref<1x2048xf32, #tpu.memory_space<vmem>>, vector<1x64xf32>,
    %188 = vector.extract_strided_slice %139 {offsets = [24, 0], sizes = [1, 64], strides = [1, 1]} : vector<32x64xf32> to vector<1x64xf32>
    %c0_213 = arith.constant 0 : index
    %c1536 = arith.constant 1536 : index
    %189 = vector.load %arg14[%c0_213, %c1536] : memref<1x2048xf32, #tpu.memory_space<vmem>>, vector<1x64xf32>
    tpu.vector_store %arg14[%c0_213, %c1536], %188 {strides = array<i32>} : memref<1x2048xf32, #tpu.memory_space<vmem>>, vector<1x64xf32>,
    %190 = vector.extract_strided_slice %139 {offsets = [25, 0], sizes = [1, 64], strides = [1, 1]} : vector<32x64xf32> to vector<1x64xf32>
    %c0_214 = arith.constant 0 : index
    %c1600 = arith.constant 1600 : index
    %191 = vector.load %arg14[%c0_214, %c1600] : memref<1x2048xf32, #tpu.memory_space<vmem>>, vector<1x64xf32>
    tpu.vector_store %arg14[%c0_214, %c1600], %190 {strides = array<i32>} : memref<1x2048xf32, #tpu.memory_space<vmem>>, vector<1x64xf32>,
    %192 = vector.extract_strided_slice %139 {offsets = [26, 0], sizes = [1, 64], strides = [1, 1]} : vector<32x64xf32> to vector<1x64xf32>
    %c0_215 = arith.constant 0 : index
    %c1664 = arith.constant 1664 : index
    %193 = vector.load %arg14[%c0_215, %c1664] : memref<1x2048xf32, #tpu.memory_space<vmem>>, vector<1x64xf32>
    tpu.vector_store %arg14[%c0_215, %c1664], %192 {strides = array<i32>} : memref<1x2048xf32, #tpu.memory_space<vmem>>, vector<1x64xf32>,
    %194 = vector.extract_strided_slice %139 {offsets = [27, 0], sizes = [1, 64], strides = [1, 1]} : vector<32x64xf32> to vector<1x64xf32>
    %c0_216 = arith.constant 0 : index
    %c1728 = arith.constant 1728 : index
    %195 = vector.load %arg14[%c0_216, %c1728] : memref<1x2048xf32, #tpu.memory_space<vmem>>, vector<1x64xf32>
    tpu.vector_store %arg14[%c0_216, %c1728], %194 {strides = array<i32>} : memref<1x2048xf32, #tpu.memory_space<vmem>>, vector<1x64xf32>,
    %196 = vector.extract_strided_slice %139 {offsets = [28, 0], sizes = [1, 64], strides = [1, 1]} : vector<32x64xf32> to vector<1x64xf32>
    %c0_217 = arith.constant 0 : index
    %c1792 = arith.constant 1792 : index
    %197 = vector.load %arg14[%c0_217, %c1792] : memref<1x2048xf32, #tpu.memory_space<vmem>>, vector<1x64xf32>
    tpu.vector_store %arg14[%c0_217, %c1792], %196 {strides = array<i32>} : memref<1x2048xf32, #tpu.memory_space<vmem>>, vector<1x64xf32>,
    %198 = vector.extract_strided_slice %139 {offsets = [29, 0], sizes = [1, 64], strides = [1, 1]} : vector<32x64xf32> to vector<1x64xf32>
    %c0_218 = arith.constant 0 : index
    %c1856 = arith.constant 1856 : index
    %199 = vector.load %arg14[%c0_218, %c1856] : memref<1x2048xf32, #tpu.memory_space<vmem>>, vector<1x64xf32>
    tpu.vector_store %arg14[%c0_218, %c1856], %198 {strides = array<i32>} : memref<1x2048xf32, #tpu.memory_space<vmem>>, vector<1x64xf32>,
    %200 = vector.extract_strided_slice %139 {offsets = [30, 0], sizes = [1, 64], strides = [1, 1]} : vector<32x64xf32> to vector<1x64xf32>
    %c0_219 = arith.constant 0 : index
    %c1920 = arith.constant 1920 : index
    %201 = vector.load %arg14[%c0_219, %c1920] : memref<1x2048xf32, #tpu.memory_space<vmem>>, vector<1x64xf32>
    tpu.vector_store %arg14[%c0_219, %c1920], %200 {strides = array<i32>} : memref<1x2048xf32, #tpu.memory_space<vmem>>, vector<1x64xf32>,
    %202 = vector.extract_strided_slice %139 {offsets = [31, 0], sizes = [1, 64], strides = [1, 1]} : vector<32x64xf32> to vector<1x64xf32>
    %c0_220 = arith.constant 0 : index
    %c1984 = arith.constant 1984 : index
    %203 = vector.load %arg14[%c0_220, %c1984] : memref<1x2048xf32, #tpu.memory_space<vmem>>, vector<1x64xf32>
    tpu.vector_store %arg14[%c0_220, %c1984], %202 {strides = array<i32>} : memref<1x2048xf32, #tpu.memory_space<vmem>>, vector<1x64xf32>,
    %c0_221 = arith.constant 0 : index
    %c0_222 = arith.constant 0 : index
    %204 = vector.load %arg14[%c0_221, %c0_222] : memref<1x2048xf32, #tpu.memory_space<vmem>>, vector<1x2048xf32>
    %c0_223 = arith.constant 0 : index
    %c0_224 = arith.constant 0 : index
    %205 = vector.load %arg7[%c0_223, %c0_224] : memref<2048x128xf32, #tpu.memory_space<vmem>>, vector<2048x128xf32>
    %cst_225 = arith.constant dense<0.000000e+00> : vector<1x128xf32>
    %206 = tpu.matmul %204, %205, %cst_225 {dimension_numbers = #tpu.dot_dimension_numbers<[1], [0], [0], [1], [0, 0, 1, 1], [], []>} : vector<1x2048xf32>, vector<2048x128xf32>, vector<1x128xf32> -> vector<1x128xf32>
    %c0_226 = arith.constant 0 : index
    %c0_227 = arith.constant 0 : index
    %207 = vector.load %arg8[%c0_226, %c0_227] : memref<1x128xf32, #tpu.memory_space<vmem>>, vector<1x128xf32>
    %208 = arith.addf %206, %207 : vector<1x128xf32>
    %c0_228 = arith.constant 0 : index
    %c0_229 = arith.constant 0 : index
    %c0_230 = arith.constant 0 : index
    %209 = vector.load %arg9[%c0_228, %c0_229, %c0_230] : memref<1x1x128xf32, #tpu.memory_space<vmem>>, vector<1x1x128xf32>
    %210 = vector.shape_cast %209 : vector<1x1x128xf32> to vector<1x128xf32>
    %211 = vector.shape_cast %208 : vector<1x128xf32> to vector<1x1x128xf32>
    tpu.vector_store %arg9[%c0_228, %c0_229, %c0_230], %211 {strides = array<i32>} : memref<1x1x128xf32, #tpu.memory_space<vmem>>, vector<1x1x128xf32>,
    return
  }
  func.func @transform_0(%arg0: i32) -> (i32, i32, i32, i32) {
    %c0_i32 = arith.constant 0 : i32
    %c0_i32_0 = arith.constant 0 : i32
    %c0_i32_1 = arith.constant 0 : i32
    %c0_i32_2 = arith.constant 0 : i32
    return %arg0, %c0_i32, %c0_i32_0, %c0_i32_1 : i32, i32, i32, i32
  }
  func.func @transform_1(%arg0: i32) -> (i32, i32) {
    %c0_i32 = arith.constant 0 : i32
    %c0_i32_0 = arith.constant 0 : i32
    %c0_i32_1 = arith.constant 0 : i32
    return %c0_i32, %c0_i32_0 : i32, i32
  }
  func.func @transform_2(%arg0: i32) -> (i32, i32) {
    %c0_i32 = arith.constant 0 : i32
    %c0_i32_0 = arith.constant 0 : i32
    %c0_i32_1 = arith.constant 0 : i32
    return %c0_i32, %c0_i32_0 : i32, i32
  }
  func.func @transform_3(%arg0: i32) -> (i32, i32) {
    %c0_i32 = arith.constant 0 : i32
    %c0_i32_0 = arith.constant 0 : i32
    %c0_i32_1 = arith.constant 0 : i32
    return %c0_i32, %c0_i32_0 : i32, i32
  }
  func.func @transform_4(%arg0: i32) -> (i32, i32) {
    %c0_i32 = arith.constant 0 : i32
    %c0_i32_0 = arith.constant 0 : i32
    %c0_i32_1 = arith.constant 0 : i32
    return %c0_i32, %c0_i32_0 : i32, i32
  }
  func.func @transform_5(%arg0: i32) -> (i32, i32, i32) {
    %c0_i32 = arith.constant 0 : i32
    %c0_i32_0 = arith.constant 0 : i32
    %c0_i32_1 = arith.constant 0 : i32
    %c0_i32_2 = arith.constant 0 : i32
    return %c0_i32, %c0_i32_0, %c0_i32_1 : i32, i32, i32
  }
  func.func @transform_6(%arg0: i32) -> (i32, i32) {
    %c0_i32 = arith.constant 0 : i32
    %c0_i32_0 = arith.constant 0 : i32
    %c0_i32_1 = arith.constant 0 : i32
    return %c0_i32, %c0_i32_0 : i32, i32
  }
  func.func @transform_7(%arg0: i32) -> (i32, i32) {
    %c0_i32 = arith.constant 0 : i32
    %c0_i32_0 = arith.constant 0 : i32
    %c0_i32_1 = arith.constant 0 : i32
    return %c0_i32, %c0_i32_0 : i32, i32
  }
  func.func @transform_8(%arg0: i32) -> (i32, i32, i32) {
    %c0_i32 = arith.constant 0 : i32
    %c0_i32_0 = arith.constant 0 : i32
    %c0_i32_1 = arith.constant 0 : i32
    return %arg0, %c0_i32, %c0_i32_0 : i32, i32, i32
  }
}

</mosaic_0001>

<llo_original>
// kernel: basenet_forward.1
$region0: #{basenet_forward.1}
  #allocation0 [shape = 'u32[]', space=smem, size = 0x4, offset = 0x4, fixed_abs, tag = 'smem constant byte address 0x4 - core index']
  #allocation1 [shape = 'u32[144,128]{1,0:T(1,128)}', space=vmem, size = 0x12000, scoped, tag = 'internal scratch']
  #allocation2 [shape = 'f32[18,10,8]{2,1,0:T(8,128)}', space=vmem, size = 0x24000, scoped, tag = 'scratch operand']
  #allocation3 [shape = 'f32[128,72]{1,0:T(8,128)}', space=vmem, size = 0x10000, scoped, tag = 'scratch operand']
  #allocation4 [shape = 'f32[10,6,64]{2,1,0:T(8,128)}', space=vmem, size = 0xa000, scoped, tag = 'scratch operand']
  #allocation5 [shape = 'f32[32,576]{1,0:T(8,128)}', space=vmem, size = 0x14000, scoped, tag = 'scratch operand']
  #allocation6 [shape = 'f32[1,2048]{1,0:T(1,128)}', space=vmem, size = 0x2000, scoped, tag = 'scratch operand']
  %s0 = inlined_call_operand.vmem [shape: f32[2,16,8,5], index: 0, kind: input, shape index: {}]
  %s1 = inlined_call_operand.vmem [shape: f32[72,64], index: 1, kind: input, shape index: {}]
  %s2 = inlined_call_operand.vmem [shape: f32[576,64], index: 2, kind: input, shape index: {}]
  %s3 = inlined_call_operand.vmem [shape: f32[576,64], index: 3, kind: input, shape index: {}]
  %s4 = inlined_call_operand.vmem [shape: f32[6,64], index: 4, kind: input, shape index: {}]
  %s5 = inlined_call_operand.vmem [shape: f32[4,32,128], index: 5, kind: input, shape index: {}]
  %s6 = inlined_call_operand.vmem [shape: f32[2048,128], index: 6, kind: input, shape index: {}]
  %s7 = inlined_call_operand.vmem [shape: f32[1,128], index: 7, kind: input, shape index: {}]
  %s8 = inlined_call_operand.hbm [shape: f32[2,1,128], index: 8, kind: output, shape index: {}]
  %s9 = sld [smem:[#allocation0]]
  $region65: #{basenet_forward.1} parent=0
    _
  %s11 = ssub.s32 1, %s9
  %s12 = scalar_select 0, %s11, %s9
  $region1: #{basenet_forward.1} parent=0
    #allocation7 [shape = 'u8[1024]{0}', space=vmem, size = 0x400, scoped, tag = 'output window, operand 0']
    #allocation8 [shape = 's32[2]{0}', space=sflag, size = 0x8, scoped, tag = 'scoped memory for basenet_forward.1']
    %13 = vsyncpa [#allocation8], 0
    %s14 = scalar_lea.sflag [#allocation8], 1
    %15 = vsyncpa %s14, 0
    loop: start=0, step=1, limit=4
    $region2: #{basenet_forward.1} parent=1 // loop_pre_header
      _
    $region3: #{basenet_forward.1} parent=1 // loop_header
      %s17 = sphi 0, %s21
      %p18 = scmp.ge.s32.totalorder %s17, 4
      %s27 = sphi 0, %s29
      %s30 = sphi 0, %s27
      %s31 = sphi 0, %s30
      %s47 = sphi 0, %s31
      %s51 = sphi 0, %s51
      %s53 = sphi 0, %s51
      %s54 = sphi 0, %s53
      %s68 = sphi 0, %s54
      %s72 = sphi 0, %s72
      %s74 = sphi 0, %s72
      %s75 = sphi 0, %s74
      %s89 = sphi 0, %s75
      %s93 = sphi 0, %s93
      %s95 = sphi 0, %s93
      %s96 = sphi 0, %s95
      %s110 = sphi 0, %s96
      %s114 = sphi 0, %s114
      %s116 = sphi 0, %s114
      %s117 = sphi 0, %s116
      %s131 = sphi 0, %s117
      %s135 = sphi 0, %s135
      %s137 = sphi 0, %s135
      %s138 = sphi 0, %s137
      %s152 = sphi 0, %s138
      %s156 = sphi 0, %s156
      %s158 = sphi 0, %s156
      %s159 = sphi 0, %s158
      %s173 = sphi 0, %s159
      %s177 = sphi 0, %s177
      %s179 = sphi 0, %s177
      %s180 = sphi 0, %s179
      %s194 = sphi 0, %s180
      %s200 = sphi 0, %s202
      %s203 = sphi 0, %s200
      %s204 = sphi 0, %s203
      %s220 = sphi 0, %s204
    $region4: #{basenet_forward.1} parent=1 // loop_header_branch
      %20 = sbr.rel (%p18) target = $region8
    $region5: #{basenet_forward.1} parent=1 // loop_body
      %s22 = ssub.s32 %s17, 1
      %s23 = ssub.s32 %s17, 2
      %s24 = sadd.s32 %s17, 1
      %s25 = ssub.s32 %s17, %s24
      %p26 = scmp.eq.s32.totalorder %s25, 0
      %s28 = sadd.s32 %s27, 1
      %s29 = scalar_select %p26, %s27, %s28
      %p32 = pneg %p26
      %p33 = scmp.eq.s32.totalorder %s17, 1
      %p34 = por %p32, %p33
      %p35 = scmp.ne.s32.totalorder %s27, %s30
      %p36 = scmp.eq.s32.totalorder %s17, 0
      %p37 = por %p35, %p36
      %p38 = scmp.ne.s32.totalorder %s27, %s30
      %p39 = scmp.eq.s32.totalorder %s22, 1
      %p40 = por %p38, %p39
      %p41 = scmp.ne.s32.totalorder %s30, %s31
      %p42 = scmp.eq.s32.totalorder %s22, 0
      %p43 = por %p41, %p42
      %p44 = scmp.ne.s32.totalorder %s30, %s31
      %p45 = scmp.eq.s32.totalorder %s23, 1
      %p46 = por %p44, %p45
      %p48 = scmp.ne.s32.totalorder %s31, %s47
      %p49 = scmp.eq.s32.totalorder %s23, 0
      %p50 = por %p48, %p49
      %s52 = sadd.s32 %s51, 1
      %p55 = scmp.eq.s32.totalorder %s17, 1
      %p56 = scmp.ne.s32.totalorder %s51, %s53
      %p57 = scmp.eq.s32.totalorder %s17, 0
      %p58 = por %p56, %p57
      %p59 = scmp.ne.s32.totalorder %s51, %s53
      %p60 = scmp.eq.s32.totalorder %s22, 1
      %p61 = por %p59, %p60
      %p62 = scmp.ne.s32.totalorder %s53, %s54
      %p63 = scmp.eq.s32.totalorder %s22, 0
      %p64 = por %p62, %p63
      %p65 = scmp.ne.s32.totalorder %s53, %s54
      %p66 = scmp.eq.s32.totalorder %s23, 1
      %p67 = por %p65, %p66
      %p69 = scmp.ne.s32.totalorder %s54, %s68
      %p70 = scmp.eq.s32.totalorder %s23, 0
      %p71 = por %p69, %p70
      %s73 = sadd.s32 %s72, 1
      %p76 = scmp.eq.s32.totalorder %s17, 1
      %p77 = scmp.ne.s32.totalorder %s72, %s74
      %p78 = scmp.eq.s32.totalorder %s17, 0
      %p79 = por %p77, %p78
      %p80 = scmp.ne.s32.totalorder %s72, %s74
      %p81 = scmp.eq.s32.totalorder %s22, 1
      %p82 = por %p80, %p81
      %p83 = scmp.ne.s32.totalorder %s74, %s75
      %p84 = scmp.eq.s32.totalorder %s22, 0
      %p85 = por %p83, %p84
      %p86 = scmp.ne.s32.totalorder %s74, %s75
      %p87 = scmp.eq.s32.totalorder %s23, 1
      %p88 = por %p86, %p87
      %p90 = scmp.ne.s32.totalorder %s75, %s89
      %p91 = scmp.eq.s32.totalorder %s23, 0
      %p92 = por %p90, %p91
      %s94 = sadd.s32 %s93, 1
      %p97 = scmp.eq.s32.totalorder %s17, 1
      %p98 = scmp.ne.s32.totalorder %s93, %s95
      %p99 = scmp.eq.s32.totalorder %s17, 0
      %p100 = por %p98, %p99
      %p101 = scmp.ne.s32.totalorder %s93, %s95
      %p102 = scmp.eq.s32.totalorder %s22, 1
      %p103 = por %p101, %p102
      %p104 = scmp.ne.s32.totalorder %s95, %s96
      %p105 = scmp.eq.s32.totalorder %s22, 0
      %p106 = por %p104, %p105
      %p107 = scmp.ne.s32.totalorder %s95, %s96
      %p108 = scmp.eq.s32.totalorder %s23, 1
      %p109 = por %p107, %p108
      %p111 = scmp.ne.s32.totalorder %s96, %s110
      %p112 = scmp.eq.s32.totalorder %s23, 0
      %p113 = por %p111, %p112
      %s115 = sadd.s32 %s114, 1
      %p118 = scmp.eq.s32.totalorder %s17, 1
      %p119 = scmp.ne.s32.totalorder %s114, %s116
      %p120 = scmp.eq.s32.totalorder %s17, 0
      %p121 = por %p119, %p120
      %p122 = scmp.ne.s32.totalorder %s114, %s116
      %p123 = scmp.eq.s32.totalorder %s22, 1
      %p124 = por %p122, %p123
      %p125 = scmp.ne.s32.totalorder %s116, %s117
      %p126 = scmp.eq.s32.totalorder %s22, 0
      %p127 = por %p125, %p126
      %p128 = scmp.ne.s32.totalorder %s116, %s117
      %p129 = scmp.eq.s32.totalorder %s23, 1
      %p130 = por %p128, %p129
      %p132 = scmp.ne.s32.totalorder %s117, %s131
      %p133 = scmp.eq.s32.totalorder %s23, 0
      %p134 = por %p132, %p133
      %s136 = sadd.s32 %s135, 1
      %p139 = scmp.eq.s32.totalorder %s17, 1
      %p140 = scmp.ne.s32.totalorder %s135, %s137
      %p141 = scmp.eq.s32.totalorder %s17, 0
      %p142 = por %p140, %p141
      %p143 = scmp.ne.s32.totalorder %s135, %s137
      %p144 = scmp.eq.s32.totalorder %s22, 1
      %p145 = por %p143, %p144
      %p146 = scmp.ne.s32.totalorder %s137, %s138
      %p147 = scmp.eq.s32.totalorder %s22, 0
      %p148 = por %p146, %p147
      %p149 = scmp.ne.s32.totalorder %s137, %s138
      %p150 = scmp.eq.s32.totalorder %s23, 1
      %p151 = por %p149, %p150
      %p153 = scmp.ne.s32.totalorder %s138, %s152
      %p154 = scmp.eq.s32.totalorder %s23, 0
      %p155 = por %p153, %p154
      %s157 = sadd.s32 %s156, 1
      %p160 = scmp.eq.s32.totalorder %s17, 1
      %p161 = scmp.ne.s32.totalorder %s156, %s158
      %p162 = scmp.eq.s32.totalorder %s17, 0
      %p163 = por %p161, %p162
      %p164 = scmp.ne.s32.totalorder %s156, %s158
      %p165 = scmp.eq.s32.totalorder %s22, 1
      %p166 = por %p164, %p165
      %p167 = scmp.ne.s32.totalorder %s158, %s159
      %p168 = scmp.eq.s32.totalorder %s22, 0
      %p169 = por %p167, %p168
      %p170 = scmp.ne.s32.totalorder %s158, %s159
      %p171 = scmp.eq.s32.totalorder %s23, 1
      %p172 = por %p170, %p171
      %p174 = scmp.ne.s32.totalorder %s159, %s173
      %p175 = scmp.eq.s32.totalorder %s23, 0
      %p176 = por %p174, %p175
      %s178 = sadd.s32 %s177, 1
      %p181 = scmp.eq.s32.totalorder %s17, 1
      %p182 = scmp.ne.s32.totalorder %s177, %s179
      %p183 = scmp.eq.s32.totalorder %s17, 0
      %p184 = por %p182, %p183
      %p185 = scmp.ne.s32.totalorder %s177, %s179
      %p186 = scmp.eq.s32.totalorder %s22, 1
      %p187 = por %p185, %p186
      %p188 = scmp.ne.s32.totalorder %s179, %s180
      %p189 = scmp.eq.s32.totalorder %s22, 0
      %p190 = por %p188, %p189
      %p191 = scmp.ne.s32.totalorder %s179, %s180
      %p192 = scmp.eq.s32.totalorder %s23, 1
      %p193 = por %p191, %p192
      %p195 = scmp.ne.s32.totalorder %s180, %s194
      %p196 = scmp.eq.s32.totalorder %s23, 0
      %p197 = por %p195, %p196
      %s198 = ssub.s32 %s17, %s24
      %p199 = scmp.eq.s32.totalorder %s198, 0
      %s201 = sadd.s32 %s200, 1
      %s202 = scalar_select %p199, %s200, %s201
      %p205 = pneg %p199
      %p206 = scmp.eq.s32.totalorder %s17, 1
      %p207 = por %p205, %p206
      %p208 = scmp.ne.s32.totalorder %s200, %s203
      %p209 = scmp.eq.s32.totalorder %s17, 0
      %p210 = por %p208, %p209
      %p211 = scmp.ne.s32.totalorder %s200, %s203
      %p212 = scmp.eq.s32.totalorder %s22, 1
      %p213 = por %p211, %p212
      %p214 = scmp.ne.s32.totalorder %s203, %s204
      %p215 = scmp.eq.s32.totalorder %s22, 0
      %p216 = por %p214, %p215
      %p217 = scmp.ne.s32.totalorder %s203, %s204
      %p218 = scmp.eq.s32.totalorder %s23, 1
      %p219 = por %p217, %p218
      %p221 = scmp.ne.s32.totalorder %s204, %s220
      %p222 = scmp.eq.s32.totalorder %s23, 0
      %p223 = por %p221, %p222
      %p224 = scmp.le.s32.totalorder 1, %s17
      %p225 = scmp.lt.s32.totalorder %s17, 3
      %p226 = pnand %p224, %p225
      %p227 = pneg %p226
      // Predicated region
      $region9: #{basenet_forward.1} parent=5 // pred_check
        _
      $region10: #{basenet_forward.1} parent=5 // pred_check_branch
        %229 = sbr.rel (%p226) target = $region12
      $region11: #{basenet_forward.1} parent=5 // pred_region
        %s230 = ssub.s32 %s17, 1
        // Predicated region
        $region13: #{basenet_forward.1} parent=11 // pred_check
          %p231 = pneg %p64
        $region14: #{basenet_forward.1} parent=11 // pred_check_branch
          %233 = sbr.rel (%p231) target = $region16
        $region15: #{basenet_forward.1} parent=11 // pred_region
          _
        $region16: #{basenet_forward.1} parent=11 // pred_fallthru
          _
        // Predicated region
        $region17: #{basenet_forward.1} parent=11 // pred_check
          %p234 = pneg %p85
        $region18: #{basenet_forward.1} parent=11 // pred_check_branch
          %236 = sbr.rel (%p234) target = $region20
        $region19: #{basenet_forward.1} parent=11 // pred_region
          _
        $region20: #{basenet_forward.1} parent=11 // pred_fallthru
          _
        // Predicated region
        $region21: #{basenet_forward.1} parent=11 // pred_check
          %p237 = pneg %p106
        $region22: #{basenet_forward.1} parent=11 // pred_check_branch
          %239 = sbr.rel (%p237) target = $region24
        $region23: #{basenet_forward.1} parent=11 // pred_region
          _
        $region24: #{basenet_forward.1} parent=11 // pred_fallthru
          _
        // Predicated region
        $region25: #{basenet_forward.1} parent=11 // pred_check
          %p240 = pneg %p127
        $region26: #{basenet_forward.1} parent=11 // pred_check_branch
          %242 = sbr.rel (%p240) target = $region28
        $region27: #{basenet_forward.1} parent=11 // pred_region
          _
        $region28: #{basenet_forward.1} parent=11 // pred_fallthru
          _
        // Predicated region
        $region29: #{basenet_forward.1} parent=11 // pred_check
          %p243 = pneg %p148
        $region30: #{basenet_forward.1} parent=11 // pred_check_branch
          %245 = sbr.rel (%p243) target = $region32
        $region31: #{basenet_forward.1} parent=11 // pred_region
          _
        $region32: #{basenet_forward.1} parent=11 // pred_fallthru
          _
        // Predicated region
        $region33: #{basenet_forward.1} parent=11 // pred_check
          %p246 = pneg %p169
        $region34: #{basenet_forward.1} parent=11 // pred_check_branch
          %248 = sbr.rel (%p246) target = $region36
        $region35: #{basenet_forward.1} parent=11 // pred_region
          _
        $region36: #{basenet_forward.1} parent=11 // pred_fallthru
          _
        // Predicated region
        $region37: #{basenet_forward.1} parent=11 // pred_check
          %p249 = pneg %p190
        $region38: #{basenet_forward.1} parent=11 // pred_check_branch
          %251 = sbr.rel (%p249) target = $region40
        $region39: #{basenet_forward.1} parent=11 // pred_region
          _
        $region40: #{basenet_forward.1} parent=11 // pred_fallthru
          _
      $region12: #{basenet_forward.1} parent=5 // pred_fallthru
        _
      %p252 = scmp.lt.s32.totalorder %s17, 2
      // Predicated region
      $region41: #{basenet_forward.1} parent=5 // pred_check
        %p253 = pneg %p252
      $region42: #{basenet_forward.1} parent=5 // pred_check_branch
        %255 = sbr.rel (%p253) target = $region44
      $region43: #{basenet_forward.1} parent=5 // pred_region
        // Predicated region
        $region45: #{basenet_forward.1} parent=43 // pred_check
          %p256 = pneg %p37
        $region46: #{basenet_forward.1} parent=43 // pred_check_branch
          %258 = sbr.rel (%p256) target = $region48
        $region47: #{basenet_forward.1} parent=43 // pred_region
          %p259 = scmp.lt.s32.totalorder %s17, 1
          %s260 = scalar_select %p259, %s17, 1
          %s261 = smul.addr %s260, 16
          %s262 = smul.addr %s261, 8
          %s263 = scalar_lea.vmem %s0, %s262
        $region48: #{basenet_forward.1} parent=43 // pred_fallthru
          _
      $region44: #{basenet_forward.1} parent=5 // pred_fallthru
        _
      %p264 = scmp.le.s32.totalorder 1, %s17
      %p265 = scmp.lt.s32.totalorder %s17, 3
      %p266 = pnand %p264, %p265
      %p267 = pneg %p266
      // Predicated region
      $region49: #{basenet_forward.1} parent=5 // pred_check
        _
      $region50: #{basenet_forward.1} parent=5 // pred_check_branch
        %269 = sbr.rel (%p266) target = $region52
      $region51: #{basenet_forward.1} parent=5 // pred_region
        %s270 = ssub.s32 %s17, 1
        %p271 = scmp.lt.s32.totalorder %s22, 1
        %s272 = scalar_select %p271, %s22, 1
        %s273 = smul.addr %s272, 16
        %s274 = smul.addr %s273, 8
        %s275 = scalar_lea.vmem %s0, %s274
        %p276 = pneg %p43
        %p277 = pneg %p40
        %p278 = pneg %p64
        %p279 = pneg %p61
        %p280 = pneg %p85
        %p281 = pneg %p82
        %p282 = pneg %p106
        %p283 = pneg %p103
        %p284 = pneg %p127
        %p285 = pneg %p124
        %p286 = pneg %p148
        %p287 = pneg %p145
        %p288 = pneg %p169
        %p289 = pneg %p166
        %p290 = pneg %p190
        %p291 = pneg %p187
        %p292 = pneg %p216
        %p293 = pneg %p213
        %s294 = sand.u32 %s203, 1
        %s295 = scalar_lea.sflag [#allocation8], %s294
        %s296 = sand.u32 %s203, 1
        %s297 = scalar_lea.vmem [#allocation7], %s296
        %p298 = scmp.lt.s32.totalorder %s22, 1
        %s299 = scalar_select %p298, %s22, 1
        %s300 = smul.addr %s299, 16
        %s301 = smul.addr %s300, 8
        %s302 = scalar_lea.vmem %s0, %s301
        %vm303 = vcmask 64512
        %304 = vst.msk [vmem:[#allocation2] sm:$0xff] %vm303, 0.0
        %vm305 = vcmask 58368
        %306 = vst.msk [vmem:[#allocation2 + $0x8] sm:$0x3] %vm305, 0.0
        %307 = vst.msk [vmem:[#allocation2 + $0x10] sm:$0xff] %vm303, 0.0
        %308 = vst.msk [vmem:[#allocation2 + $0x18] sm:$0x3] %vm305, 0.0
        %309 = vst.msk [vmem:[#allocation2 + $0x20] sm:$0xff] %vm303, 0.0
        %310 = vst.msk [vmem:[#allocation2 + $0x28] sm:$0x3] %vm305, 0.0
        %311 = vst.msk [vmem:[#allocation2 + $0x30] sm:$0xff] %vm303, 0.0
        %312 = vst.msk [vmem:[#allocation2 + $0x38] sm:$0x3] %vm305, 0.0
        %313 = vst.msk [vmem:[#allocation2 + $0x40] sm:$0xff] %vm303, 0.0
        %314 = vst.msk [vmem:[#allocation2 + $0x48] sm:$0x3] %vm305, 0.0
        %315 = vst.msk [vmem:[#allocation2 + $0x50] sm:$0xff] %vm303, 0.0
        %316 = vst.msk [vmem:[#allocation2 + $0x58] sm:$0x3] %vm305, 0.0
        %317 = vst.msk [vmem:[#allocation2 + $0x60] sm:$0xff] %vm303, 0.0
        %318 = vst.msk [vmem:[#allocation2 + $0x68] sm:$0x3] %vm305, 0.0
        %319 = vst.msk [vmem:[#allocation2 + $0x70] sm:$0xff] %vm303, 0.0
        %320 = vst.msk [vmem:[#allocation2 + $0x78] sm:$0x3] %vm305, 0.0
        %321 = vst.msk [vmem:[#allocation2 + $0x80] sm:$0xff] %vm303, 0.0
        %322 = vst.msk [vmem:[#allocation2 + $0x88] sm:$0x3] %vm305, 0.0
        %323 = vst.msk [vmem:[#allocation2 + $0x90] sm:$0xff] %vm303, 0.0
        %324 = vst.msk [vmem:[#allocation2 + $0x98] sm:$0x3] %vm305, 0.0
        %325 = vst.msk [vmem:[#allocation2 + $0xa0] sm:$0xff] %vm303, 0.0
        %326 = vst.msk [vmem:[#allocation2 + $0xa8] sm:$0x3] %vm305, 0.0
        %327 = vst.msk [vmem:[#allocation2 + $0xb0] sm:$0xff] %vm303, 0.0
        %328 = vst.msk [vmem:[#allocation2 + $0xb8] sm:$0x3] %vm305, 0.0
        %329 = vst.msk [vmem:[#allocation2 + $0xc0] sm:$0xff] %vm303, 0.0
        %330 = vst.msk [vmem:[#allocation2 + $0xc8] sm:$0x3] %vm305, 0.0
        %331 = vst.msk [vmem:[#allocation2 + $0xd0] sm:$0xff] %vm303, 0.0
        %332 = vst.msk [vmem:[#allocation2 + $0xd8] sm:$0x3] %vm305, 0.0
        %333 = vst.msk [vmem:[#allocation2 + $0xe0] sm:$0xff] %vm303, 0.0
        %334 = vst.msk [vmem:[#allocation2 + $0xe8] sm:$0x3] %vm305, 0.0
        %335 = vst.msk [vmem:[#allocation2 + $0xf0] sm:$0xff] %vm303, 0.0
        %336 = vst.msk [vmem:[#allocation2 + $0xf8] sm:$0x3] %vm305, 0.0
        %337 = vst.msk [vmem:[#allocation2 + $0x100] sm:$0xff] %vm303, 0.0
        %338 = vst.msk [vmem:[#allocation2 + $0x108] sm:$0x3] %vm305, 0.0
        %339 = vst.msk [vmem:[#allocation2 + $0x110] sm:$0xff] %vm303, 0.0
        %340 = vst.msk [vmem:[#allocation2 + $0x118] sm:$0x3] %vm305, 0.0
        %v341 = vld [vmem:[%s302] sm:$0xff]
        %v342 = vld [vmem:[%s302 + $0x8] sm:$0xff]
        %v343 = vld [vmem:[%s302 + $0x10] sm:$0xff]
        %v344 = vld [vmem:[%s302 + $0x18] sm:$0xff]
        %v345 = vld [vmem:[%s302 + $0x20] sm:$0xff]
        %v346 = vld [vmem:[%s302 + $0x28] sm:$0xff]
        %v347 = vld [vmem:[%s302 + $0x30] sm:$0xff]
        %v348 = vld [vmem:[%s302 + $0x38] sm:$0xff]
        %v349 = vld [vmem:[%s302 + $0x40] sm:$0xff]
        %v350 = vld [vmem:[%s302 + $0x48] sm:$0xff]
        %v351 = vld [vmem:[%s302 + $0x50] sm:$0xff]
        %v352 = vld [vmem:[%s302 + $0x58] sm:$0xff]
        %v353 = vld [vmem:[%s302 + $0x60] sm:$0xff]
        %v354 = vld [vmem:[%s302 + $0x68] sm:$0xff]
        %v355 = vld [vmem:[%s302 + $0x70] sm:$0xff]
        %v356 = vld [vmem:[%s302 + $0x78] sm:$0xff]
        %s357 = scalar_lea.vmem [#allocation2], 16
        %vm358 = vcmask 39936
        %359 = vst.msk [vmem:[%s357 + $0x1] sm:$0xff] %vm358, %v341
        %360 = vst.msk [vmem:[%s357 + $0x11] sm:$0xff] %vm358, %v342
        %361 = vst.msk [vmem:[%s357 + $0x21] sm:$0xff] %vm358, %v343
        %362 = vst.msk [vmem:[%s357 + $0x31] sm:$0xff] %vm358, %v344
        %363 = vst.msk [vmem:[%s357 + $0x41] sm:$0xff] %vm358, %v345
        %364 = vst.msk [vmem:[%s357 + $0x51] sm:$0xff] %vm358, %v346
        %365 = vst.msk [vmem:[%s357 + $0x61] sm:$0xff] %vm358, %v347
        %366 = vst.msk [vmem:[%s357 + $0x71] sm:$0xff] %vm358, %v348
        %367 = vst.msk [vmem:[%s357 + $0x81] sm:$0xff] %vm358, %v349
        %368 = vst.msk [vmem:[%s357 + $0x91] sm:$0xff] %vm358, %v350
        %369 = vst.msk [vmem:[%s357 + $0xa1] sm:$0xff] %vm358, %v351
        %370 = vst.msk [vmem:[%s357 + $0xb1] sm:$0xff] %vm358, %v352
        %371 = vst.msk [vmem:[%s357 + $0xc1] sm:$0xff] %vm358, %v353
        %372 = vst.msk [vmem:[%s357 + $0xd1] sm:$0xff] %vm358, %v354
        %373 = vst.msk [vmem:[%s357 + $0xe1] sm:$0xff] %vm358, %v355
        %374 = vst.msk [vmem:[%s357 + $0xf1] sm:$0xff] %vm358, %v356
        %v375 = vld [vmem:[#allocation2] sm:$0xff]
        %v376 = vld [vmem:[#allocation2 + $0x10] sm:$0xff]
        %v377 = vld [vmem:[#allocation2 + $0x20] sm:$0xff]
        %v378 = vld [vmem:[#allocation2 + $0x30] sm:$0xff]
        %v379 = vld [vmem:[#allocation2 + $0x40] sm:$0xff]
        %v380 = vld [vmem:[#allocation2 + $0x50] sm:$0xff]
        %v381 = vld [vmem:[#allocation2 + $0x60] sm:$0xff]
        %v382 = vld [vmem:[#allocation2 + $0x70] sm:$0xff]
        %v383 = vld [vmem:[#allocation2 + $0x80] sm:$0xff]
        %v384 = vld [vmem:[#allocation2 + $0x90] sm:$0xff]
        %v385 = vld [vmem:[#allocation2 + $0xa0] sm:$0xff]
        %v386 = vld [vmem:[#allocation2 + $0xb0] sm:$0xff]
        %v387 = vld [vmem:[#allocation2 + $0xc0] sm:$0xff]
        %v388 = vld [vmem:[#allocation2 + $0xd0] sm:$0xff]
        %v389 = vld [vmem:[#allocation2 + $0xe0] sm:$0xff]
        %v390 = vld [vmem:[#allocation2 + $0xf0] sm:$0xff]
        %391 = vst.msk [vmem:[#allocation3] sm:$0xff] %vm303, %v375
        %392 = vst.msk [vmem:[#allocation3 + $0x8] sm:$0xff] %vm303, %v376
        %393 = vst.msk [vmem:[#allocation3 + $0x10] sm:$0xff] %vm303, %v377
        %394 = vst.msk [vmem:[#allocation3 + $0x18] sm:$0xff] %vm303, %v378
        %395 = vst.msk [vmem:[#allocation3 + $0x20] sm:$0xff] %vm303, %v379
        %396 = vst.msk [vmem:[#allocation3 + $0x28] sm:$0xff] %vm303, %v380
        %397 = vst.msk [vmem:[#allocation3 + $0x30] sm:$0xff] %vm303, %v381
        %398 = vst.msk [vmem:[#allocation3 + $0x38] sm:$0xff] %vm303, %v382
        %399 = vst.msk [vmem:[#allocation3 + $0x40] sm:$0xff] %vm303, %v383
        %400 = vst.msk [vmem:[#allocation3 + $0x48] sm:$0xff] %vm303, %v384
        %401 = vst.msk [vmem:[#allocation3 + $0x50] sm:$0xff] %vm303, %v385
        %402 = vst.msk [vmem:[#allocation3 + $0x58] sm:$0xff] %vm303, %v386
        %403 = vst.msk [vmem:[#allocation3 + $0x60] sm:$0xff] %vm303, %v387
        %404 = vst.msk [vmem:[#allocation3 + $0x68] sm:$0xff] %vm303, %v388
        %405 = vst.msk [vmem:[#allocation3 + $0x70] sm:$0xff] %vm303, %v389
        %406 = vst.msk [vmem:[#allocation3 + $0x78] sm:$0xff] %vm303, %v390
        %v407 = vld [vmem:[#allocation2 + $0x1] sm:$0xff]
        %v408 = vld [vmem:[#allocation2 + $0x11] sm:$0xff]
        %v409 = vld [vmem:[#allocation2 + $0x21] sm:$0xff]
        %v410 = vld [vmem:[#allocation2 + $0x31] sm:$0xff]
        %v411 = vld [vmem:[#allocation2 + $0x41] sm:$0xff]
        %v412 = vld [vmem:[#allocation2 + $0x51] sm:$0xff]
        %v413 = vld [vmem:[#allocation2 + $0x61] sm:$0xff]
        %v414 = vld [vmem:[#allocation2 + $0x71] sm:$0xff]
        %v415 = vld [vmem:[#allocation2 + $0x81] sm:$0xff]
        %v416 = vld [vmem:[#allocation2 + $0x91] sm:$0xff]
        %v417 = vld [vmem:[#allocation2 + $0xa1] sm:$0xff]
        %v418 = vld [vmem:[#allocation2 + $0xb1] sm:$0xff]
        %v419 = vld [vmem:[#allocation2 + $0xc1] sm:$0xff]
        %v420 = vld [vmem:[#allocation2 + $0xd1] sm:$0xff]
        %v421 = vld [vmem:[#allocation2 + $0xe1] sm:$0xff]
        %v422 = vld [vmem:[#allocation2 + $0xf1] sm:$0xff]
        %439 = vrot.lane.b32.xlu0 %v407, 8
        %v440 = vpop.permute.xlu0 %439
        %441 = vrot.lane.b32.xlu0 %v408, 8
        %v442 = vpop.permute.xlu0 %441
        %443 = vrot.lane.b32.xlu0 %v409, 8
        %v444 = vpop.permute.xlu0 %443
        %445 = vrot.lane.b32.xlu0 %v410, 8
        %v446 = vpop.permute.xlu0 %445
        %447 = vrot.lane.b32.xlu0 %v411, 8
        %v448 = vpop.permute.xlu0 %447
        %449 = vrot.lane.b32.xlu0 %v412, 8
        %v450 = vpop.permute.xlu0 %449
        %451 = vrot.lane.b32.xlu0 %v413, 8
        %v452 = vpop.permute.xlu0 %451
        %453 = vrot.lane.b32.xlu0 %v414, 8
        %v454 = vpop.permute.xlu0 %453
        %455 = vrot.lane.b32.xlu0 %v415, 8
        %v456 = vpop.permute.xlu0 %455
        %457 = vrot.lane.b32.xlu0 %v416, 8
        %v458 = vpop.permute.xlu0 %457
        %459 = vrot.lane.b32.xlu0 %v417, 8
        %v460 = vpop.permute.xlu0 %459
        %461 = vrot.lane.b32.xlu0 %v418, 8
        %v462 = vpop.permute.xlu0 %461
        %463 = vrot.lane.b32.xlu0 %v419, 8
        %v464 = vpop.permute.xlu0 %463
        %465 = vrot.lane.b32.xlu0 %v420, 8
        %v466 = vpop.permute.xlu0 %465
        %467 = vrot.lane.b32.xlu0 %v421, 8
        %v468 = vpop.permute.xlu0 %467
        %469 = vrot.lane.b32.xlu0 %v422, 8
        %v470 = vpop.permute.xlu0 %469
        %vm487 = vcmask 130112
        %488 = vst.msk [vmem:[#allocation3] sm:$0xff] %vm487, %v440
        %489 = vst.msk [vmem:[#allocation3 + $0x8] sm:$0xff] %vm487, %v442
        %490 = vst.msk [vmem:[#allocation3 + $0x10] sm:$0xff] %vm487, %v444
        %491 = vst.msk [vmem:[#allocation3 + $0x18] sm:$0xff] %vm487, %v446
        %492 = vst.msk [vmem:[#allocation3 + $0x20] sm:$0xff] %vm487, %v448
        %493 = vst.msk [vmem:[#allocation3 + $0x28] sm:$0xff] %vm487, %v450
        %494 = vst.msk [vmem:[#allocation3 + $0x30] sm:$0xff] %vm487, %v452
        %495 = vst.msk [vmem:[#allocation3 + $0x38] sm:$0xff] %vm487, %v454
        %496 = vst.msk [vmem:[#allocation3 + $0x40] sm:$0xff] %vm487, %v456
        %497 = vst.msk [vmem:[#allocation3 + $0x48] sm:$0xff] %vm487, %v458
        %498 = vst.msk [vmem:[#allocation3 + $0x50] sm:$0xff] %vm487, %v460
        %499 = vst.msk [vmem:[#allocation3 + $0x58] sm:$0xff] %vm487, %v462
        %500 = vst.msk [vmem:[#allocation3 + $0x60] sm:$0xff] %vm487, %v464
        %501 = vst.msk [vmem:[#allocation3 + $0x68] sm:$0xff] %vm487, %v466
        %502 = vst.msk [vmem:[#allocation3 + $0x70] sm:$0xff] %vm487, %v468
        %503 = vst.msk [vmem:[#allocation3 + $0x78] sm:$0xff] %vm487, %v470
        %v504 = vld [vmem:[#allocation2 + $0x2] sm:$0xff]
        %v505 = vld [vmem:[#allocation2 + $0x12] sm:$0xff]
        %v506 = vld [vmem:[#allocation2 + $0x22] sm:$0xff]
        %v507 = vld [vmem:[#allocation2 + $0x32] sm:$0xff]
        %v508 = vld [vmem:[#allocation2 + $0x42] sm:$0xff]
        %v509 = vld [vmem:[#allocation2 + $0x52] sm:$0xff]
        %v510 = vld [vmem:[#allocation2 + $0x62] sm:$0xff]
        %v511 = vld [vmem:[#allocation2 + $0x72] sm:$0xff]
        %v512 = vld [vmem:[#allocation2 + $0x82] sm:$0xff]
        %v513 = vld [vmem:[#allocation2 + $0x92] sm:$0xff]
        %v514 = vld [vmem:[#allocation2 + $0xa2] sm:$0xff]
        %v515 = vld [vmem:[#allocation2 + $0xb2] sm:$0xff]
        %v516 = vld [vmem:[#allocation2 + $0xc2] sm:$0xff]
        %v517 = vld [vmem:[#allocation2 + $0xd2] sm:$0xff]
        %v518 = vld [vmem:[#allocation2 + $0xe2] sm:$0xff]
        %v519 = vld [vmem:[#allocation2 + $0xf2] sm:$0xff]
        %536 = vrot.lane.b32.xlu0 %v504, 16
        %v537 = vpop.permute.xlu0 %536
        %538 = vrot.lane.b32.xlu0 %v505, 16
        %v539 = vpop.permute.xlu0 %538
        %540 = vrot.lane.b32.xlu0 %v506, 16
        %v541 = vpop.permute.xlu0 %540
        %542 = vrot.lane.b32.xlu0 %v507, 16
        %v543 = vpop.permute.xlu0 %542
        %544 = vrot.lane.b32.xlu0 %v508, 16
        %v545 = vpop.permute.xlu0 %544
        %546 = vrot.lane.b32.xlu0 %v509, 16
        %v547 = vpop.permute.xlu0 %546
        %548 = vrot.lane.b32.xlu0 %v510, 16
        %v549 = vpop.permute.xlu0 %548
        %550 = vrot.lane.b32.xlu0 %v511, 16
        %v551 = vpop.permute.xlu0 %550
        %552 = vrot.lane.b32.xlu0 %v512, 16
        %v553 = vpop.permute.xlu0 %552
        %554 = vrot.lane.b32.xlu0 %v513, 16
        %v555 = vpop.permute.xlu0 %554
        %556 = vrot.lane.b32.xlu0 %v514, 16
        %v557 = vpop.permute.xlu0 %556
        %558 = vrot.lane.b32.xlu0 %v515, 16
        %v559 = vpop.permute.xlu0 %558
        %560 = vrot.lane.b32.xlu0 %v516, 16
        %v561 = vpop.permute.xlu0 %560
        %562 = vrot.lane.b32.xlu0 %v517, 16
        %v563 = vpop.permute.xlu0 %562
        %564 = vrot.lane.b32.xlu0 %v518, 16
        %v565 = vpop.permute.xlu0 %564
        %566 = vrot.lane.b32.xlu0 %v519, 16
        %v567 = vpop.permute.xlu0 %566
        %vm584 = vcmask 195712
        %585 = vst.msk [vmem:[#allocation3] sm:$0xff] %vm584, %v537
        %586 = vst.msk [vmem:[#allocation3 + $0x8] sm:$0xff] %vm584, %v539
        %587 = vst.msk [vmem:[#allocation3 + $0x10] sm:$0xff] %vm584, %v541
        %588 = vst.msk [vmem:[#allocation3 + $0x18] sm:$0xff] %vm584, %v543
        %589 = vst.msk [vmem:[#allocation3 + $0x20] sm:$0xff] %vm584, %v545
        %590 = vst.msk [vmem:[#allocation3 + $0x28] sm:$0xff] %vm584, %v547
        %591 = vst.msk [vmem:[#allocation3 + $0x30] sm:$0xff] %vm584, %v549
        %592 = vst.msk [vmem:[#allocation3 + $0x38] sm:$0xff] %vm584, %v551
        %593 = vst.msk [vmem:[#allocation3 + $0x40] sm:$0xff] %vm584, %v553
        %594 = vst.msk [vmem:[#allocation3 + $0x48] sm:$0xff] %vm584, %v555
        %595 = vst.msk [vmem:[#allocation3 + $0x50] sm:$0xff] %vm584, %v557
        %596 = vst.msk [vmem:[#allocation3 + $0x58] sm:$0xff] %vm584, %v559
        %597 = vst.msk [vmem:[#allocation3 + $0x60] sm:$0xff] %vm584, %v561
        %598 = vst.msk [vmem:[#allocation3 + $0x68] sm:$0xff] %vm584, %v563
        %599 = vst.msk [vmem:[#allocation3 + $0x70] sm:$0xff] %vm584, %v565
        %600 = vst.msk [vmem:[#allocation3 + $0x78] sm:$0xff] %vm584, %v567
        %v601 = vld [vmem:[%s357] sm:$0xff]
        %v602 = vld [vmem:[%s357 + $0x10] sm:$0xff]
        %v603 = vld [vmem:[%s357 + $0x20] sm:$0xff]
        %v604 = vld [vmem:[%s357 + $0x30] sm:$0xff]
        %v605 = vld [vmem:[%s357 + $0x40] sm:$0xff]
        %v606 = vld [vmem:[%s357 + $0x50] sm:$0xff]
        %v607 = vld [vmem:[%s357 + $0x60] sm:$0xff]
        %v608 = vld [vmem:[%s357 + $0x70] sm:$0xff]
        %v609 = vld [vmem:[%s357 + $0x80] sm:$0xff]
        %v610 = vld [vmem:[%s357 + $0x90] sm:$0xff]
        %v611 = vld [vmem:[%s357 + $0xa0] sm:$0xff]
        %v612 = vld [vmem:[%s357 + $0xb0] sm:$0xff]
        %v613 = vld [vmem:[%s357 + $0xc0] sm:$0xff]
        %v614 = vld [vmem:[%s357 + $0xd0] sm:$0xff]
        %v615 = vld [vmem:[%s357 + $0xe0] sm:$0xff]
        %v616 = vld [vmem:[%s357 + $0xf0] sm:$0xff]
        %633 = vrot.lane.b32.xlu0 %v601, 24
        %v634 = vpop.permute.xlu0 %633
        %635 = vrot.lane.b32.xlu0 %v602, 24
        %v636 = vpop.permute.xlu0 %635
        %637 = vrot.lane.b32.xlu0 %v603, 24
        %v638 = vpop.permute.xlu0 %637
        %639 = vrot.lane.b32.xlu0 %v604, 24
        %v640 = vpop.permute.xlu0 %639
        %641 = vrot.lane.b32.xlu0 %v605, 24
        %v642 = vpop.permute.xlu0 %641
        %643 = vrot.lane.b32.xlu0 %v606, 24
        %v644 = vpop.permute.xlu0 %643
        %645 = vrot.lane.b32.xlu0 %v607, 24
        %v646 = vpop.permute.xlu0 %645
        %647 = vrot.lane.b32.xlu0 %v608, 24
        %v648 = vpop.permute.xlu0 %647
        %649 = vrot.lane.b32.xlu0 %v609, 24
        %v650 = vpop.permute.xlu0 %649
        %651 = vrot.lane.b32.xlu0 %v610, 24
        %v652 = vpop.permute.xlu0 %651
        %653 = vrot.lane.b32.xlu0 %v611, 24
        %v654 = vpop.permute.xlu0 %653
        %655 = vrot.lane.b32.xlu0 %v612, 24
        %v656 = vpop.permute.xlu0 %655
        %657 = vrot.lane.b32.xlu0 %v613, 24
        %v658 = vpop.permute.xlu0 %657
        %659 = vrot.lane.b32.xlu0 %v614, 24
        %v660 = vpop.permute.xlu0 %659
        %661 = vrot.lane.b32.xlu0 %v615, 24
        %v662 = vpop.permute.xlu0 %661
        %663 = vrot.lane.b32.xlu0 %v616, 24
        %v664 = vpop.permute.xlu0 %663
        %vm681 = vcmask 261312
        %682 = vst.msk [vmem:[#allocation3] sm:$0xff] %vm681, %v634
        %683 = vst.msk [vmem:[#allocation3 + $0x8] sm:$0xff] %vm681, %v636
        %684 = vst.msk [vmem:[#allocation3 + $0x10] sm:$0xff] %vm681, %v638
        %685 = vst.msk [vmem:[#allocation3 + $0x18] sm:$0xff] %vm681, %v640
        %686 = vst.msk [vmem:[#allocation3 + $0x20] sm:$0xff] %vm681, %v642
        %687 = vst.msk [vmem:[#allocation3 + $0x28] sm:$0xff] %vm681, %v644
        %688 = vst.msk [vmem:[#allocation3 + $0x30] sm:$0xff] %vm681, %v646
        %689 = vst.msk [vmem:[#allocation3 + $0x38] sm:$0xff] %vm681, %v648
        %690 = vst.msk [vmem:[#allocation3 + $0x40] sm:$0xff] %vm681, %v650
        %691 = vst.msk [vmem:[#allocation3 + $0x48] sm:$0xff] %vm681, %v652
        %692 = vst.msk [vmem:[#allocation3 + $0x50] sm:$0xff] %vm681, %v654
        %693 = vst.msk [vmem:[#allocation3 + $0x58] sm:$0xff] %vm681, %v656
        %694 = vst.msk [vmem:[#allocation3 + $0x60] sm:$0xff] %vm681, %v658
        %695 = vst.msk [vmem:[#allocation3 + $0x68] sm:$0xff] %vm681, %v660
        %696 = vst.msk [vmem:[#allocation3 + $0x70] sm:$0xff] %vm681, %v662
        %697 = vst.msk [vmem:[#allocation3 + $0x78] sm:$0xff] %vm681, %v664
        %v698 = vld [vmem:[%s357 + $0x1] sm:$0xff]
        %v699 = vld [vmem:[%s357 + $0x11] sm:$0xff]
        %v700 = vld [vmem:[%s357 + $0x21] sm:$0xff]
        %v701 = vld [vmem:[%s357 + $0x31] sm:$0xff]
        %v702 = vld [vmem:[%s357 + $0x41] sm:$0xff]
        %v703 = vld [vmem:[%s357 + $0x51] sm:$0xff]
        %v704 = vld [vmem:[%s357 + $0x61] sm:$0xff]
        %v705 = vld [vmem:[%s357 + $0x71] sm:$0xff]
        %v706 = vld [vmem:[%s357 + $0x81] sm:$0xff]
        %v707 = vld [vmem:[%s357 + $0x91] sm:$0xff]
        %v708 = vld [vmem:[%s357 + $0xa1] sm:$0xff]
        %v709 = vld [vmem:[%s357 + $0xb1] sm:$0xff]
        %v710 = vld [vmem:[%s357 + $0xc1] sm:$0xff]
        %v711 = vld [vmem:[%s357 + $0xd1] sm:$0xff]
        %v712 = vld [vmem:[%s357 + $0xe1] sm:$0xff]
        %v713 = vld [vmem:[%s357 + $0xf1] sm:$0xff]
        %730 = vrot.lane.b32.xlu0 %v698, 32
        %v731 = vpop.permute.xlu0 %730
        %732 = vrot.lane.b32.xlu0 %v699, 32
        %v733 = vpop.permute.xlu0 %732
        %734 = vrot.lane.b32.xlu0 %v700, 32
        %v735 = vpop.permute.xlu0 %734
        %736 = vrot.lane.b32.xlu0 %v701, 32
        %v737 = vpop.permute.xlu0 %736
        %738 = vrot.lane.b32.xlu0 %v702, 32
        %v739 = vpop.permute.xlu0 %738
        %740 = vrot.lane.b32.xlu0 %v703, 32
        %v741 = vpop.permute.xlu0 %740
        %742 = vrot.lane.b32.xlu0 %v704, 32
        %v743 = vpop.permute.xlu0 %742
        %744 = vrot.lane.b32.xlu0 %v705, 32
        %v745 = vpop.permute.xlu0 %744
        %746 = vrot.lane.b32.xlu0 %v706, 32
        %v747 = vpop.permute.xlu0 %746
        %748 = vrot.lane.b32.xlu0 %v707, 32
        %v749 = vpop.permute.xlu0 %748
        %750 = vrot.lane.b32.xlu0 %v708, 32
        %v751 = vpop.permute.xlu0 %750
        %752 = vrot.lane.b32.xlu0 %v709, 32
        %v753 = vpop.permute.xlu0 %752
        %754 = vrot.lane.b32.xlu0 %v710, 32
        %v755 = vpop.permute.xlu0 %754
        %756 = vrot.lane.b32.xlu0 %v711, 32
        %v757 = vpop.permute.xlu0 %756
        %758 = vrot.lane.b32.xlu0 %v712, 32
        %v759 = vpop.permute.xlu0 %758
        %760 = vrot.lane.b32.xlu0 %v713, 32
        %v761 = vpop.permute.xlu0 %760
        %vm778 = vcmask 326912
        %779 = vst.msk [vmem:[#allocation3] sm:$0xff] %vm778, %v731
        %780 = vst.msk [vmem:[#allocation3 + $0x8] sm:$0xff] %vm778, %v733
        %781 = vst.msk [vmem:[#allocation3 + $0x10] sm:$0xff] %vm778, %v735
        %782 = vst.msk [vmem:[#allocation3 + $0x18] sm:$0xff] %vm778, %v737
        %783 = vst.msk [vmem:[#allocation3 + $0x20] sm:$0xff] %vm778, %v739
        %784 = vst.msk [vmem:[#allocation3 + $0x28] sm:$0xff] %vm778, %v741
        %785 = vst.msk [vmem:[#allocation3 + $0x30] sm:$0xff] %vm778, %v743
        %786 = vst.msk [vmem:[#allocation3 + $0x38] sm:$0xff] %vm778, %v745
        %787 = vst.msk [vmem:[#allocation3 + $0x40] sm:$0xff] %vm778, %v747
        %788 = vst.msk [vmem:[#allocation3 + $0x48] sm:$0xff] %vm778, %v749
        %789 = vst.msk [vmem:[#allocation3 + $0x50] sm:$0xff] %vm778, %v751
        %790 = vst.msk [vmem:[#allocation3 + $0x58] sm:$0xff] %vm778, %v753
        %791 = vst.msk [vmem:[#allocation3 + $0x60] sm:$0xff] %vm778, %v755
        %792 = vst.msk [vmem:[#allocation3 + $0x68] sm:$0xff] %vm778, %v757
        %793 = vst.msk [vmem:[#allocation3 + $0x70] sm:$0xff] %vm778, %v759
        %794 = vst.msk [vmem:[#allocation3 + $0x78] sm:$0xff] %vm778, %v761
        %v795 = vld [vmem:[%s357 + $0x2] sm:$0xff]
        %v796 = vld [vmem:[%s357 + $0x12] sm:$0xff]
        %v797 = vld [vmem:[%s357 + $0x22] sm:$0xff]
        %v798 = vld [vmem:[%s357 + $0x32] sm:$0xff]
        %v799 = vld [vmem:[%s357 + $0x42] sm:$0xff]
        %v800 = vld [vmem:[%s357 + $0x52] sm:$0xff]
        %v801 = vld [vmem:[%s357 + $0x62] sm:$0xff]
        %v802 = vld [vmem:[%s357 + $0x72] sm:$0xff]
        %v803 = vld [vmem:[%s357 + $0x82] sm:$0xff]
        %v804 = vld [vmem:[%s357 + $0x92] sm:$0xff]
        %v805 = vld [vmem:[%s357 + $0xa2] sm:$0xff]
        %v806 = vld [vmem:[%s357 + $0xb2] sm:$0xff]
        %v807 = vld [vmem:[%s357 + $0xc2] sm:$0xff]
        %v808 = vld [vmem:[%s357 + $0xd2] sm:$0xff]
        %v809 = vld [vmem:[%s357 + $0xe2] sm:$0xff]
        %v810 = vld [vmem:[%s357 + $0xf2] sm:$0xff]
        %827 = vrot.lane.b32.xlu0 %v795, 40
        %v828 = vpop.permute.xlu0 %827
        %829 = vrot.lane.b32.xlu0 %v796, 40
        %v830 = vpop.permute.xlu0 %829
        %831 = vrot.lane.b32.xlu0 %v797, 40
        %v832 = vpop.permute.xlu0 %831
        %833 = vrot.lane.b32.xlu0 %v798, 40
        %v834 = vpop.permute.xlu0 %833
        %835 = vrot.lane.b32.xlu0 %v799, 40
        %v836 = vpop.permute.xlu0 %835
        %837 = vrot.lane.b32.xlu0 %v800, 40
        %v838 = vpop.permute.xlu0 %837
        %839 = vrot.lane.b32.xlu0 %v801, 40
        %v840 = vpop.permute.xlu0 %839
        %841 = vrot.lane.b32.xlu0 %v802, 40
        %v842 = vpop.permute.xlu0 %841
        %843 = vrot.lane.b32.xlu0 %v803, 40
        %v844 = vpop.permute.xlu0 %843
        %845 = vrot.lane.b32.xlu0 %v804, 40
        %v846 = vpop.permute.xlu0 %845
        %847 = vrot.lane.b32.xlu0 %v805, 40
        %v848 = vpop.permute.xlu0 %847
        %849 = vrot.lane.b32.xlu0 %v806, 40
        %v850 = vpop.permute.xlu0 %849
        %851 = vrot.lane.b32.xlu0 %v807, 40
        %v852 = vpop.permute.xlu0 %851
        %853 = vrot.lane.b32.xlu0 %v808, 40
        %v854 = vpop.permute.xlu0 %853
        %855 = vrot.lane.b32.xlu0 %v809, 40
        %v856 = vpop.permute.xlu0 %855
        %857 = vrot.lane.b32.xlu0 %v810, 40
        %v858 = vpop.permute.xlu0 %857
        %vm875 = vcmask 392512
        %876 = vst.msk [vmem:[#allocation3] sm:$0xff] %vm875, %v828
        %877 = vst.msk [vmem:[#allocation3 + $0x8] sm:$0xff] %vm875, %v830
        %878 = vst.msk [vmem:[#allocation3 + $0x10] sm:$0xff] %vm875, %v832
        %879 = vst.msk [vmem:[#allocation3 + $0x18] sm:$0xff] %vm875, %v834
        %880 = vst.msk [vmem:[#allocation3 + $0x20] sm:$0xff] %vm875, %v836
        %881 = vst.msk [vmem:[#allocation3 + $0x28] sm:$0xff] %vm875, %v838
        %882 = vst.msk [vmem:[#allocation3 + $0x30] sm:$0xff] %vm875, %v840
        %883 = vst.msk [vmem:[#allocation3 + $0x38] sm:$0xff] %vm875, %v842
        %884 = vst.msk [vmem:[#allocation3 + $0x40] sm:$0xff] %vm875, %v844
        %885 = vst.msk [vmem:[#allocation3 + $0x48] sm:$0xff] %vm875, %v846
        %886 = vst.msk [vmem:[#allocation3 + $0x50] sm:$0xff] %vm875, %v848
        %887 = vst.msk [vmem:[#allocation3 + $0x58] sm:$0xff] %vm875, %v850
        %888 = vst.msk [vmem:[#allocation3 + $0x60] sm:$0xff] %vm875, %v852
        %889 = vst.msk [vmem:[#allocation3 + $0x68] sm:$0xff] %vm875, %v854
        %890 = vst.msk [vmem:[#allocation3 + $0x70] sm:$0xff] %vm875, %v856
        %891 = vst.msk [vmem:[#allocation3 + $0x78] sm:$0xff] %vm875, %v858
        %s892 = scalar_lea.vmem [#allocation2], 32
        %v893 = vld [vmem:[%s892] sm:$0xff]
        %v894 = vld [vmem:[%s892 + $0x10] sm:$0xff]
        %v895 = vld [vmem:[%s892 + $0x20] sm:$0xff]
        %v896 = vld [vmem:[%s892 + $0x30] sm:$0xff]
        %v897 = vld [vmem:[%s892 + $0x40] sm:$0xff]
        %v898 = vld [vmem:[%s892 + $0x50] sm:$0xff]
        %v899 = vld [vmem:[%s892 + $0x60] sm:$0xff]
        %v900 = vld [vmem:[%s892 + $0x70] sm:$0xff]
        %v901 = vld [vmem:[%s892 + $0x80] sm:$0xff]
        %v902 = vld [vmem:[%s892 + $0x90] sm:$0xff]
        %v903 = vld [vmem:[%s892 + $0xa0] sm:$0xff]
        %v904 = vld [vmem:[%s892 + $0xb0] sm:$0xff]
        %v905 = vld [vmem:[%s892 + $0xc0] sm:$0xff]
        %v906 = vld [vmem:[%s892 + $0xd0] sm:$0xff]
        %v907 = vld [vmem:[%s892 + $0xe0] sm:$0xff]
        %v908 = vld [vmem:[%s892 + $0xf0] sm:$0xff]
        %925 = vrot.lane.b32.xlu0 %v893, 48
        %v926 = vpop.permute.xlu0 %925
        %927 = vrot.lane.b32.xlu0 %v894, 48
        %v928 = vpop.permute.xlu0 %927
        %929 = vrot.lane.b32.xlu0 %v895, 48
        %v930 = vpop.permute.xlu0 %929
        %931 = vrot.lane.b32.xlu0 %v896, 48
        %v932 = vpop.permute.xlu0 %931
        %933 = vrot.lane.b32.xlu0 %v897, 48
        %v934 = vpop.permute.xlu0 %933
        %935 = vrot.lane.b32.xlu0 %v898, 48
        %v936 = vpop.permute.xlu0 %935
        %937 = vrot.lane.b32.xlu0 %v899, 48
        %v938 = vpop.permute.xlu0 %937
        %939 = vrot.lane.b32.xlu0 %v900, 48
        %v940 = vpop.permute.xlu0 %939
        %941 = vrot.lane.b32.xlu0 %v901, 48
        %v942 = vpop.permute.xlu0 %941
        %943 = vrot.lane.b32.xlu0 %v902, 48
        %v944 = vpop.permute.xlu0 %943
        %945 = vrot.lane.b32.xlu0 %v903, 48
        %v946 = vpop.permute.xlu0 %945
        %947 = vrot.lane.b32.xlu0 %v904, 48
        %v948 = vpop.permute.xlu0 %947
        %949 = vrot.lane.b32.xlu0 %v905, 48
        %v950 = vpop.permute.xlu0 %949
        %951 = vrot.lane.b32.xlu0 %v906, 48
        %v952 = vpop.permute.xlu0 %951
        %953 = vrot.lane.b32.xlu0 %v907, 48
        %v954 = vpop.permute.xlu0 %953
        %955 = vrot.lane.b32.xlu0 %v908, 48
        %v956 = vpop.permute.xlu0 %955
        %vm973 = vcmask 458112
        %974 = vst.msk [vmem:[#allocation3] sm:$0xff] %vm973, %v926
        %975 = vst.msk [vmem:[#allocation3 + $0x8] sm:$0xff] %vm973, %v928
        %976 = vst.msk [vmem:[#allocation3 + $0x10] sm:$0xff] %vm973, %v930
        %977 = vst.msk [vmem:[#allocation3 + $0x18] sm:$0xff] %vm973, %v932
        %978 = vst.msk [vmem:[#allocation3 + $0x20] sm:$0xff] %vm973, %v934
        %979 = vst.msk [vmem:[#allocation3 + $0x28] sm:$0xff] %vm973, %v936
        %980 = vst.msk [vmem:[#allocation3 + $0x30] sm:$0xff] %vm973, %v938
        %981 = vst.msk [vmem:[#allocation3 + $0x38] sm:$0xff] %vm973, %v940
        %982 = vst.msk [vmem:[#allocation3 + $0x40] sm:$0xff] %vm973, %v942
        %983 = vst.msk [vmem:[#allocation3 + $0x48] sm:$0xff] %vm973, %v944
        %984 = vst.msk [vmem:[#allocation3 + $0x50] sm:$0xff] %vm973, %v946
        %985 = vst.msk [vmem:[#allocation3 + $0x58] sm:$0xff] %vm973, %v948
        %986 = vst.msk [vmem:[#allocation3 + $0x60] sm:$0xff] %vm973, %v950
        %987 = vst.msk [vmem:[#allocation3 + $0x68] sm:$0xff] %vm973, %v952
        %988 = vst.msk [vmem:[#allocation3 + $0x70] sm:$0xff] %vm973, %v954
        %989 = vst.msk [vmem:[#allocation3 + $0x78] sm:$0xff] %vm973, %v956
        %v990 = vld [vmem:[%s892 + $0x1] sm:$0xff]
        %v991 = vld [vmem:[%s892 + $0x11] sm:$0xff]
        %v992 = vld [vmem:[%s892 + $0x21] sm:$0xff]
        %v993 = vld [vmem:[%s892 + $0x31] sm:$0xff]
        %v994 = vld [vmem:[%s892 + $0x41] sm:$0xff]
        %v995 = vld [vmem:[%s892 + $0x51] sm:$0xff]
        %v996 = vld [vmem:[%s892 + $0x61] sm:$0xff]
        %v997 = vld [vmem:[%s892 + $0x71] sm:$0xff]
        %v998 = vld [vmem:[%s892 + $0x81] sm:$0xff]
        %v999 = vld [vmem:[%s892 + $0x91] sm:$0xff]
        %v1000 = vld [vmem:[%s892 + $0xa1] sm:$0xff]
        %v1001 = vld [vmem:[%s892 + $0xb1] sm:$0xff]
        %v1002 = vld [vmem:[%s892 + $0xc1] sm:$0xff]
        %v1003 = vld [vmem:[%s892 + $0xd1] sm:$0xff]
        %v1004 = vld [vmem:[%s892 + $0xe1] sm:$0xff]
        %v1005 = vld [vmem:[%s892 + $0xf1] sm:$0xff]
        %1022 = vrot.lane.b32.xlu0 %v990, 56
        %v1023 = vpop.permute.xlu0 %1022
        %1024 = vrot.lane.b32.xlu0 %v991, 56
        %v1025 = vpop.permute.xlu0 %1024
        %1026 = vrot.lane.b32.xlu0 %v992, 56
        %v1027 = vpop.permute.xlu0 %1026
        %1028 = vrot.lane.b32.xlu0 %v993, 56
        %v1029 = vpop.permute.xlu0 %1028
        %1030 = vrot.lane.b32.xlu0 %v994, 56
        %v1031 = vpop.permute.xlu0 %1030
        %1032 = vrot.lane.b32.xlu0 %v995, 56
        %v1033 = vpop.permute.xlu0 %1032
        %1034 = vrot.lane.b32.xlu0 %v996, 56
        %v1035 = vpop.permute.xlu0 %1034
        %1036 = vrot.lane.b32.xlu0 %v997, 56
        %v1037 = vpop.permute.xlu0 %1036
        %1038 = vrot.lane.b32.xlu0 %v998, 56
        %v1039 = vpop.permute.xlu0 %1038
        %1040 = vrot.lane.b32.xlu0 %v999, 56
        %v1041 = vpop.permute.xlu0 %1040
        %1042 = vrot.lane.b32.xlu0 %v1000, 56
        %v1043 = vpop.permute.xlu0 %1042
        %1044 = vrot.lane.b32.xlu0 %v1001, 56
        %v1045 = vpop.permute.xlu0 %1044
        %1046 = vrot.lane.b32.xlu0 %v1002, 56
        %v1047 = vpop.permute.xlu0 %1046
        %1048 = vrot.lane.b32.xlu0 %v1003, 56
        %v1049 = vpop.permute.xlu0 %1048
        %1050 = vrot.lane.b32.xlu0 %v1004, 56
        %v1051 = vpop.permute.xlu0 %1050
        %1052 = vrot.lane.b32.xlu0 %v1005, 56
        %v1053 = vpop.permute.xlu0 %1052
        %vm1070 = vcmask 523712
        %1071 = vst.msk [vmem:[#allocation3] sm:$0xff] %vm1070, %v1023
        %1072 = vst.msk [vmem:[#allocation3 + $0x8] sm:$0xff] %vm1070, %v1025
        %1073 = vst.msk [vmem:[#allocation3 + $0x10] sm:$0xff] %vm1070, %v1027
        %1074 = vst.msk [vmem:[#allocation3 + $0x18] sm:$0xff] %vm1070, %v1029
        %1075 = vst.msk [vmem:[#allocation3 + $0x20] sm:$0xff] %vm1070, %v1031
        %1076 = vst.msk [vmem:[#allocation3 + $0x28] sm:$0xff] %vm1070, %v1033
        %1077 = vst.msk [vmem:[#allocation3 + $0x30] sm:$0xff] %vm1070, %v1035
        %1078 = vst.msk [vmem:[#allocation3 + $0x38] sm:$0xff] %vm1070, %v1037
        %1079 = vst.msk [vmem:[#allocation3 + $0x40] sm:$0xff] %vm1070, %v1039
        %1080 = vst.msk [vmem:[#allocation3 + $0x48] sm:$0xff] %vm1070, %v1041
        %1081 = vst.msk [vmem:[#allocation3 + $0x50] sm:$0xff] %vm1070, %v1043
        %1082 = vst.msk [vmem:[#allocation3 + $0x58] sm:$0xff] %vm1070, %v1045
        %1083 = vst.msk [vmem:[#allocation3 + $0x60] sm:$0xff] %vm1070, %v1047
        %1084 = vst.msk [vmem:[#allocation3 + $0x68] sm:$0xff] %vm1070, %v1049
        %1085 = vst.msk [vmem:[#allocation3 + $0x70] sm:$0xff] %vm1070, %v1051
        %1086 = vst.msk [vmem:[#allocation3 + $0x78] sm:$0xff] %vm1070, %v1053
        %v1087 = vld [vmem:[%s892 + $0x2] sm:$0xff]
        %v1088 = vld [vmem:[%s892 + $0x12] sm:$0xff]
        %v1089 = vld [vmem:[%s892 + $0x22] sm:$0xff]
        %v1090 = vld [vmem:[%s892 + $0x32] sm:$0xff]
        %v1091 = vld [vmem:[%s892 + $0x42] sm:$0xff]
        %v1092 = vld [vmem:[%s892 + $0x52] sm:$0xff]
        %v1093 = vld [vmem:[%s892 + $0x62] sm:$0xff]
        %v1094 = vld [vmem:[%s892 + $0x72] sm:$0xff]
        %v1095 = vld [vmem:[%s892 + $0x82] sm:$0xff]
        %v1096 = vld [vmem:[%s892 + $0x92] sm:$0xff]
        %v1097 = vld [vmem:[%s892 + $0xa2] sm:$0xff]
        %v1098 = vld [vmem:[%s892 + $0xb2] sm:$0xff]
        %v1099 = vld [vmem:[%s892 + $0xc2] sm:$0xff]
        %v1100 = vld [vmem:[%s892 + $0xd2] sm:$0xff]
        %v1101 = vld [vmem:[%s892 + $0xe2] sm:$0xff]
        %v1102 = vld [vmem:[%s892 + $0xf2] sm:$0xff]
        %1119 = vrot.lane.b32.xlu0 %v1087, 64
        %v1120 = vpop.permute.xlu0 %1119
        %1121 = vrot.lane.b32.xlu0 %v1088, 64
        %v1122 = vpop.permute.xlu0 %1121
        %1123 = vrot.lane.b32.xlu0 %v1089, 64
        %v1124 = vpop.permute.xlu0 %1123
        %1125 = vrot.lane.b32.xlu0 %v1090, 64
        %v1126 = vpop.permute.xlu0 %1125
        %1127 = vrot.lane.b32.xlu0 %v1091, 64
        %v1128 = vpop.permute.xlu0 %1127
        %1129 = vrot.lane.b32.xlu0 %v1092, 64
        %v1130 = vpop.permute.xlu0 %1129
        %1131 = vrot.lane.b32.xlu0 %v1093, 64
        %v1132 = vpop.permute.xlu0 %1131
        %1133 = vrot.lane.b32.xlu0 %v1094, 64
        %v1134 = vpop.permute.xlu0 %1133
        %1135 = vrot.lane.b32.xlu0 %v1095, 64
        %v1136 = vpop.permute.xlu0 %1135
        %1137 = vrot.lane.b32.xlu0 %v1096, 64
        %v1138 = vpop.permute.xlu0 %1137
        %1139 = vrot.lane.b32.xlu0 %v1097, 64
        %v1140 = vpop.permute.xlu0 %1139
        %1141 = vrot.lane.b32.xlu0 %v1098, 64
        %v1142 = vpop.permute.xlu0 %1141
        %1143 = vrot.lane.b32.xlu0 %v1099, 64
        %v1144 = vpop.permute.xlu0 %1143
        %1145 = vrot.lane.b32.xlu0 %v1100, 64
        %v1146 = vpop.permute.xlu0 %1145
        %1147 = vrot.lane.b32.xlu0 %v1101, 64
        %v1148 = vpop.permute.xlu0 %1147
        %1149 = vrot.lane.b32.xlu0 %v1102, 64
        %v1150 = vpop.permute.xlu0 %1149
        %vm1167 = vcmask 589312
        %1168 = vst.msk [vmem:[#allocation3] sm:$0xff] %vm1167, %v1120
        %1169 = vst.msk [vmem:[#allocation3 + $0x8] sm:$0xff] %vm1167, %v1122
        %1170 = vst.msk [vmem:[#allocation3 + $0x10] sm:$0xff] %vm1167, %v1124
        %1171 = vst.msk [vmem:[#allocation3 + $0x18] sm:$0xff] %vm1167, %v1126
        %1172 = vst.msk [vmem:[#allocation3 + $0x20] sm:$0xff] %vm1167, %v1128
        %1173 = vst.msk [vmem:[#allocation3 + $0x28] sm:$0xff] %vm1167, %v1130
        %1174 = vst.msk [vmem:[#allocation3 + $0x30] sm:$0xff] %vm1167, %v1132
        %1175 = vst.msk [vmem:[#allocation3 + $0x38] sm:$0xff] %vm1167, %v1134
        %1176 = vst.msk [vmem:[#allocation3 + $0x40] sm:$0xff] %vm1167, %v1136
        %1177 = vst.msk [vmem:[#allocation3 + $0x48] sm:$0xff] %vm1167, %v1138
        %1178 = vst.msk [vmem:[#allocation3 + $0x50] sm:$0xff] %vm1167, %v1140
        %1179 = vst.msk [vmem:[#allocation3 + $0x58] sm:$0xff] %vm1167, %v1142
        %1180 = vst.msk [vmem:[#allocation3 + $0x60] sm:$0xff] %vm1167, %v1144
        %1181 = vst.msk [vmem:[#allocation3 + $0x68] sm:$0xff] %vm1167, %v1146
        %1182 = vst.msk [vmem:[#allocation3 + $0x70] sm:$0xff] %vm1167, %v1148
        %1183 = vst.msk [vmem:[#allocation3 + $0x78] sm:$0xff] %vm1167, %v1150
        %v1184 = vld [vmem:[#allocation3] sm:$0xff]
        %v1185 = vld [vmem:[#allocation3 + $0x8] sm:$0xff]
        %v1186 = vld [vmem:[#allocation3 + $0x10] sm:$0xff]
        %v1187 = vld [vmem:[#allocation3 + $0x18] sm:$0xff]
        %v1188 = vld [vmem:[#allocation3 + $0x20] sm:$0xff]
        %v1189 = vld [vmem:[#allocation3 + $0x28] sm:$0xff]
        %v1190 = vld [vmem:[#allocation3 + $0x30] sm:$0xff]
        %v1191 = vld [vmem:[#allocation3 + $0x38] sm:$0xff]
        %v1192 = vld [vmem:[#allocation3 + $0x40] sm:$0xff]
        %v1193 = vld [vmem:[#allocation3 + $0x48] sm:$0xff]
        %v1194 = vld [vmem:[#allocation3 + $0x50] sm:$0xff]
        %v1195 = vld [vmem:[#allocation3 + $0x58] sm:$0xff]
        %v1196 = vld [vmem:[#allocation3 + $0x60] sm:$0xff]
        %v1197 = vld [vmem:[#allocation3 + $0x68] sm:$0xff]
        %v1198 = vld [vmem:[#allocation3 + $0x70] sm:$0xff]
        %v1199 = vld [vmem:[#allocation3 + $0x78] sm:$0xff]
        %v1200 = vld [vmem:[%s1] sm:$0xff]
        %v1201 = vld [vmem:[%s1 + $0x8] sm:$0xff]
        %v1202 = vld [vmem:[%s1 + $0x10] sm:$0xff]
        %v1203 = vld [vmem:[%s1 + $0x18] sm:$0xff]
        %v1204 = vld [vmem:[%s1 + $0x20] sm:$0xff]
        %v1205 = vld [vmem:[%s1 + $0x28] sm:$0xff]
        %v1206 = vld [vmem:[%s1 + $0x30] sm:$0xff]
        %v1207 = vld [vmem:[%s1 + $0x38] sm:$0xff]
        %v1208 = vld [vmem:[%s1 + $0x40] sm:$0xff]
        %vm1209 = vcmask 588800
        %v1211 = vsel %vm1209, %v1184, 0
        %v1214 = vsel %vm1209, %v1185, 0
        %v1217 = vsel %vm1209, %v1186, 0
        %v1220 = vsel %vm1209, %v1187, 0
        %v1223 = vsel %vm1209, %v1188, 0
        %v1226 = vsel %vm1209, %v1189, 0
        %v1229 = vsel %vm1209, %v1190, 0
        %v1232 = vsel %vm1209, %v1191, 0
        %v1235 = vsel %vm1209, %v1192, 0
        %v1238 = vsel %vm1209, %v1193, 0
        %v1241 = vsel %vm1209, %v1194, 0
        %v1244 = vsel %vm1209, %v1195, 0
        %v1247 = vsel %vm1209, %v1196, 0
        %v1250 = vsel %vm1209, %v1197, 0
        %v1253 = vsel %vm1209, %v1198, 0
        %v1256 = vsel %vm1209, %v1199, 0
        %1258 = vmatprep.subr.mxu0 0.0
        %1259 = vmatpush1.msra.mxu0 0.0
        %1260 = vmatprep.subr.mxu0 0.0
        %1261 = vmatpush1.msra.mxu0 0.0
        %1262 = vmatprep.subr.mxu0 0.0
        %1263 = vmatpush1.msra.mxu0 0.0
        %1264 = vmatprep.subr.mxu0 0.0
        %1265 = vmatpush1.msra.mxu0 0.0
        %1266 = vmatprep.subr.mxu0 0.0
        %1267 = vmatpush1.msra.mxu0 0.0
        %1268 = vmatprep.subr.mxu0 0.0
        %1269 = vmatpush1.msra.mxu0 0.0
        %1270 = vmatprep.subr.mxu0 0.0
        %1271 = vmatpush1.msra.mxu0 0.0
        %1272 = vmatprep.subr.mxu0 0.0
        %1273 = vmatpush1.msra.mxu0 %v1208
        %1274 = vmatprep.subr.mxu0 0.0
        %1275 = vmatpush1.msra.mxu0 %v1207
        %1276 = vmatprep.subr.mxu0 0.0
        %1277 = vmatpush1.msra.mxu0 %v1206
        %1278 = vmatprep.subr.mxu0 0.0
        %1279 = vmatpush1.msra.mxu0 %v1205
        %1280 = vmatprep.subr.mxu0 0.0
        %1281 = vmatpush1.msra.mxu0 %v1204
        %1282 = vmatprep.subr.mxu0 0.0
        %1283 = vmatpush1.msra.mxu0 %v1203
        %1284 = vmatprep.subr.mxu0 0.0
        %1285 = vmatpush1.msra.mxu0 %v1202
        %1286 = vmatprep.subr.mxu0 0.0
        %1287 = vmatpush1.msra.mxu0 %v1201
        %1288 = vmatprep.subr.mxu0 0.0
        %1289 = vmatpush1.msra.mxu0 %v1200
        %1290 = vmatprep.subr.mxu0 0.0
        %1291 = vmatpush2.msra.mxu0 0.0
        %1292 = vmatprep.subr.mxu0 0.0
        %1293 = vmatpush2.msra.mxu0 0.0
        %1294 = vmatprep.subr.mxu0 0.0
        %1295 = vmatpush2.msra.mxu0 0.0
        %1296 = vmatprep.subr.mxu0 0.0
        %1297 = vmatpush2.msra.mxu0 0.0
        %1298 = vmatprep.subr.mxu0 0.0
        %1299 = vmatpush2.msra.mxu0 0.0
        %1300 = vmatprep.subr.mxu0 0.0
        %1301 = vmatpush2.msra.mxu0 0.0
        %1302 = vmatprep.subr.mxu0 0.0
        %1303 = vmatpush2.msra.mxu0 0.0
        %1304 = vmatprep.subr.mxu0 0.0
        %1305 = vmatpush2.msra.mxu0 0.0
        %1306 = vmatprep.subr.mxu0 0.0
        %1307 = vmatpush2.msra.mxu0 0.0
        %1308 = vmatprep.subr.mxu0 0.0
        %1309 = vmatpush2.msra.mxu0 0.0
        %1310 = vmatprep.subr.mxu0 0.0
        %1311 = vmatpush2.msra.mxu0 0.0
        %1312 = vmatprep.subr.mxu0 0.0
        %1313 = vmatpush2.msra.mxu0 0.0
        %1314 = vmatprep.subr.mxu0 0.0
        %1315 = vmatpush2.msra.mxu0 0.0
        %1316 = vmatprep.subr.mxu0 0.0
        %1317 = vmatpush2.msra.mxu0 0.0
        %1318 = vmatprep.subr.mxu0 0.0
        %1319 = vmatpush2.msra.mxu0 0.0
        %1320 = vmatprep.subr.mxu0 0.0
        %1321 = vmatpush2.msra.mxu0 0.0
        %1322 = vmatprep.mubr.f32.mxu0 0.0
        %1323 = vmatmul.mubr.f32.gmra.mxu0 %v1211
        %v1324 = vpop.f32.mrf.mxu0
        %v1325 = vadd.f32 0.0, %v1324
        %v1326 = vpop.f32.mrf.mxu0
        %1327 = vmatprep.mubr.f32.mxu0 0.0
        %1328 = vmatmul.mubr.f32.gmra.mxu0 %v1214
        %v1329 = vpop.f32.mrf.mxu0
        %v1330 = vadd.f32 0.0, %v1329
        %v1331 = vpop.f32.mrf.mxu0
        %1332 = vmatprep.mubr.f32.mxu0 0.0
        %1333 = vmatmul.mubr.f32.gmra.mxu0 %v1217
        %v1334 = vpop.f32.mrf.mxu0
        %v1335 = vadd.f32 0.0, %v1334
        %v1336 = vpop.f32.mrf.mxu0
        %1337 = vmatprep.mubr.f32.mxu0 0.0
        %1338 = vmatmul.mubr.f32.gmra.mxu0 %v1220
        %v1339 = vpop.f32.mrf.mxu0
        %v1340 = vadd.f32 0.0, %v1339
        %v1341 = vpop.f32.mrf.mxu0
        %1342 = vmatprep.mubr.f32.mxu0 0.0
        %1343 = vmatmul.mubr.f32.gmra.mxu0 %v1223
        %v1344 = vpop.f32.mrf.mxu0
        %v1345 = vadd.f32 0.0, %v1344
        %v1346 = vpop.f32.mrf.mxu0
        %1347 = vmatprep.mubr.f32.mxu0 0.0
        %1348 = vmatmul.mubr.f32.gmra.mxu0 %v1226
        %v1349 = vpop.f32.mrf.mxu0
        %v1350 = vadd.f32 0.0, %v1349
        %v1351 = vpop.f32.mrf.mxu0
        %1352 = vmatprep.mubr.f32.mxu0 0.0
        %1353 = vmatmul.mubr.f32.gmra.mxu0 %v1229
        %v1354 = vpop.f32.mrf.mxu0
        %v1355 = vadd.f32 0.0, %v1354
        %v1356 = vpop.f32.mrf.mxu0
        %1357 = vmatprep.mubr.f32.mxu0 0.0
        %1358 = vmatmul.mubr.f32.gmra.mxu0 %v1232
        %v1359 = vpop.f32.mrf.mxu0
        %v1360 = vadd.f32 0.0, %v1359
        %v1361 = vpop.f32.mrf.mxu0
        %1362 = vmatprep.mubr.f32.mxu0 0.0
        %1363 = vmatmul.mubr.f32.gmra.mxu0 %v1235
        %v1364 = vpop.f32.mrf.mxu0
        %v1365 = vadd.f32 0.0, %v1364
        %v1366 = vpop.f32.mrf.mxu0
        %1367 = vmatprep.mubr.f32.mxu0 0.0
        %1368 = vmatmul.mubr.f32.gmra.mxu0 %v1238
        %v1369 = vpop.f32.mrf.mxu0
        %v1370 = vadd.f32 0.0, %v1369
        %v1371 = vpop.f32.mrf.mxu0
        %1372 = vmatprep.mubr.f32.mxu0 0.0
        %1373 = vmatmul.mubr.f32.gmra.mxu0 %v1241
        %v1374 = vpop.f32.mrf.mxu0
        %v1375 = vadd.f32 0.0, %v1374
        %v1376 = vpop.f32.mrf.mxu0
        %1377 = vmatprep.mubr.f32.mxu0 0.0
        %1378 = vmatmul.mubr.f32.gmra.mxu0 %v1244
        %v1379 = vpop.f32.mrf.mxu0
        %v1380 = vadd.f32 0.0, %v1379
        %v1381 = vpop.f32.mrf.mxu0
        %1382 = vmatprep.mubr.f32.mxu0 0.0
        %1383 = vmatmul.mubr.f32.gmra.mxu0 %v1247
        %v1384 = vpop.f32.mrf.mxu0
        %v1385 = vadd.f32 0.0, %v1384
        %v1386 = vpop.f32.mrf.mxu0
        %1387 = vmatprep.mubr.f32.mxu0 0.0
        %1388 = vmatmul.mubr.f32.gmra.mxu0 %v1250
        %v1389 = vpop.f32.mrf.mxu0
        %v1390 = vadd.f32 0.0, %v1389
        %v1391 = vpop.f32.mrf.mxu0
        %1392 = vmatprep.mubr.f32.mxu0 0.0
        %1393 = vmatmul.mubr.f32.gmra.mxu0 %v1253
        %v1394 = vpop.f32.mrf.mxu0
        %v1395 = vadd.f32 0.0, %v1394
        %v1396 = vpop.f32.mrf.mxu0
        %1397 = vmatprep.mubr.f32.mxu0 0.0
        %1398 = vmatmul.mubr.f32.gmra.mxu0 %v1256
        %v1399 = vpop.f32.mrf.mxu0
        %v1400 = vadd.f32 0.0, %v1399
        %v1401 = vpop.f32.mrf.mxu0
        %1402 = vdwg.mxu0
        %v1403 = vld [vmem:[%s4] sm:$0x1]
        %v1404 = vlaneseq
        %v1405 = vshrl.u32 %v1404, 7
        %v1406 = vsub.s32 0, %v1405
        %v1407 = vrot.slane %v1403, %v1406
        %v1408 = vmul.f32 %v1325, %v1407
        %v1409 = vmul.f32 %v1330, %v1407
        %v1410 = vmul.f32 %v1335, %v1407
        %v1411 = vmul.f32 %v1340, %v1407
        %v1412 = vmul.f32 %v1345, %v1407
        %v1413 = vmul.f32 %v1350, %v1407
        %v1414 = vmul.f32 %v1355, %v1407
        %v1415 = vmul.f32 %v1360, %v1407
        %v1416 = vmul.f32 %v1365, %v1407
        %v1417 = vmul.f32 %v1370, %v1407
        %v1418 = vmul.f32 %v1375, %v1407
        %v1419 = vmul.f32 %v1380, %v1407
        %v1420 = vmul.f32 %v1385, %v1407
        %v1421 = vmul.f32 %v1390, %v1407
        %v1422 = vmul.f32 %v1395, %v1407
        %v1423 = vmul.f32 %v1400, %v1407
        %v1424 = vld [vmem:[%s4 + $0x1] sm:$0x1]
        %v1425 = vlaneseq
        %v1426 = vshrl.u32 %v1425, 7
        %v1427 = vsub.s32 0, %v1426
        %v1428 = vrot.slane %v1424, %v1427
        %v1429 = vadd.f32 %v1408, %v1428
        %v1430 = vadd.f32 %v1409, %v1428
        %v1431 = vadd.f32 %v1410, %v1428
        %v1432 = vadd.f32 %v1411, %v1428
        %v1433 = vadd.f32 %v1412, %v1428
        %v1434 = vadd.f32 %v1413, %v1428
        %v1435 = vadd.f32 %v1414, %v1428
        %v1436 = vadd.f32 %v1415, %v1428
        %v1437 = vadd.f32 %v1416, %v1428
        %v1438 = vadd.f32 %v1417, %v1428
        %v1439 = vadd.f32 %v1418, %v1428
        %v1440 = vadd.f32 %v1419, %v1428
        %v1441 = vadd.f32 %v1420, %v1428
        %v1442 = vadd.f32 %v1421, %v1428
        %v1443 = vadd.f32 %v1422, %v1428
        %v1444 = vadd.f32 %v1423, %v1428
        %v1445 = vmax.f32 %v1429, 0.0
        %v1446 = vmax.f32 %v1430, 0.0
        %v1447 = vmax.f32 %v1431, 0.0
        %v1448 = vmax.f32 %v1432, 0.0
        %v1449 = vmax.f32 %v1433, 0.0
        %v1450 = vmax.f32 %v1434, 0.0
        %v1451 = vmax.f32 %v1435, 0.0
        %v1452 = vmax.f32 %v1436, 0.0
        %v1453 = vmax.f32 %v1437, 0.0
        %v1454 = vmax.f32 %v1438, 0.0
        %v1455 = vmax.f32 %v1439, 0.0
        %v1456 = vmax.f32 %v1440, 0.0
        %v1457 = vmax.f32 %v1441, 0.0
        %v1458 = vmax.f32 %v1442, 0.0
        %v1459 = vmax.f32 %v1443, 0.0
        %v1460 = vmax.f32 %v1444, 0.0
        %v1461 = vld [vmem:[%s5] sm:$0xff]
        %v1462 = vld [vmem:[%s5 + $0x8] sm:$0xff]
        %v1463 = vld [vmem:[%s5 + $0x10] sm:$0xff]
        %v1464 = vld [vmem:[%s5 + $0x18] sm:$0xff]
        %1465 = vmatprep.subr.mxu0 0.0
        %1466 = vmatpush1.msra.mxu0 %v1460
        %1467 = vmatprep.subr.mxu0 0.0
        %1468 = vmatpush1.msra.mxu0 %v1459
        %1469 = vmatprep.subr.mxu0 0.0
        %1470 = vmatpush1.msra.mxu0 %v1458
        %1471 = vmatprep.subr.mxu0 0.0
        %1472 = vmatpush1.msra.mxu0 %v1457
        %1473 = vmatprep.subr.mxu0 0.0
        %1474 = vmatpush1.msra.mxu0 %v1456
        %1475 = vmatprep.subr.mxu0 0.0
        %1476 = vmatpush1.msra.mxu0 %v1455
        %1477 = vmatprep.subr.mxu0 0.0
        %1478 = vmatpush1.msra.mxu0 %v1454
        %1479 = vmatprep.subr.mxu0 0.0
        %1480 = vmatpush1.msra.mxu0 %v1453
        %1481 = vmatprep.subr.mxu0 0.0
        %1482 = vmatpush1.msra.mxu0 %v1452
        %1483 = vmatprep.subr.mxu0 0.0
        %1484 = vmatpush1.msra.mxu0 %v1451
        %1485 = vmatprep.subr.mxu0 0.0
        %1486 = vmatpush1.msra.mxu0 %v1450
        %1487 = vmatprep.subr.mxu0 0.0
        %1488 = vmatpush1.msra.mxu0 %v1449
        %1489 = vmatprep.subr.mxu0 0.0
        %1490 = vmatpush1.msra.mxu0 %v1448
        %1491 = vmatprep.subr.mxu0 0.0
        %1492 = vmatpush1.msra.mxu0 %v1447
        %1493 = vmatprep.subr.mxu0 0.0
        %1494 = vmatpush1.msra.mxu0 %v1446
        %1495 = vmatprep.subr.mxu0 0.0
        %1496 = vmatpush1.msra.mxu0 %v1445
        %1497 = vmatprep.subr.mxu0 0.0
        %1498 = vmatpush2.msra.mxu0 0.0
        %1499 = vmatprep.subr.mxu0 0.0
        %1500 = vmatpush2.msra.mxu0 0.0
        %1501 = vmatprep.subr.mxu0 0.0
        %1502 = vmatpush2.msra.mxu0 0.0
        %1503 = vmatprep.subr.mxu0 0.0
        %1504 = vmatpush2.msra.mxu0 0.0
        %1505 = vmatprep.subr.mxu0 0.0
        %1506 = vmatpush2.msra.mxu0 0.0
        %1507 = vmatprep.subr.mxu0 0.0
        %1508 = vmatpush2.msra.mxu0 0.0
        %1509 = vmatprep.subr.mxu0 0.0
        %1510 = vmatpush2.msra.mxu0 0.0
        %1511 = vmatprep.subr.mxu0 0.0
        %1512 = vmatpush2.msra.mxu0 0.0
        %1513 = vmatprep.subr.mxu0 0.0
        %1514 = vmatpush2.msra.mxu0 0.0
        %1515 = vmatprep.subr.mxu0 0.0
        %1516 = vmatpush2.msra.mxu0 0.0
        %1517 = vmatprep.subr.mxu0 0.0
        %1518 = vmatpush2.msra.mxu0 0.0
        %1519 = vmatprep.subr.mxu0 0.0
        %1520 = vmatpush2.msra.mxu0 0.0
        %1521 = vmatprep.subr.mxu0 0.0
        %1522 = vmatpush2.msra.mxu0 0.0
        %1523 = vmatprep.subr.mxu0 0.0
        %1524 = vmatpush2.msra.mxu0 0.0
        %1525 = vmatprep.subr.mxu0 0.0
        %1526 = vmatpush2.msra.mxu0 0.0
        %1527 = vmatprep.subr.mxu0 0.0
        %1528 = vmatpush2.msra.mxu0 0.0
        %1529 = vmatprep.mubr.f32.mxu0 0.0
        %1530 = vmatmul.mubr.f32.gmra.mxu0 %v1461
        %v1531 = vpop.f32.mrf.mxu0
        %v1532 = vadd.f32 0.0, %v1531
        %v1533 = vpop.f32.mrf.mxu0
        %1534 = vmatprep.mubr.f32.mxu0 0.0
        %1535 = vmatmul.mubr.f32.gmra.mxu0 %v1462
        %v1536 = vpop.f32.mrf.mxu0
        %v1537 = vadd.f32 0.0, %v1536
        %v1538 = vpop.f32.mrf.mxu0
        %1539 = vmatprep.mubr.f32.mxu0 0.0
        %1540 = vmatmul.mubr.f32.gmra.mxu0 %v1463
        %v1541 = vpop.f32.mrf.mxu0
        %v1542 = vadd.f32 0.0, %v1541
        %v1543 = vpop.f32.mrf.mxu0
        %1544 = vmatprep.mubr.f32.mxu0 0.0
        %1545 = vmatmul.mubr.f32.gmra.mxu0 %v1464
        %v1546 = vpop.f32.mrf.mxu0
        %v1547 = vadd.f32 0.0, %v1546
        %v1548 = vpop.f32.mrf.mxu0
        %1549 = vdwg.mxu0
        %s1550 = scalar_lea.vmem %s5, 32
        %v1551 = vld [vmem:[%s1550] sm:$0xff]
        %v1552 = vld [vmem:[%s1550 + $0x8] sm:$0xff]
        %v1553 = vld [vmem:[%s1550 + $0x10] sm:$0xff]
        %v1554 = vld [vmem:[%s1550 + $0x18] sm:$0xff]
        %1555 = vmatprep.subr.mxu0 0.0
        %1556 = vmatpush1.msra.mxu0 %v1460
        %1557 = vmatprep.subr.mxu0 0.0
        %1558 = vmatpush1.msra.mxu0 %v1459
        %1559 = vmatprep.subr.mxu0 0.0
        %1560 = vmatpush1.msra.mxu0 %v1458
        %1561 = vmatprep.subr.mxu0 0.0
        %1562 = vmatpush1.msra.mxu0 %v1457
        %1563 = vmatprep.subr.mxu0 0.0
        %1564 = vmatpush1.msra.mxu0 %v1456
        %1565 = vmatprep.subr.mxu0 0.0
        %1566 = vmatpush1.msra.mxu0 %v1455
        %1567 = vmatprep.subr.mxu0 0.0
        %1568 = vmatpush1.msra.mxu0 %v1454
        %1569 = vmatprep.subr.mxu0 0.0
        %1570 = vmatpush1.msra.mxu0 %v1453
        %1571 = vmatprep.subr.mxu0 0.0
        %1572 = vmatpush1.msra.mxu0 %v1452
        %1573 = vmatprep.subr.mxu0 0.0
        %1574 = vmatpush1.msra.mxu0 %v1451
        %1575 = vmatprep.subr.mxu0 0.0
        %1576 = vmatpush1.msra.mxu0 %v1450
        %1577 = vmatprep.subr.mxu0 0.0
        %1578 = vmatpush1.msra.mxu0 %v1449
        %1579 = vmatprep.subr.mxu0 0.0
        %1580 = vmatpush1.msra.mxu0 %v1448
        %1581 = vmatprep.subr.mxu0 0.0
        %1582 = vmatpush1.msra.mxu0 %v1447
        %1583 = vmatprep.subr.mxu0 0.0
        %1584 = vmatpush1.msra.mxu0 %v1446
        %1585 = vmatprep.subr.mxu0 0.0
        %1586 = vmatpush1.msra.mxu0 %v1445
        %1587 = vmatprep.subr.mxu0 0.0
        %1588 = vmatpush2.msra.mxu0 0.0
        %1589 = vmatprep.subr.mxu0 0.0
        %1590 = vmatpush2.msra.mxu0 0.0
        %1591 = vmatprep.subr.mxu0 0.0
        %1592 = vmatpush2.msra.mxu0 0.0
        %1593 = vmatprep.subr.mxu0 0.0
        %1594 = vmatpush2.msra.mxu0 0.0
        %1595 = vmatprep.subr.mxu0 0.0
        %1596 = vmatpush2.msra.mxu0 0.0
        %1597 = vmatprep.subr.mxu0 0.0
        %1598 = vmatpush2.msra.mxu0 0.0
        %1599 = vmatprep.subr.mxu0 0.0
        %1600 = vmatpush2.msra.mxu0 0.0
        %1601 = vmatprep.subr.mxu0 0.0
        %1602 = vmatpush2.msra.mxu0 0.0
        %1603 = vmatprep.subr.mxu0 0.0
        %1604 = vmatpush2.msra.mxu0 0.0
        %1605 = vmatprep.subr.mxu0 0.0
        %1606 = vmatpush2.msra.mxu0 0.0
        %1607 = vmatprep.subr.mxu0 0.0
        %1608 = vmatpush2.msra.mxu0 0.0
        %1609 = vmatprep.subr.mxu0 0.0
        %1610 = vmatpush2.msra.mxu0 0.0
        %1611 = vmatprep.subr.mxu0 0.0
        %1612 = vmatpush2.msra.mxu0 0.0
        %1613 = vmatprep.subr.mxu0 0.0
        %1614 = vmatpush2.msra.mxu0 0.0
        %1615 = vmatprep.subr.mxu0 0.0
        %1616 = vmatpush2.msra.mxu0 0.0
        %1617 = vmatprep.subr.mxu0 0.0
        %1618 = vmatpush2.msra.mxu0 0.0
        %1619 = vmatprep.mubr.f32.mxu0 0.0
        %1620 = vmatmul.mubr.f32.gmra.mxu0 %v1551
        %v1621 = vpop.f32.mrf.mxu0
        %v1622 = vadd.f32 0.0, %v1621
        %v1623 = vpop.f32.mrf.mxu0
        %1624 = vmatprep.mubr.f32.mxu0 0.0
        %1625 = vmatmul.mubr.f32.gmra.mxu0 %v1552
        %v1626 = vpop.f32.mrf.mxu0
        %v1627 = vadd.f32 0.0, %v1626
        %v1628 = vpop.f32.mrf.mxu0
        %1629 = vmatprep.mubr.f32.mxu0 0.0
        %1630 = vmatmul.mubr.f32.gmra.mxu0 %v1553
        %v1631 = vpop.f32.mrf.mxu0
        %v1632 = vadd.f32 0.0, %v1631
        %v1633 = vpop.f32.mrf.mxu0
        %1634 = vmatprep.mubr.f32.mxu0 0.0
        %1635 = vmatmul.mubr.f32.gmra.mxu0 %v1554
        %v1636 = vpop.f32.mrf.mxu0
        %v1637 = vadd.f32 0.0, %v1636
        %v1638 = vpop.f32.mrf.mxu0
        %1639 = vdwg.mxu0
        %s1640 = scalar_lea.vmem %s5, 64
        %v1641 = vld [vmem:[%s1640] sm:$0xff]
        %v1642 = vld [vmem:[%s1640 + $0x8] sm:$0xff]
        %v1643 = vld [vmem:[%s1640 + $0x10] sm:$0xff]
        %v1644 = vld [vmem:[%s1640 + $0x18] sm:$0xff]
        %1645 = vmatprep.subr.mxu0 0.0
        %1646 = vmatpush1.msra.mxu0 %v1460
        %1647 = vmatprep.subr.mxu0 0.0
        %1648 = vmatpush1.msra.mxu0 %v1459
        %1649 = vmatprep.subr.mxu0 0.0
        %1650 = vmatpush1.msra.mxu0 %v1458
        %1651 = vmatprep.subr.mxu0 0.0
        %1652 = vmatpush1.msra.mxu0 %v1457
        %1653 = vmatprep.subr.mxu0 0.0
        %1654 = vmatpush1.msra.mxu0 %v1456
        %1655 = vmatprep.subr.mxu0 0.0
        %1656 = vmatpush1.msra.mxu0 %v1455
        %1657 = vmatprep.subr.mxu0 0.0
        %1658 = vmatpush1.msra.mxu0 %v1454
        %1659 = vmatprep.subr.mxu0 0.0
        %1660 = vmatpush1.msra.mxu0 %v1453
        %1661 = vmatprep.subr.mxu0 0.0
        %1662 = vmatpush1.msra.mxu0 %v1452
        %1663 = vmatprep.subr.mxu0 0.0
        %1664 = vmatpush1.msra.mxu0 %v1451
        %1665 = vmatprep.subr.mxu0 0.0
        %1666 = vmatpush1.msra.mxu0 %v1450
        %1667 = vmatprep.subr.mxu0 0.0
        %1668 = vmatpush1.msra.mxu0 %v1449
        %1669 = vmatprep.subr.mxu0 0.0
        %1670 = vmatpush1.msra.mxu0 %v1448
        %1671 = vmatprep.subr.mxu0 0.0
        %1672 = vmatpush1.msra.mxu0 %v1447
        %1673 = vmatprep.subr.mxu0 0.0
        %1674 = vmatpush1.msra.mxu0 %v1446
        %1675 = vmatprep.subr.mxu0 0.0
        %1676 = vmatpush1.msra.mxu0 %v1445
        %1677 = vmatprep.subr.mxu0 0.0
        %1678 = vmatpush2.msra.mxu0 0.0
        %1679 = vmatprep.subr.mxu0 0.0
        %1680 = vmatpush2.msra.mxu0 0.0
        %1681 = vmatprep.subr.mxu0 0.0
        %1682 = vmatpush2.msra.mxu0 0.0
        %1683 = vmatprep.subr.mxu0 0.0
        %1684 = vmatpush2.msra.mxu0 0.0
        %1685 = vmatprep.subr.mxu0 0.0
        %1686 = vmatpush2.msra.mxu0 0.0
        %1687 = vmatprep.subr.mxu0 0.0
        %1688 = vmatpush2.msra.mxu0 0.0
        %1689 = vmatprep.subr.mxu0 0.0
        %1690 = vmatpush2.msra.mxu0 0.0
        %1691 = vmatprep.subr.mxu0 0.0
        %1692 = vmatpush2.msra.mxu0 0.0
        %1693 = vmatprep.subr.mxu0 0.0
        %1694 = vmatpush2.msra.mxu0 0.0
        %1695 = vmatprep.subr.mxu0 0.0
        %1696 = vmatpush2.msra.mxu0 0.0
        %1697 = vmatprep.subr.mxu0 0.0
        %1698 = vmatpush2.msra.mxu0 0.0
        %1699 = vmatprep.subr.mxu0 0.0
        %1700 = vmatpush2.msra.mxu0 0.0
        %1701 = vmatprep.subr.mxu0 0.0
        %1702 = vmatpush2.msra.mxu0 0.0
        %1703 = vmatprep.subr.mxu0 0.0
        %1704 = vmatpush2.msra.mxu0 0.0
        %1705 = vmatprep.subr.mxu0 0.0
        %1706 = vmatpush2.msra.mxu0 0.0
        %1707 = vmatprep.subr.mxu0 0.0
        %1708 = vmatpush2.msra.mxu0 0.0
        %1709 = vmatprep.mubr.f32.mxu0 0.0
        %1710 = vmatmul.mubr.f32.gmra.mxu0 %v1641
        %v1711 = vpop.f32.mrf.mxu0
        %v1712 = vadd.f32 0.0, %v1711
        %v1713 = vpop.f32.mrf.mxu0
        %1714 = vmatprep.mubr.f32.mxu0 0.0
        %1715 = vmatmul.mubr.f32.gmra.mxu0 %v1642
        %v1716 = vpop.f32.mrf.mxu0
        %v1717 = vadd.f32 0.0, %v1716
        %v1718 = vpop.f32.mrf.mxu0
        %1719 = vmatprep.mubr.f32.mxu0 0.0
        %1720 = vmatmul.mubr.f32.gmra.mxu0 %v1643
        %v1721 = vpop.f32.mrf.mxu0
        %v1722 = vadd.f32 0.0, %v1721
        %v1723 = vpop.f32.mrf.mxu0
        %1724 = vmatprep.mubr.f32.mxu0 0.0
        %1725 = vmatmul.mubr.f32.gmra.mxu0 %v1644
        %v1726 = vpop.f32.mrf.mxu0
        %v1727 = vadd.f32 0.0, %v1726
        %v1728 = vpop.f32.mrf.mxu0
        %1729 = vdwg.mxu0
        %s1730 = scalar_lea.vmem %s5, 96
        %v1731 = vld [vmem:[%s1730] sm:$0xff]
        %v1732 = vld [vmem:[%s1730 + $0x8] sm:$0xff]
        %v1733 = vld [vmem:[%s1730 + $0x10] sm:$0xff]
        %v1734 = vld [vmem:[%s1730 + $0x18] sm:$0xff]
        %1735 = vmatprep.subr.mxu0 0.0
        %1736 = vmatpush1.msra.mxu0 %v1460
        %1737 = vmatprep.subr.mxu0 0.0
        %1738 = vmatpush1.msra.mxu0 %v1459
        %1739 = vmatprep.subr.mxu0 0.0
        %1740 = vmatpush1.msra.mxu0 %v1458
        %1741 = vmatprep.subr.mxu0 0.0
        %1742 = vmatpush1.msra.mxu0 %v1457
        %1743 = vmatprep.subr.mxu0 0.0
        %1744 = vmatpush1.msra.mxu0 %v1456
        %1745 = vmatprep.subr.mxu0 0.0
        %1746 = vmatpush1.msra.mxu0 %v1455
        %1747 = vmatprep.subr.mxu0 0.0
        %1748 = vmatpush1.msra.mxu0 %v1454
        %1749 = vmatprep.subr.mxu0 0.0
        %1750 = vmatpush1.msra.mxu0 %v1453
        %1751 = vmatprep.subr.mxu0 0.0
        %1752 = vmatpush1.msra.mxu0 %v1452
        %1753 = vmatprep.subr.mxu0 0.0
        %1754 = vmatpush1.msra.mxu0 %v1451
        %1755 = vmatprep.subr.mxu0 0.0
        %1756 = vmatpush1.msra.mxu0 %v1450
        %1757 = vmatprep.subr.mxu0 0.0
        %1758 = vmatpush1.msra.mxu0 %v1449
        %1759 = vmatprep.subr.mxu0 0.0
        %1760 = vmatpush1.msra.mxu0 %v1448
        %1761 = vmatprep.subr.mxu0 0.0
        %1762 = vmatpush1.msra.mxu0 %v1447
        %1763 = vmatprep.subr.mxu0 0.0
        %1764 = vmatpush1.msra.mxu0 %v1446
        %1765 = vmatprep.subr.mxu0 0.0
        %1766 = vmatpush1.msra.mxu0 %v1445
        %1767 = vmatprep.subr.mxu0 0.0
        %1768 = vmatpush2.msra.mxu0 0.0
        %1769 = vmatprep.subr.mxu0 0.0
        %1770 = vmatpush2.msra.mxu0 0.0
        %1771 = vmatprep.subr.mxu0 0.0
        %1772 = vmatpush2.msra.mxu0 0.0
        %1773 = vmatprep.subr.mxu0 0.0
        %1774 = vmatpush2.msra.mxu0 0.0
        %1775 = vmatprep.subr.mxu0 0.0
        %1776 = vmatpush2.msra.mxu0 0.0
        %1777 = vmatprep.subr.mxu0 0.0
        %1778 = vmatpush2.msra.mxu0 0.0
        %1779 = vmatprep.subr.mxu0 0.0
        %1780 = vmatpush2.msra.mxu0 0.0
        %1781 = vmatprep.subr.mxu0 0.0
        %1782 = vmatpush2.msra.mxu0 0.0
        %1783 = vmatprep.subr.mxu0 0.0
        %1784 = vmatpush2.msra.mxu0 0.0
        %1785 = vmatprep.subr.mxu0 0.0
        %1786 = vmatpush2.msra.mxu0 0.0
        %1787 = vmatprep.subr.mxu0 0.0
        %1788 = vmatpush2.msra.mxu0 0.0
        %1789 = vmatprep.subr.mxu0 0.0
        %1790 = vmatpush2.msra.mxu0 0.0
        %1791 = vmatprep.subr.mxu0 0.0
        %1792 = vmatpush2.msra.mxu0 0.0
        %1793 = vmatprep.subr.mxu0 0.0
        %1794 = vmatpush2.msra.mxu0 0.0
        %1795 = vmatprep.subr.mxu0 0.0
        %1796 = vmatpush2.msra.mxu0 0.0
        %1797 = vmatprep.subr.mxu0 0.0
        %1798 = vmatpush2.msra.mxu0 0.0
        %1799 = vmatprep.mubr.f32.mxu0 0.0
        %1800 = vmatmul.mubr.f32.gmra.mxu0 %v1731
        %v1801 = vpop.f32.mrf.mxu0
        %v1802 = vadd.f32 0.0, %v1801
        %v1803 = vpop.f32.mrf.mxu0
        %1804 = vmatprep.mubr.f32.mxu0 0.0
        %1805 = vmatmul.mubr.f32.gmra.mxu0 %v1732
        %v1806 = vpop.f32.mrf.mxu0
        %v1807 = vadd.f32 0.0, %v1806
        %v1808 = vpop.f32.mrf.mxu0
        %1809 = vmatprep.mubr.f32.mxu0 0.0
        %1810 = vmatmul.mubr.f32.gmra.mxu0 %v1733
        %v1811 = vpop.f32.mrf.mxu0
        %v1812 = vadd.f32 0.0, %v1811
        %v1813 = vpop.f32.mrf.mxu0
        %1814 = vmatprep.mubr.f32.mxu0 0.0
        %1815 = vmatmul.mubr.f32.gmra.mxu0 %v1734
        %v1816 = vpop.f32.mrf.mxu0
        %v1817 = vadd.f32 0.0, %v1816
        %v1818 = vpop.f32.mrf.mxu0
        %1819 = vdwg.mxu0
        %v1820 = vmax.f32 %v1532, %v1622
        %v1821 = vmax.f32 %v1537, %v1627
        %v1822 = vmax.f32 %v1542, %v1632
        %v1823 = vmax.f32 %v1547, %v1637
        %v1824 = vmax.f32 %v1712, %v1802
        %v1825 = vmax.f32 %v1717, %v1807
        %v1826 = vmax.f32 %v1722, %v1812
        %v1827 = vmax.f32 %v1727, %v1817
        %v1828 = vmax.f32 %v1820, %v1824
        %v1829 = vmax.f32 %v1821, %v1825
        %v1830 = vmax.f32 %v1822, %v1826
        %v1831 = vmax.f32 %v1823, %v1827
        %vm1832 = vcmask 521216
        %1833 = vst.msk [vmem:[#allocation4] sm:$0x3f] %vm1832, 0.0
        %1834 = vst.msk [vmem:[#allocation4 + $0x8] sm:$0x3f] %vm1832, 0.0
        %1835 = vst.msk [vmem:[#allocation4 + $0x10] sm:$0x3f] %vm1832, 0.0
        %1836 = vst.msk [vmem:[#allocation4 + $0x18] sm:$0x3f] %vm1832, 0.0
        %1837 = vst.msk [vmem:[#allocation4 + $0x20] sm:$0x3f] %vm1832, 0.0
        %1838 = vst.msk [vmem:[#allocation4 + $0x28] sm:$0x3f] %vm1832, 0.0
        %1839 = vst.msk [vmem:[#allocation4 + $0x30] sm:$0x3f] %vm1832, 0.0
        %1840 = vst.msk [vmem:[#allocation4 + $0x38] sm:$0x3f] %vm1832, 0.0
        %1841 = vst.msk [vmem:[#allocation4 + $0x40] sm:$0x3f] %vm1832, 0.0
        %1842 = vst.msk [vmem:[#allocation4 + $0x48] sm:$0x3f] %vm1832, 0.0
        %v1847 = vcombine.high %v1828, %v1828
        %v1848 = vcombine.high %v1829, %v1829
        %v1849 = vcombine.high %v1830, %v1830
        %v1850 = vcombine.high %v1831, %v1831
        %s1855 = scalar_lea.vmem [#allocation4], 8
        %vm1856 = vcmask 519168
        %1857 = vst.msk [vmem:[%s1855 + $0x1] sm:$0xf] %vm1856, %v1828
        %1858 = vst.msk [vmem:[%s1855 + $0x9] sm:$0xf] %vm1856, %v1847
        %1859 = vst.msk [vmem:[%s1855 + $0x11] sm:$0xf] %vm1856, %v1829
        %1860 = vst.msk [vmem:[%s1855 + $0x19] sm:$0xf] %vm1856, %v1848
        %1861 = vst.msk [vmem:[%s1855 + $0x21] sm:$0xf] %vm1856, %v1830
        %1862 = vst.msk [vmem:[%s1855 + $0x29] sm:$0xf] %vm1856, %v1849
        %1863 = vst.msk [vmem:[%s1855 + $0x31] sm:$0xf] %vm1856, %v1831
        %1864 = vst.msk [vmem:[%s1855 + $0x39] sm:$0xf] %vm1856, %v1850
        %v1865 = vld [vmem:[#allocation4] sm:$0xf]
        %v1866 = vld [vmem:[#allocation4 + $0x8] sm:$0xf]
        %v1867 = vld [vmem:[#allocation4 + $0x10] sm:$0xf]
        %v1868 = vld [vmem:[#allocation4 + $0x18] sm:$0xf]
        %v1869 = vld [vmem:[#allocation4 + $0x20] sm:$0xf]
        %v1870 = vld [vmem:[#allocation4 + $0x28] sm:$0xf]
        %v1871 = vld [vmem:[#allocation4 + $0x30] sm:$0xf]
        %v1872 = vld [vmem:[#allocation4 + $0x38] sm:$0xf]
        %v1881 = vcombine.low %v1865, %v1866
        %v1882 = vcombine.low %v1867, %v1868
        %v1883 = vcombine.low %v1869, %v1870
        %v1884 = vcombine.low %v1871, %v1872
        %vm1889 = vcmask 523264
        %1890 = vst.msk [vmem:[#allocation5] sm:$0xff] %vm1889, %v1881
        %1891 = vst.msk [vmem:[#allocation5 + $0x28] sm:$0xff] %vm1889, %v1882
        %1892 = vst.msk [vmem:[#allocation5 + $0x50] sm:$0xff] %vm1889, %v1883
        %1893 = vst.msk [vmem:[#allocation5 + $0x78] sm:$0xff] %vm1889, %v1884
        %v1894 = vld [vmem:[#allocation4 + $0x1] sm:$0xf]
        %v1895 = vld [vmem:[#allocation4 + $0x9] sm:$0xf]
        %v1896 = vld [vmem:[#allocation4 + $0x11] sm:$0xf]
        %v1897 = vld [vmem:[#allocation4 + $0x19] sm:$0xf]
        %v1898 = vld [vmem:[#allocation4 + $0x21] sm:$0xf]
        %v1899 = vld [vmem:[#allocation4 + $0x29] sm:$0xf]
        %v1900 = vld [vmem:[#allocation4 + $0x31] sm:$0xf]
        %v1901 = vld [vmem:[#allocation4 + $0x39] sm:$0xf]
        %v1910 = vcombine.low %v1894, %v1895
        %v1911 = vcombine.low %v1896, %v1897
        %v1912 = vcombine.low %v1898, %v1899
        %v1913 = vcombine.low %v1900, %v1901
        %1914 = vrot.lane.b32.xlu0 %v1910, 64
        %v1915 = vpop.permute.xlu0 %1914
        %1916 = vrot.lane.b32.xlu0 %v1911, 64
        %v1917 = vpop.permute.xlu0 %1916
        %1918 = vrot.lane.b32.xlu0 %v1912, 64
        %v1919 = vpop.permute.xlu0 %1918
        %1920 = vrot.lane.b32.xlu0 %v1913, 64
        %v1921 = vpop.permute.xlu0 %1920
        %vm1926 = vcmask 1048064
        %1927 = vst.msk [vmem:[#allocation5] sm:$0xff] %vm1926, %v1915
        %1928 = vst.msk [vmem:[#allocation5 + $0x28] sm:$0xff] %vm1926, %v1917
        %1929 = vst.msk [vmem:[#allocation5 + $0x50] sm:$0xff] %vm1926, %v1919
        %1930 = vst.msk [vmem:[#allocation5 + $0x78] sm:$0xff] %vm1926, %v1921
        %v1931 = vld [vmem:[#allocation4 + $0x2] sm:$0xf]
        %v1932 = vld [vmem:[#allocation4 + $0xa] sm:$0xf]
        %v1933 = vld [vmem:[#allocation4 + $0x12] sm:$0xf]
        %v1934 = vld [vmem:[#allocation4 + $0x1a] sm:$0xf]
        %v1935 = vld [vmem:[#allocation4 + $0x22] sm:$0xf]
        %v1936 = vld [vmem:[#allocation4 + $0x2a] sm:$0xf]
        %v1937 = vld [vmem:[#allocation4 + $0x32] sm:$0xf]
        %v1938 = vld [vmem:[#allocation4 + $0x3a] sm:$0xf]
        %v1947 = vcombine.low %v1931, %v1932
        %v1948 = vcombine.low %v1933, %v1934
        %v1949 = vcombine.low %v1935, %v1936
        %v1950 = vcombine.low %v1937, %v1938
        %1955 = vst.msk [vmem:[#allocation5 + $0x8] sm:$0xff] %vm1889, %v1947
        %1956 = vst.msk [vmem:[#allocation5 + $0x30] sm:$0xff] %vm1889, %v1948
        %1957 = vst.msk [vmem:[#allocation5 + $0x58] sm:$0xff] %vm1889, %v1949
        %1958 = vst.msk [vmem:[#allocation5 + $0x80] sm:$0xff] %vm1889, %v1950
        %v1959 = vld [vmem:[%s1855] sm:$0xf]
        %v1960 = vld [vmem:[%s1855 + $0x8] sm:$0xf]
        %v1961 = vld [vmem:[%s1855 + $0x10] sm:$0xf]
        %v1962 = vld [vmem:[%s1855 + $0x18] sm:$0xf]
        %v1963 = vld [vmem:[%s1855 + $0x20] sm:$0xf]
        %v1964 = vld [vmem:[%s1855 + $0x28] sm:$0xf]
        %v1965 = vld [vmem:[%s1855 + $0x30] sm:$0xf]
        %v1966 = vld [vmem:[%s1855 + $0x38] sm:$0xf]
        %v1975 = vcombine.low %v1959, %v1960
        %v1976 = vcombine.low %v1961, %v1962
        %v1977 = vcombine.low %v1963, %v1964
        %v1978 = vcombine.low %v1965, %v1966
        %1979 = vrot.lane.b32.xlu0 %v1975, 64
        %v1980 = vpop.permute.xlu0 %1979
        %1981 = vrot.lane.b32.xlu0 %v1976, 64
        %v1982 = vpop.permute.xlu0 %1981
        %1983 = vrot.lane.b32.xlu0 %v1977, 64
        %v1984 = vpop.permute.xlu0 %1983
        %1985 = vrot.lane.b32.xlu0 %v1978, 64
        %v1986 = vpop.permute.xlu0 %1985
        %1991 = vst.msk [vmem:[#allocation5 + $0x8] sm:$0xff] %vm1926, %v1980
        %1992 = vst.msk [vmem:[#allocation5 + $0x30] sm:$0xff] %vm1926, %v1982
        %1993 = vst.msk [vmem:[#allocation5 + $0x58] sm:$0xff] %vm1926, %v1984
        %1994 = vst.msk [vmem:[#allocation5 + $0x80] sm:$0xff] %vm1926, %v1986
        %v1995 = vld [vmem:[%s1855 + $0x1] sm:$0xf]
        %v1996 = vld [vmem:[%s1855 + $0x9] sm:$0xf]
        %v1997 = vld [vmem:[%s1855 + $0x11] sm:$0xf]
        %v1998 = vld [vmem:[%s1855 + $0x19] sm:$0xf]
        %v1999 = vld [vmem:[%s1855 + $0x21] sm:$0xf]
        %v2000 = vld [vmem:[%s1855 + $0x29] sm:$0xf]
        %v2001 = vld [vmem:[%s1855 + $0x31] sm:$0xf]
        %v2002 = vld [vmem:[%s1855 + $0x39] sm:$0xf]
        %v2011 = vcombine.low %v1995, %v1996
        %v2012 = vcombine.low %v1997, %v1998
        %v2013 = vcombine.low %v1999, %v2000
        %v2014 = vcombine.low %v2001, %v2002
        %2019 = vst.msk [vmem:[#allocation5 + $0x10] sm:$0xff] %vm1889, %v2011
        %2020 = vst.msk [vmem:[#allocation5 + $0x38] sm:$0xff] %vm1889, %v2012
        %2021 = vst.msk [vmem:[#allocation5 + $0x60] sm:$0xff] %vm1889, %v2013
        %2022 = vst.msk [vmem:[#allocation5 + $0x88] sm:$0xff] %vm1889, %v2014
        %v2023 = vld [vmem:[%s1855 + $0x2] sm:$0xf]
        %v2024 = vld [vmem:[%s1855 + $0xa] sm:$0xf]
        %v2025 = vld [vmem:[%s1855 + $0x12] sm:$0xf]
        %v2026 = vld [vmem:[%s1855 + $0x1a] sm:$0xf]
        %v2027 = vld [vmem:[%s1855 + $0x22] sm:$0xf]
        %v2028 = vld [vmem:[%s1855 + $0x2a] sm:$0xf]
        %v2029 = vld [vmem:[%s1855 + $0x32] sm:$0xf]
        %v2030 = vld [vmem:[%s1855 + $0x3a] sm:$0xf]
        %v2039 = vcombine.low %v2023, %v2024
        %v2040 = vcombine.low %v2025, %v2026
        %v2041 = vcombine.low %v2027, %v2028
        %v2042 = vcombine.low %v2029, %v2030
        %2043 = vrot.lane.b32.xlu0 %v2039, 64
        %v2044 = vpop.permute.xlu0 %2043
        %2045 = vrot.lane.b32.xlu0 %v2040, 64
        %v2046 = vpop.permute.xlu0 %2045
        %2047 = vrot.lane.b32.xlu0 %v2041, 64
        %v2048 = vpop.permute.xlu0 %2047
        %2049 = vrot.lane.b32.xlu0 %v2042, 64
        %v2050 = vpop.permute.xlu0 %2049
        %2055 = vst.msk [vmem:[#allocation5 + $0x10] sm:$0xff] %vm1926, %v2044
        %2056 = vst.msk [vmem:[#allocation5 + $0x38] sm:$0xff] %vm1926, %v2046
        %2057 = vst.msk [vmem:[#allocation5 + $0x60] sm:$0xff] %vm1926, %v2048
        %2058 = vst.msk [vmem:[#allocation5 + $0x88] sm:$0xff] %vm1926, %v2050
        %s2059 = scalar_lea.vmem [#allocation4], 16
        %v2060 = vld [vmem:[%s2059] sm:$0xf]
        %v2061 = vld [vmem:[%s2059 + $0x8] sm:$0xf]
        %v2062 = vld [vmem:[%s2059 + $0x10] sm:$0xf]
        %v2063 = vld [vmem:[%s2059 + $0x18] sm:$0xf]
        %v2064 = vld [vmem:[%s2059 + $0x20] sm:$0xf]
        %v2065 = vld [vmem:[%s2059 + $0x28] sm:$0xf]
        %v2066 = vld [vmem:[%s2059 + $0x30] sm:$0xf]
        %v2067 = vld [vmem:[%s2059 + $0x38] sm:$0xf]
        %v2076 = vcombine.low %v2060, %v2061
        %v2077 = vcombine.low %v2062, %v2063
        %v2078 = vcombine.low %v2064, %v2065
        %v2079 = vcombine.low %v2066, %v2067
        %2084 = vst.msk [vmem:[#allocation5 + $0x18] sm:$0xff] %vm1889, %v2076
        %2085 = vst.msk [vmem:[#allocation5 + $0x40] sm:$0xff] %vm1889, %v2077
        %2086 = vst.msk [vmem:[#allocation5 + $0x68] sm:$0xff] %vm1889, %v2078
        %2087 = vst.msk [vmem:[#allocation5 + $0x90] sm:$0xff] %vm1889, %v2079
        %v2088 = vld [vmem:[%s2059 + $0x1] sm:$0xf]
        %v2089 = vld [vmem:[%s2059 + $0x9] sm:$0xf]
        %v2090 = vld [vmem:[%s2059 + $0x11] sm:$0xf]
        %v2091 = vld [vmem:[%s2059 + $0x19] sm:$0xf]
        %v2092 = vld [vmem:[%s2059 + $0x21] sm:$0xf]
        %v2093 = vld [vmem:[%s2059 + $0x29] sm:$0xf]
        %v2094 = vld [vmem:[%s2059 + $0x31] sm:$0xf]
        %v2095 = vld [vmem:[%s2059 + $0x39] sm:$0xf]
        %v2104 = vcombine.low %v2088, %v2089
        %v2105 = vcombine.low %v2090, %v2091
        %v2106 = vcombine.low %v2092, %v2093
        %v2107 = vcombine.low %v2094, %v2095
        %2108 = vrot.lane.b32.xlu0 %v2104, 64
        %v2109 = vpop.permute.xlu0 %2108
        %2110 = vrot.lane.b32.xlu0 %v2105, 64
        %v2111 = vpop.permute.xlu0 %2110
        %2112 = vrot.lane.b32.xlu0 %v2106, 64
        %v2113 = vpop.permute.xlu0 %2112
        %2114 = vrot.lane.b32.xlu0 %v2107, 64
        %v2115 = vpop.permute.xlu0 %2114
        %2120 = vst.msk [vmem:[#allocation5 + $0x18] sm:$0xff] %vm1926, %v2109
        %2121 = vst.msk [vmem:[#allocation5 + $0x40] sm:$0xff] %vm1926, %v2111
        %2122 = vst.msk [vmem:[#allocation5 + $0x68] sm:$0xff] %vm1926, %v2113
        %2123 = vst.msk [vmem:[#allocation5 + $0x90] sm:$0xff] %vm1926, %v2115
        %v2124 = vld [vmem:[%s2059 + $0x2] sm:$0xf]
        %v2125 = vld [vmem:[%s2059 + $0xa] sm:$0xf]
        %v2126 = vld [vmem:[%s2059 + $0x12] sm:$0xf]
        %v2127 = vld [vmem:[%s2059 + $0x1a] sm:$0xf]
        %v2128 = vld [vmem:[%s2059 + $0x22] sm:$0xf]
        %v2129 = vld [vmem:[%s2059 + $0x2a] sm:$0xf]
        %v2130 = vld [vmem:[%s2059 + $0x32] sm:$0xf]
        %v2131 = vld [vmem:[%s2059 + $0x3a] sm:$0xf]
        %v2140 = vcombine.low %v2124, %v2125
        %v2141 = vcombine.low %v2126, %v2127
        %v2142 = vcombine.low %v2128, %v2129
        %v2143 = vcombine.low %v2130, %v2131
        %2148 = vst.msk [vmem:[#allocation5 + $0x20] sm:$0xff] %vm1889, %v2140
        %2149 = vst.msk [vmem:[#allocation5 + $0x48] sm:$0xff] %vm1889, %v2141
        %2150 = vst.msk [vmem:[#allocation5 + $0x70] sm:$0xff] %vm1889, %v2142
        %2151 = vst.msk [vmem:[#allocation5 + $0x98] sm:$0xff] %vm1889, %v2143
        %v2152 = vld [vmem:[#allocation5] sm:$0xff]
        %v2153 = vld [vmem:[#allocation5 + $0x8] sm:$0xff]
        %v2154 = vld [vmem:[#allocation5 + $0x10] sm:$0xff]
        %v2155 = vld [vmem:[#allocation5 + $0x18] sm:$0xff]
        %v2156 = vld [vmem:[#allocation5 + $0x20] sm:$0xff]
        %v2157 = vld [vmem:[#allocation5 + $0x28] sm:$0xff]
        %v2158 = vld [vmem:[#allocation5 + $0x30] sm:$0xff]
        %v2159 = vld [vmem:[#allocation5 + $0x38] sm:$0xff]
        %v2160 = vld [vmem:[#allocation5 + $0x40] sm:$0xff]
        %v2161 = vld [vmem:[#allocation5 + $0x48] sm:$0xff]
        %v2162 = vld [vmem:[#allocation5 + $0x50] sm:$0xff]
        %v2163 = vld [vmem:[#allocation5 + $0x58] sm:$0xff]
        %v2164 = vld [vmem:[#allocation5 + $0x60] sm:$0xff]
        %v2165 = vld [vmem:[#allocation5 + $0x68] sm:$0xff]
        %v2166 = vld [vmem:[#allocation5 + $0x70] sm:$0xff]
        %v2167 = vld [vmem:[#allocation5 + $0x78] sm:$0xff]
        %v2168 = vld [vmem:[#allocation5 + $0x80] sm:$0xff]
        %v2169 = vld [vmem:[#allocation5 + $0x88] sm:$0xff]
        %v2170 = vld [vmem:[#allocation5 + $0x90] sm:$0xff]
        %v2171 = vld [vmem:[#allocation5 + $0x98] sm:$0xff]
        %v2172 = vld [vmem:[%s2] sm:$0xff]
        %v2173 = vld [vmem:[%s2 + $0x8] sm:$0xff]
        %v2174 = vld [vmem:[%s2 + $0x10] sm:$0xff]
        %v2175 = vld [vmem:[%s2 + $0x18] sm:$0xff]
        %v2176 = vld [vmem:[%s2 + $0x20] sm:$0xff]
        %v2177 = vld [vmem:[%s2 + $0x28] sm:$0xff]
        %v2178 = vld [vmem:[%s2 + $0x30] sm:$0xff]
        %v2179 = vld [vmem:[%s2 + $0x38] sm:$0xff]
        %v2180 = vld [vmem:[%s2 + $0x40] sm:$0xff]
        %v2181 = vld [vmem:[%s2 + $0x48] sm:$0xff]
        %v2182 = vld [vmem:[%s2 + $0x50] sm:$0xff]
        %v2183 = vld [vmem:[%s2 + $0x58] sm:$0xff]
        %v2184 = vld [vmem:[%s2 + $0x60] sm:$0xff]
        %v2185 = vld [vmem:[%s2 + $0x68] sm:$0xff]
        %v2186 = vld [vmem:[%s2 + $0x70] sm:$0xff]
        %v2187 = vld [vmem:[%s2 + $0x78] sm:$0xff]
        %v2188 = vld [vmem:[%s2 + $0x80] sm:$0xff]
        %v2189 = vld [vmem:[%s2 + $0x88] sm:$0xff]
        %v2190 = vld [vmem:[%s2 + $0x90] sm:$0xff]
        %v2191 = vld [vmem:[%s2 + $0x98] sm:$0xff]
        %v2192 = vld [vmem:[%s2 + $0xa0] sm:$0xff]
        %v2193 = vld [vmem:[%s2 + $0xa8] sm:$0xff]
        %v2194 = vld [vmem:[%s2 + $0xb0] sm:$0xff]
        %v2195 = vld [vmem:[%s2 + $0xb8] sm:$0xff]
        %v2196 = vld [vmem:[%s2 + $0xc0] sm:$0xff]
        %v2197 = vld [vmem:[%s2 + $0xc8] sm:$0xff]
        %v2198 = vld [vmem:[%s2 + $0xd0] sm:$0xff]
        %v2199 = vld [vmem:[%s2 + $0xd8] sm:$0xff]
        %v2200 = vld [vmem:[%s2 + $0xe0] sm:$0xff]
        %v2201 = vld [vmem:[%s2 + $0xe8] sm:$0xff]
        %v2202 = vld [vmem:[%s2 + $0xf0] sm:$0xff]
        %v2203 = vld [vmem:[%s2 + $0xf8] sm:$0xff]
        %v2204 = vld [vmem:[%s2 + $0x100] sm:$0xff]
        %v2205 = vld [vmem:[%s2 + $0x108] sm:$0xff]
        %v2206 = vld [vmem:[%s2 + $0x110] sm:$0xff]
        %v2207 = vld [vmem:[%s2 + $0x118] sm:$0xff]
        %v2208 = vld [vmem:[%s2 + $0x120] sm:$0xff]
        %v2209 = vld [vmem:[%s2 + $0x128] sm:$0xff]
        %v2210 = vld [vmem:[%s2 + $0x130] sm:$0xff]
        %v2211 = vld [vmem:[%s2 + $0x138] sm:$0xff]
        %v2212 = vld [vmem:[%s2 + $0x140] sm:$0xff]
        %v2213 = vld [vmem:[%s2 + $0x148] sm:$0xff]
        %v2214 = vld [vmem:[%s2 + $0x150] sm:$0xff]
        %v2215 = vld [vmem:[%s2 + $0x158] sm:$0xff]
        %v2216 = vld [vmem:[%s2 + $0x160] sm:$0xff]
        %v2217 = vld [vmem:[%s2 + $0x168] sm:$0xff]
        %v2218 = vld [vmem:[%s2 + $0x170] sm:$0xff]
        %v2219 = vld [vmem:[%s2 + $0x178] sm:$0xff]
        %v2220 = vld [vmem:[%s2 + $0x180] sm:$0xff]
        %v2221 = vld [vmem:[%s2 + $0x188] sm:$0xff]
        %v2222 = vld [vmem:[%s2 + $0x190] sm:$0xff]
        %v2223 = vld [vmem:[%s2 + $0x198] sm:$0xff]
        %v2224 = vld [vmem:[%s2 + $0x1a0] sm:$0xff]
        %v2225 = vld [vmem:[%s2 + $0x1a8] sm:$0xff]
        %v2226 = vld [vmem:[%s2 + $0x1b0] sm:$0xff]
        %v2227 = vld [vmem:[%s2 + $0x1b8] sm:$0xff]
        %v2228 = vld [vmem:[%s2 + $0x1c0] sm:$0xff]
        %v2229 = vld [vmem:[%s2 + $0x1c8] sm:$0xff]
        %v2230 = vld [vmem:[%s2 + $0x1d0] sm:$0xff]
        %v2231 = vld [vmem:[%s2 + $0x1d8] sm:$0xff]
        %v2232 = vld [vmem:[%s2 + $0x1e0] sm:$0xff]
        %v2233 = vld [vmem:[%s2 + $0x1e8] sm:$0xff]
        %v2234 = vld [vmem:[%s2 + $0x1f0] sm:$0xff]
        %v2235 = vld [vmem:[%s2 + $0x1f8] sm:$0xff]
        %v2236 = vld [vmem:[%s2 + $0x200] sm:$0xff]
        %v2237 = vld [vmem:[%s2 + $0x208] sm:$0xff]
        %v2238 = vld [vmem:[%s2 + $0x210] sm:$0xff]
        %v2239 = vld [vmem:[%s2 + $0x218] sm:$0xff]
        %v2240 = vld [vmem:[%s2 + $0x220] sm:$0xff]
        %v2241 = vld [vmem:[%s2 + $0x228] sm:$0xff]
        %v2242 = vld [vmem:[%s2 + $0x230] sm:$0xff]
        %v2243 = vld [vmem:[%s2 + $0x238] sm:$0xff]
        %v2245 = vsel %vm1889, %v2156, 0
        %v2248 = vsel %vm1889, %v2161, 0
        %v2251 = vsel %vm1889, %v2166, 0
        %v2254 = vsel %vm1889, %v2171, 0
        %2256 = vmatprep.subr.mxu0 0.0
        %2257 = vmatpush1.msra.mxu0 %v2187
        %2258 = vmatprep.subr.mxu0 0.0
        %2259 = vmatpush1.msra.mxu0 %v2186
        %2260 = vmatprep.subr.mxu0 0.0
        %2261 = vmatpush1.msra.mxu0 %v2185
        %2262 = vmatprep.subr.mxu0 0.0
        %2263 = vmatpush1.msra.mxu0 %v2184
        %2264 = vmatprep.subr.mxu0 0.0
        %2265 = vmatpush1.msra.mxu0 %v2183
        %2266 = vmatprep.subr.mxu0 0.0
        %2267 = vmatpush1.msra.mxu0 %v2182
        %2268 = vmatprep.subr.mxu0 0.0
        %2269 = vmatpush1.msra.mxu0 %v2181
        %2270 = vmatprep.subr.mxu0 0.0
        %2271 = vmatpush1.msra.mxu0 %v2180
        %2272 = vmatprep.subr.mxu0 0.0
        %2273 = vmatpush1.msra.mxu0 %v2179
        %2274 = vmatprep.subr.mxu0 0.0
        %2275 = vmatpush1.msra.mxu0 %v2178
        %2276 = vmatprep.subr.mxu0 0.0
        %2277 = vmatpush1.msra.mxu0 %v2177
        %2278 = vmatprep.subr.mxu0 0.0
        %2279 = vmatpush1.msra.mxu0 %v2176
        %2280 = vmatprep.subr.mxu0 0.0
        %2281 = vmatpush1.msra.mxu0 %v2175
        %2282 = vmatprep.subr.mxu0 0.0
        %2283 = vmatpush1.msra.mxu0 %v2174
        %2284 = vmatprep.subr.mxu0 0.0
        %2285 = vmatpush1.msra.mxu0 %v2173
        %2286 = vmatprep.subr.mxu0 0.0
        %2287 = vmatpush1.msra.mxu0 %v2172
        %2288 = vmatprep.subr.mxu0 0.0
        %2289 = vmatpush2.msra.mxu0 %v2203
        %2290 = vmatprep.subr.mxu0 0.0
        %2291 = vmatpush2.msra.mxu0 %v2202
        %2292 = vmatprep.subr.mxu0 0.0
        %2293 = vmatpush2.msra.mxu0 %v2201
        %2294 = vmatprep.subr.mxu0 0.0
        %2295 = vmatpush2.msra.mxu0 %v2200
        %2296 = vmatprep.subr.mxu0 0.0
        %2297 = vmatpush2.msra.mxu0 %v2199
        %2298 = vmatprep.subr.mxu0 0.0
        %2299 = vmatpush2.msra.mxu0 %v2198
        %2300 = vmatprep.subr.mxu0 0.0
        %2301 = vmatpush2.msra.mxu0 %v2197
        %2302 = vmatprep.subr.mxu0 0.0
        %2303 = vmatpush2.msra.mxu0 %v2196
        %2304 = vmatprep.subr.mxu0 0.0
        %2305 = vmatpush2.msra.mxu0 %v2195
        %2306 = vmatprep.subr.mxu0 0.0
        %2307 = vmatpush2.msra.mxu0 %v2194
        %2308 = vmatprep.subr.mxu0 0.0
        %2309 = vmatpush2.msra.mxu0 %v2193
        %2310 = vmatprep.subr.mxu0 0.0
        %2311 = vmatpush2.msra.mxu0 %v2192
        %2312 = vmatprep.subr.mxu0 0.0
        %2313 = vmatpush2.msra.mxu0 %v2191
        %2314 = vmatprep.subr.mxu0 0.0
        %2315 = vmatpush2.msra.mxu0 %v2190
        %2316 = vmatprep.subr.mxu0 0.0
        %2317 = vmatpush2.msra.mxu0 %v2189
        %2318 = vmatprep.subr.mxu0 0.0
        %2319 = vmatpush2.msra.mxu0 %v2188
        %2320 = vmatprep.mubr.f32.mxu0 %v2153
        %2321 = vmatmul.mubr.f32.gmra.mxu0 %v2152
        %v2322 = vpop.f32.mrf.mxu0
        %v2323 = vadd.f32 0.0, %v2322
        %v2324 = vpop.f32.mrf.mxu0
        %2325 = vmatprep.mubr.f32.mxu0 %v2158
        %2326 = vmatmul.mubr.f32.gmra.mxu0 %v2157
        %v2327 = vpop.f32.mrf.mxu0
        %v2328 = vadd.f32 0.0, %v2327
        %v2329 = vpop.f32.mrf.mxu0
        %2330 = vmatprep.mubr.f32.mxu0 %v2163
        %2331 = vmatmul.mubr.f32.gmra.mxu0 %v2162
        %v2332 = vpop.f32.mrf.mxu0
        %v2333 = vadd.f32 0.0, %v2332
        %v2334 = vpop.f32.mrf.mxu0
        %2335 = vmatprep.mubr.f32.mxu0 %v2168
        %2336 = vmatmul.mubr.f32.gmra.mxu0 %v2167
        %v2337 = vpop.f32.mrf.mxu0
        %v2338 = vadd.f32 0.0, %v2337
        %v2339 = vpop.f32.mrf.mxu0
        %2340 = vdwg.mxu0
        %2341 = vmatprep.subr.mxu0 0.0
        %2342 = vmatpush1.msra.mxu0 %v2219
        %2343 = vmatprep.subr.mxu0 0.0
        %2344 = vmatpush1.msra.mxu0 %v2218
        %2345 = vmatprep.subr.mxu0 0.0
        %2346 = vmatpush1.msra.mxu0 %v2217
        %2347 = vmatprep.subr.mxu0 0.0
        %2348 = vmatpush1.msra.mxu0 %v2216
        %2349 = vmatprep.subr.mxu0 0.0
        %2350 = vmatpush1.msra.mxu0 %v2215
        %2351 = vmatprep.subr.mxu0 0.0
        %2352 = vmatpush1.msra.mxu0 %v2214
        %2353 = vmatprep.subr.mxu0 0.0
        %2354 = vmatpush1.msra.mxu0 %v2213
        %2355 = vmatprep.subr.mxu0 0.0
        %2356 = vmatpush1.msra.mxu0 %v2212
        %2357 = vmatprep.subr.mxu0 0.0
        %2358 = vmatpush1.msra.mxu0 %v2211
        %2359 = vmatprep.subr.mxu0 0.0
        %2360 = vmatpush1.msra.mxu0 %v2210
        %2361 = vmatprep.subr.mxu0 0.0
        %2362 = vmatpush1.msra.mxu0 %v2209
        %2363 = vmatprep.subr.mxu0 0.0
        %2364 = vmatpush1.msra.mxu0 %v2208
        %2365 = vmatprep.subr.mxu0 0.0
        %2366 = vmatpush1.msra.mxu0 %v2207
        %2367 = vmatprep.subr.mxu0 0.0
        %2368 = vmatpush1.msra.mxu0 %v2206
        %2369 = vmatprep.subr.mxu0 0.0
        %2370 = vmatpush1.msra.mxu0 %v2205
        %2371 = vmatprep.subr.mxu0 0.0
        %2372 = vmatpush1.msra.mxu0 %v2204
        %2373 = vmatprep.subr.mxu0 0.0
        %2374 = vmatpush2.msra.mxu0 %v2235
        %2375 = vmatprep.subr.mxu0 0.0
        %2376 = vmatpush2.msra.mxu0 %v2234
        %2377 = vmatprep.subr.mxu0 0.0
        %2378 = vmatpush2.msra.mxu0 %v2233
        %2379 = vmatprep.subr.mxu0 0.0
        %2380 = vmatpush2.msra.mxu0 %v2232
        %2381 = vmatprep.subr.mxu0 0.0
        %2382 = vmatpush2.msra.mxu0 %v2231
        %2383 = vmatprep.subr.mxu0 0.0
        %2384 = vmatpush2.msra.mxu0 %v2230
        %2385 = vmatprep.subr.mxu0 0.0
        %2386 = vmatpush2.msra.mxu0 %v2229
        %2387 = vmatprep.subr.mxu0 0.0
        %2388 = vmatpush2.msra.mxu0 %v2228
        %2389 = vmatprep.subr.mxu0 0.0
        %2390 = vmatpush2.msra.mxu0 %v2227
        %2391 = vmatprep.subr.mxu0 0.0
        %2392 = vmatpush2.msra.mxu0 %v2226
        %2393 = vmatprep.subr.mxu0 0.0
        %2394 = vmatpush2.msra.mxu0 %v2225
        %2395 = vmatprep.subr.mxu0 0.0
        %2396 = vmatpush2.msra.mxu0 %v2224
        %2397 = vmatprep.subr.mxu0 0.0
        %2398 = vmatpush2.msra.mxu0 %v2223
        %2399 = vmatprep.subr.mxu0 0.0
        %2400 = vmatpush2.msra.mxu0 %v2222
        %2401 = vmatprep.subr.mxu0 0.0
        %2402 = vmatpush2.msra.mxu0 %v2221
        %2403 = vmatprep.subr.mxu0 0.0
        %2404 = vmatpush2.msra.mxu0 %v2220
        %2405 = vmatprep.mubr.f32.mxu0 %v2155
        %2406 = vmatmul.mubr.f32.gmra.mxu0 %v2154
        %v2407 = vpop.f32.mrf.mxu0
        %v2408 = vadd.f32 %v2323, %v2407
        %v2409 = vpop.f32.mrf.mxu0
        %2410 = vmatprep.mubr.f32.mxu0 %v2160
        %2411 = vmatmul.mubr.f32.gmra.mxu0 %v2159
        %v2412 = vpop.f32.mrf.mxu0
        %v2413 = vadd.f32 %v2328, %v2412
        %v2414 = vpop.f32.mrf.mxu0
        %2415 = vmatprep.mubr.f32.mxu0 %v2165
        %2416 = vmatmul.mubr.f32.gmra.mxu0 %v2164
        %v2417 = vpop.f32.mrf.mxu0
        %v2418 = vadd.f32 %v2333, %v2417
        %v2419 = vpop.f32.mrf.mxu0
        %2420 = vmatprep.mubr.f32.mxu0 %v2170
        %2421 = vmatmul.mubr.f32.gmra.mxu0 %v2169
        %v2422 = vpop.f32.mrf.mxu0
        %v2423 = vadd.f32 %v2338, %v2422
        %v2424 = vpop.f32.mrf.mxu0
        %2425 = vdwg.mxu0
        %2426 = vmatprep.subr.mxu0 0.0
        %2427 = vmatpush1.msra.mxu0 0.0
        %2428 = vmatprep.subr.mxu0 0.0
        %2429 = vmatpush1.msra.mxu0 0.0
        %2430 = vmatprep.subr.mxu0 0.0
        %2431 = vmatpush1.msra.mxu0 0.0
        %2432 = vmatprep.subr.mxu0 0.0
        %2433 = vmatpush1.msra.mxu0 0.0
        %2434 = vmatprep.subr.mxu0 0.0
        %2435 = vmatpush1.msra.mxu0 0.0
        %2436 = vmatprep.subr.mxu0 0.0
        %2437 = vmatpush1.msra.mxu0 0.0
        %2438 = vmatprep.subr.mxu0 0.0
        %2439 = vmatpush1.msra.mxu0 0.0
        %2440 = vmatprep.subr.mxu0 0.0
        %2441 = vmatpush1.msra.mxu0 0.0
        %2442 = vmatprep.subr.mxu0 0.0
        %2443 = vmatpush1.msra.mxu0 %v2243
        %2444 = vmatprep.subr.mxu0 0.0
        %2445 = vmatpush1.msra.mxu0 %v2242
        %2446 = vmatprep.subr.mxu0 0.0
        %2447 = vmatpush1.msra.mxu0 %v2241
        %2448 = vmatprep.subr.mxu0 0.0
        %2449 = vmatpush1.msra.mxu0 %v2240
        %2450 = vmatprep.subr.mxu0 0.0
        %2451 = vmatpush1.msra.mxu0 %v2239
        %2452 = vmatprep.subr.mxu0 0.0
        %2453 = vmatpush1.msra.mxu0 %v2238
        %2454 = vmatprep.subr.mxu0 0.0
        %2455 = vmatpush1.msra.mxu0 %v2237
        %2456 = vmatprep.subr.mxu0 0.0
        %2457 = vmatpush1.msra.mxu0 %v2236
        %2458 = vmatprep.subr.mxu0 0.0
        %2459 = vmatpush2.msra.mxu0 0.0
        %2460 = vmatprep.subr.mxu0 0.0
        %2461 = vmatpush2.msra.mxu0 0.0
        %2462 = vmatprep.subr.mxu0 0.0
        %2463 = vmatpush2.msra.mxu0 0.0
        %2464 = vmatprep.subr.mxu0 0.0
        %2465 = vmatpush2.msra.mxu0 0.0
        %2466 = vmatprep.subr.mxu0 0.0
        %2467 = vmatpush2.msra.mxu0 0.0
        %2468 = vmatprep.subr.mxu0 0.0
        %2469 = vmatpush2.msra.mxu0 0.0
        %2470 = vmatprep.subr.mxu0 0.0
        %2471 = vmatpush2.msra.mxu0 0.0
        %2472 = vmatprep.subr.mxu0 0.0
        %2473 = vmatpush2.msra.mxu0 0.0
        %2474 = vmatprep.subr.mxu0 0.0
        %2475 = vmatpush2.msra.mxu0 0.0
        %2476 = vmatprep.subr.mxu0 0.0
        %2477 = vmatpush2.msra.mxu0 0.0
        %2478 = vmatprep.subr.mxu0 0.0
        %2479 = vmatpush2.msra.mxu0 0.0
        %2480 = vmatprep.subr.mxu0 0.0
        %2481 = vmatpush2.msra.mxu0 0.0
        %2482 = vmatprep.subr.mxu0 0.0
        %2483 = vmatpush2.msra.mxu0 0.0
        %2484 = vmatprep.subr.mxu0 0.0
        %2485 = vmatpush2.msra.mxu0 0.0
        %2486 = vmatprep.subr.mxu0 0.0
        %2487 = vmatpush2.msra.mxu0 0.0
        %2488 = vmatprep.subr.mxu0 0.0
        %2489 = vmatpush2.msra.mxu0 0.0
        %2490 = vmatprep.mubr.f32.mxu0 0.0
        %2491 = vmatmul.mubr.f32.gmra.mxu0 %v2245
        %v2492 = vpop.f32.mrf.mxu0
        %v2493 = vadd.f32 %v2408, %v2492
        %v2494 = vpop.f32.mrf.mxu0
        %2495 = vmatprep.mubr.f32.mxu0 0.0
        %2496 = vmatmul.mubr.f32.gmra.mxu0 %v2248
        %v2497 = vpop.f32.mrf.mxu0
        %v2498 = vadd.f32 %v2413, %v2497
        %v2499 = vpop.f32.mrf.mxu0
        %2500 = vmatprep.mubr.f32.mxu0 0.0
        %2501 = vmatmul.mubr.f32.gmra.mxu0 %v2251
        %v2502 = vpop.f32.mrf.mxu0
        %v2503 = vadd.f32 %v2418, %v2502
        %v2504 = vpop.f32.mrf.mxu0
        %2505 = vmatprep.mubr.f32.mxu0 0.0
        %2506 = vmatmul.mubr.f32.gmra.mxu0 %v2254
        %v2507 = vpop.f32.mrf.mxu0
        %v2508 = vadd.f32 %v2423, %v2507
        %v2509 = vpop.f32.mrf.mxu0
        %2510 = vdwg.mxu0
        %v2511 = vld [vmem:[%s4 + $0x2] sm:$0x1]
        %v2512 = vlaneseq
        %v2513 = vshrl.u32 %v2512, 7
        %v2514 = vsub.s32 0, %v2513
        %v2515 = vrot.slane %v2511, %v2514
        %v2516 = vmul.f32 %v2493, %v2515
        %v2517 = vmul.f32 %v2498, %v2515
        %v2518 = vmul.f32 %v2503, %v2515
        %v2519 = vmul.f32 %v2508, %v2515
        %v2520 = vld [vmem:[%s4 + $0x3] sm:$0x1]
        %v2521 = vlaneseq
        %v2522 = vshrl.u32 %v2521, 7
        %v2523 = vsub.s32 0, %v2522
        %v2524 = vrot.slane %v2520, %v2523
        %v2525 = vadd.f32 %v2516, %v2524
        %v2526 = vadd.f32 %v2517, %v2524
        %v2527 = vadd.f32 %v2518, %v2524
        %v2528 = vadd.f32 %v2519, %v2524
        %v2529 = vmax.f32 %v2525, 0.0
        %v2530 = vmax.f32 %v2526, 0.0
        %v2531 = vmax.f32 %v2527, 0.0
        %v2532 = vmax.f32 %v2528, 0.0
        %v2537 = vcombine.high %v2529, %v2529
        %v2538 = vcombine.high %v2530, %v2530
        %v2539 = vcombine.high %v2531, %v2531
        %v2540 = vcombine.high %v2532, %v2532
        %2545 = vst.msk [vmem:[%s1855 + $0x1] sm:$0xf] %vm1856, %v2529
        %2546 = vst.msk [vmem:[%s1855 + $0x9] sm:$0xf] %vm1856, %v2537
        %2547 = vst.msk [vmem:[%s1855 + $0x11] sm:$0xf] %vm1856, %v2530
        %2548 = vst.msk [vmem:[%s1855 + $0x19] sm:$0xf] %vm1856, %v2538
        %2549 = vst.msk [vmem:[%s1855 + $0x21] sm:$0xf] %vm1856, %v2531
        %2550 = vst.msk [vmem:[%s1855 + $0x29] sm:$0xf] %vm1856, %v2539
        %2551 = vst.msk [vmem:[%s1855 + $0x31] sm:$0xf] %vm1856, %v2532
        %2552 = vst.msk [vmem:[%s1855 + $0x39] sm:$0xf] %vm1856, %v2540
        %v2553 = vld [vmem:[#allocation4] sm:$0xf]
        %v2554 = vld [vmem:[#allocation4 + $0x8] sm:$0xf]
        %v2555 = vld [vmem:[#allocation4 + $0x10] sm:$0xf]
        %v2556 = vld [vmem:[#allocation4 + $0x18] sm:$0xf]
        %v2557 = vld [vmem:[#allocation4 + $0x20] sm:$0xf]
        %v2558 = vld [vmem:[#allocation4 + $0x28] sm:$0xf]
        %v2559 = vld [vmem:[#allocation4 + $0x30] sm:$0xf]
        %v2560 = vld [vmem:[#allocation4 + $0x38] sm:$0xf]
        %v2569 = vcombine.low %v2553, %v2554
        %v2570 = vcombine.low %v2555, %v2556
        %v2571 = vcombine.low %v2557, %v2558
        %v2572 = vcombine.low %v2559, %v2560
        %2577 = vst.msk [vmem:[#allocation5] sm:$0xff] %vm1889, %v2569
        %2578 = vst.msk [vmem:[#allocation5 + $0x28] sm:$0xff] %vm1889, %v2570
        %2579 = vst.msk [vmem:[#allocation5 + $0x50] sm:$0xff] %vm1889, %v2571
        %2580 = vst.msk [vmem:[#allocation5 + $0x78] sm:$0xff] %vm1889, %v2572
        %v2581 = vld [vmem:[#allocation4 + $0x1] sm:$0xf]
        %v2582 = vld [vmem:[#allocation4 + $0x9] sm:$0xf]
        %v2583 = vld [vmem:[#allocation4 + $0x11] sm:$0xf]
        %v2584 = vld [vmem:[#allocation4 + $0x19] sm:$0xf]
        %v2585 = vld [vmem:[#allocation4 + $0x21] sm:$0xf]
        %v2586 = vld [vmem:[#allocation4 + $0x29] sm:$0xf]
        %v2587 = vld [vmem:[#allocation4 + $0x31] sm:$0xf]
        %v2588 = vld [vmem:[#allocation4 + $0x39] sm:$0xf]
        %v2597 = vcombine.low %v2581, %v2582
        %v2598 = vcombine.low %v2583, %v2584
        %v2599 = vcombine.low %v2585, %v2586
        %v2600 = vcombine.low %v2587, %v2588
        %2601 = vrot.lane.b32.xlu0 %v2597, 64
        %v2602 = vpop.permute.xlu0 %2601
        %2603 = vrot.lane.b32.xlu0 %v2598, 64
        %v2604 = vpop.permute.xlu0 %2603
        %2605 = vrot.lane.b32.xlu0 %v2599, 64
        %v2606 = vpop.permute.xlu0 %2605
        %2607 = vrot.lane.b32.xlu0 %v2600, 64
        %v2608 = vpop.permute.xlu0 %2607
        %2613 = vst.msk [vmem:[#allocation5] sm:$0xff] %vm1926, %v2602
        %2614 = vst.msk [vmem:[#allocation5 + $0x28] sm:$0xff] %vm1926, %v2604
        %2615 = vst.msk [vmem:[#allocation5 + $0x50] sm:$0xff] %vm1926, %v2606
        %2616 = vst.msk [vmem:[#allocation5 + $0x78] sm:$0xff] %vm1926, %v2608
        %v2617 = vld [vmem:[#allocation4 + $0x2] sm:$0xf]
        %v2618 = vld [vmem:[#allocation4 + $0xa] sm:$0xf]
        %v2619 = vld [vmem:[#allocation4 + $0x12] sm:$0xf]
        %v2620 = vld [vmem:[#allocation4 + $0x1a] sm:$0xf]
        %v2621 = vld [vmem:[#allocation4 + $0x22] sm:$0xf]
        %v2622 = vld [vmem:[#allocation4 + $0x2a] sm:$0xf]
        %v2623 = vld [vmem:[#allocation4 + $0x32] sm:$0xf]
        %v2624 = vld [vmem:[#allocation4 + $0x3a] sm:$0xf]
        %v2633 = vcombine.low %v2617, %v2618
        %v2634 = vcombine.low %v2619, %v2620
        %v2635 = vcombine.low %v2621, %v2622
        %v2636 = vcombine.low %v2623, %v2624
        %2641 = vst.msk [vmem:[#allocation5 + $0x8] sm:$0xff] %vm1889, %v2633
        %2642 = vst.msk [vmem:[#allocation5 + $0x30] sm:$0xff] %vm1889, %v2634
        %2643 = vst.msk [vmem:[#allocation5 + $0x58] sm:$0xff] %vm1889, %v2635
        %2644 = vst.msk [vmem:[#allocation5 + $0x80] sm:$0xff] %vm1889, %v2636
        %v2645 = vld [vmem:[%s1855] sm:$0xf]
        %v2646 = vld [vmem:[%s1855 + $0x8] sm:$0xf]
        %v2647 = vld [vmem:[%s1855 + $0x10] sm:$0xf]
        %v2648 = vld [vmem:[%s1855 + $0x18] sm:$0xf]
        %v2649 = vld [vmem:[%s1855 + $0x20] sm:$0xf]
        %v2650 = vld [vmem:[%s1855 + $0x28] sm:$0xf]
        %v2651 = vld [vmem:[%s1855 + $0x30] sm:$0xf]
        %v2652 = vld [vmem:[%s1855 + $0x38] sm:$0xf]
        %v2661 = vcombine.low %v2645, %v2646
        %v2662 = vcombine.low %v2647, %v2648
        %v2663 = vcombine.low %v2649, %v2650
        %v2664 = vcombine.low %v2651, %v2652
        %2665 = vrot.lane.b32.xlu0 %v2661, 64
        %v2666 = vpop.permute.xlu0 %2665
        %2667 = vrot.lane.b32.xlu0 %v2662, 64
        %v2668 = vpop.permute.xlu0 %2667
        %2669 = vrot.lane.b32.xlu0 %v2663, 64
        %v2670 = vpop.permute.xlu0 %2669
        %2671 = vrot.lane.b32.xlu0 %v2664, 64
        %v2672 = vpop.permute.xlu0 %2671
        %2677 = vst.msk [vmem:[#allocation5 + $0x8] sm:$0xff] %vm1926, %v2666
        %2678 = vst.msk [vmem:[#allocation5 + $0x30] sm:$0xff] %vm1926, %v2668
        %2679 = vst.msk [vmem:[#allocation5 + $0x58] sm:$0xff] %vm1926, %v2670
        %2680 = vst.msk [vmem:[#allocation5 + $0x80] sm:$0xff] %vm1926, %v2672
        %v2681 = vld [vmem:[%s1855 + $0x1] sm:$0xf]
        %v2682 = vld [vmem:[%s1855 + $0x9] sm:$0xf]
        %v2683 = vld [vmem:[%s1855 + $0x11] sm:$0xf]
        %v2684 = vld [vmem:[%s1855 + $0x19] sm:$0xf]
        %v2685 = vld [vmem:[%s1855 + $0x21] sm:$0xf]
        %v2686 = vld [vmem:[%s1855 + $0x29] sm:$0xf]
        %v2687 = vld [vmem:[%s1855 + $0x31] sm:$0xf]
        %v2688 = vld [vmem:[%s1855 + $0x39] sm:$0xf]
        %v2697 = vcombine.low %v2681, %v2682
        %v2698 = vcombine.low %v2683, %v2684
        %v2699 = vcombine.low %v2685, %v2686
        %v2700 = vcombine.low %v2687, %v2688
        %2705 = vst.msk [vmem:[#allocation5 + $0x10] sm:$0xff] %vm1889, %v2697
        %2706 = vst.msk [vmem:[#allocation5 + $0x38] sm:$0xff] %vm1889, %v2698
        %2707 = vst.msk [vmem:[#allocation5 + $0x60] sm:$0xff] %vm1889, %v2699
        %2708 = vst.msk [vmem:[#allocation5 + $0x88] sm:$0xff] %vm1889, %v2700
        %v2709 = vld [vmem:[%s1855 + $0x2] sm:$0xf]
        %v2710 = vld [vmem:[%s1855 + $0xa] sm:$0xf]
        %v2711 = vld [vmem:[%s1855 + $0x12] sm:$0xf]
        %v2712 = vld [vmem:[%s1855 + $0x1a] sm:$0xf]
        %v2713 = vld [vmem:[%s1855 + $0x22] sm:$0xf]
        %v2714 = vld [vmem:[%s1855 + $0x2a] sm:$0xf]
        %v2715 = vld [vmem:[%s1855 + $0x32] sm:$0xf]
        %v2716 = vld [vmem:[%s1855 + $0x3a] sm:$0xf]
        %v2725 = vcombine.low %v2709, %v2710
        %v2726 = vcombine.low %v2711, %v2712
        %v2727 = vcombine.low %v2713, %v2714
        %v2728 = vcombine.low %v2715, %v2716
        %2729 = vrot.lane.b32.xlu0 %v2725, 64
        %v2730 = vpop.permute.xlu0 %2729
        %2731 = vrot.lane.b32.xlu0 %v2726, 64
        %v2732 = vpop.permute.xlu0 %2731
        %2733 = vrot.lane.b32.xlu0 %v2727, 64
        %v2734 = vpop.permute.xlu0 %2733
        %2735 = vrot.lane.b32.xlu0 %v2728, 64
        %v2736 = vpop.permute.xlu0 %2735
        %2741 = vst.msk [vmem:[#allocation5 + $0x10] sm:$0xff] %vm1926, %v2730
        %2742 = vst.msk [vmem:[#allocation5 + $0x38] sm:$0xff] %vm1926, %v2732
        %2743 = vst.msk [vmem:[#allocation5 + $0x60] sm:$0xff] %vm1926, %v2734
        %2744 = vst.msk [vmem:[#allocation5 + $0x88] sm:$0xff] %vm1926, %v2736
        %v2745 = vld [vmem:[%s2059] sm:$0xf]
        %v2746 = vld [vmem:[%s2059 + $0x8] sm:$0xf]
        %v2747 = vld [vmem:[%s2059 + $0x10] sm:$0xf]
        %v2748 = vld [vmem:[%s2059 + $0x18] sm:$0xf]
        %v2749 = vld [vmem:[%s2059 + $0x20] sm:$0xf]
        %v2750 = vld [vmem:[%s2059 + $0x28] sm:$0xf]
        %v2751 = vld [vmem:[%s2059 + $0x30] sm:$0xf]
        %v2752 = vld [vmem:[%s2059 + $0x38] sm:$0xf]
        %v2761 = vcombine.low %v2745, %v2746
        %v2762 = vcombine.low %v2747, %v2748
        %v2763 = vcombine.low %v2749, %v2750
        %v2764 = vcombine.low %v2751, %v2752
        %2769 = vst.msk [vmem:[#allocation5 + $0x18] sm:$0xff] %vm1889, %v2761
        %2770 = vst.msk [vmem:[#allocation5 + $0x40] sm:$0xff] %vm1889, %v2762
        %2771 = vst.msk [vmem:[#allocation5 + $0x68] sm:$0xff] %vm1889, %v2763
        %2772 = vst.msk [vmem:[#allocation5 + $0x90] sm:$0xff] %vm1889, %v2764
        %v2773 = vld [vmem:[%s2059 + $0x1] sm:$0xf]
        %v2774 = vld [vmem:[%s2059 + $0x9] sm:$0xf]
        %v2775 = vld [vmem:[%s2059 + $0x11] sm:$0xf]
        %v2776 = vld [vmem:[%s2059 + $0x19] sm:$0xf]
        %v2777 = vld [vmem:[%s2059 + $0x21] sm:$0xf]
        %v2778 = vld [vmem:[%s2059 + $0x29] sm:$0xf]
        %v2779 = vld [vmem:[%s2059 + $0x31] sm:$0xf]
        %v2780 = vld [vmem:[%s2059 + $0x39] sm:$0xf]
        %v2789 = vcombine.low %v2773, %v2774
        %v2790 = vcombine.low %v2775, %v2776
        %v2791 = vcombine.low %v2777, %v2778
        %v2792 = vcombine.low %v2779, %v2780
        %2793 = vrot.lane.b32.xlu0 %v2789, 64
        %v2794 = vpop.permute.xlu0 %2793
        %2795 = vrot.lane.b32.xlu0 %v2790, 64
        %v2796 = vpop.permute.xlu0 %2795
        %2797 = vrot.lane.b32.xlu0 %v2791, 64
        %v2798 = vpop.permute.xlu0 %2797
        %2799 = vrot.lane.b32.xlu0 %v2792, 64
        %v2800 = vpop.permute.xlu0 %2799
        %2805 = vst.msk [vmem:[#allocation5 + $0x18] sm:$0xff] %vm1926, %v2794
        %2806 = vst.msk [vmem:[#allocation5 + $0x40] sm:$0xff] %vm1926, %v2796
        %2807 = vst.msk [vmem:[#allocation5 + $0x68] sm:$0xff] %vm1926, %v2798
        %2808 = vst.msk [vmem:[#allocation5 + $0x90] sm:$0xff] %vm1926, %v2800
        %v2809 = vld [vmem:[%s2059 + $0x2] sm:$0xf]
        %v2810 = vld [vmem:[%s2059 + $0xa] sm:$0xf]
        %v2811 = vld [vmem:[%s2059 + $0x12] sm:$0xf]
        %v2812 = vld [vmem:[%s2059 + $0x1a] sm:$0xf]
        %v2813 = vld [vmem:[%s2059 + $0x22] sm:$0xf]
        %v2814 = vld [vmem:[%s2059 + $0x2a] sm:$0xf]
        %v2815 = vld [vmem:[%s2059 + $0x32] sm:$0xf]
        %v2816 = vld [vmem:[%s2059 + $0x3a] sm:$0xf]
        %v2825 = vcombine.low %v2809, %v2810
        %v2826 = vcombine.low %v2811, %v2812
        %v2827 = vcombine.low %v2813, %v2814
        %v2828 = vcombine.low %v2815, %v2816
        %2833 = vst.msk [vmem:[#allocation5 + $0x20] sm:$0xff] %vm1889, %v2825
        %2834 = vst.msk [vmem:[#allocation5 + $0x48] sm:$0xff] %vm1889, %v2826
        %2835 = vst.msk [vmem:[#allocation5 + $0x70] sm:$0xff] %vm1889, %v2827
        %2836 = vst.msk [vmem:[#allocation5 + $0x98] sm:$0xff] %vm1889, %v2828
        %v2837 = vld [vmem:[#allocation5] sm:$0xff]
        %v2838 = vld [vmem:[#allocation5 + $0x8] sm:$0xff]
        %v2839 = vld [vmem:[#allocation5 + $0x10] sm:$0xff]
        %v2840 = vld [vmem:[#allocation5 + $0x18] sm:$0xff]
        %v2841 = vld [vmem:[#allocation5 + $0x20] sm:$0xff]
        %v2842 = vld [vmem:[#allocation5 + $0x28] sm:$0xff]
        %v2843 = vld [vmem:[#allocation5 + $0x30] sm:$0xff]
        %v2844 = vld [vmem:[#allocation5 + $0x38] sm:$0xff]
        %v2845 = vld [vmem:[#allocation5 + $0x40] sm:$0xff]
        %v2846 = vld [vmem:[#allocation5 + $0x48] sm:$0xff]
        %v2847 = vld [vmem:[#allocation5 + $0x50] sm:$0xff]
        %v2848 = vld [vmem:[#allocation5 + $0x58] sm:$0xff]
        %v2849 = vld [vmem:[#allocation5 + $0x60] sm:$0xff]
        %v2850 = vld [vmem:[#allocation5 + $0x68] sm:$0xff]
        %v2851 = vld [vmem:[#allocation5 + $0x70] sm:$0xff]
        %v2852 = vld [vmem:[#allocation5 + $0x78] sm:$0xff]
        %v2853 = vld [vmem:[#allocation5 + $0x80] sm:$0xff]
        %v2854 = vld [vmem:[#allocation5 + $0x88] sm:$0xff]
        %v2855 = vld [vmem:[#allocation5 + $0x90] sm:$0xff]
        %v2856 = vld [vmem:[#allocation5 + $0x98] sm:$0xff]
        %v2857 = vld [vmem:[%s3] sm:$0xff]
        %v2858 = vld [vmem:[%s3 + $0x8] sm:$0xff]
        %v2859 = vld [vmem:[%s3 + $0x10] sm:$0xff]
        %v2860 = vld [vmem:[%s3 + $0x18] sm:$0xff]
        %v2861 = vld [vmem:[%s3 + $0x20] sm:$0xff]
        %v2862 = vld [vmem:[%s3 + $0x28] sm:$0xff]
        %v2863 = vld [vmem:[%s3 + $0x30] sm:$0xff]
        %v2864 = vld [vmem:[%s3 + $0x38] sm:$0xff]
        %v2865 = vld [vmem:[%s3 + $0x40] sm:$0xff]
        %v2866 = vld [vmem:[%s3 + $0x48] sm:$0xff]
        %v2867 = vld [vmem:[%s3 + $0x50] sm:$0xff]
        %v2868 = vld [vmem:[%s3 + $0x58] sm:$0xff]
        %v2869 = vld [vmem:[%s3 + $0x60] sm:$0xff]
        %v2870 = vld [vmem:[%s3 + $0x68] sm:$0xff]
        %v2871 = vld [vmem:[%s3 + $0x70] sm:$0xff]
        %v2872 = vld [vmem:[%s3 + $0x78] sm:$0xff]
        %v2873 = vld [vmem:[%s3 + $0x80] sm:$0xff]
        %v2874 = vld [vmem:[%s3 + $0x88] sm:$0xff]
        %v2875 = vld [vmem:[%s3 + $0x90] sm:$0xff]
        %v2876 = vld [vmem:[%s3 + $0x98] sm:$0xff]
        %v2877 = vld [vmem:[%s3 + $0xa0] sm:$0xff]
        %v2878 = vld [vmem:[%s3 + $0xa8] sm:$0xff]
        %v2879 = vld [vmem:[%s3 + $0xb0] sm:$0xff]
        %v2880 = vld [vmem:[%s3 + $0xb8] sm:$0xff]
        %v2881 = vld [vmem:[%s3 + $0xc0] sm:$0xff]
        %v2882 = vld [vmem:[%s3 + $0xc8] sm:$0xff]
        %v2883 = vld [vmem:[%s3 + $0xd0] sm:$0xff]
        %v2884 = vld [vmem:[%s3 + $0xd8] sm:$0xff]
        %v2885 = vld [vmem:[%s3 + $0xe0] sm:$0xff]
        %v2886 = vld [vmem:[%s3 + $0xe8] sm:$0xff]
        %v2887 = vld [vmem:[%s3 + $0xf0] sm:$0xff]
        %v2888 = vld [vmem:[%s3 + $0xf8] sm:$0xff]
        %v2889 = vld [vmem:[%s3 + $0x100] sm:$0xff]
        %v2890 = vld [vmem:[%s3 + $0x108] sm:$0xff]
        %v2891 = vld [vmem:[%s3 + $0x110] sm:$0xff]
        %v2892 = vld [vmem:[%s3 + $0x118] sm:$0xff]
        %v2893 = vld [vmem:[%s3 + $0x120] sm:$0xff]
        %v2894 = vld [vmem:[%s3 + $0x128] sm:$0xff]
        %v2895 = vld [vmem:[%s3 + $0x130] sm:$0xff]
        %v2896 = vld [vmem:[%s3 + $0x138] sm:$0xff]
        %v2897 = vld [vmem:[%s3 + $0x140] sm:$0xff]
        %v2898 = vld [vmem:[%s3 + $0x148] sm:$0xff]
        %v2899 = vld [vmem:[%s3 + $0x150] sm:$0xff]
        %v2900 = vld [vmem:[%s3 + $0x158] sm:$0xff]
        %v2901 = vld [vmem:[%s3 + $0x160] sm:$0xff]
        %v2902 = vld [vmem:[%s3 + $0x168] sm:$0xff]
        %v2903 = vld [vmem:[%s3 + $0x170] sm:$0xff]
        %v2904 = vld [vmem:[%s3 + $0x178] sm:$0xff]
        %v2905 = vld [vmem:[%s3 + $0x180] sm:$0xff]
        %v2906 = vld [vmem:[%s3 + $0x188] sm:$0xff]
        %v2907 = vld [vmem:[%s3 + $0x190] sm:$0xff]
        %v2908 = vld [vmem:[%s3 + $0x198] sm:$0xff]
        %v2909 = vld [vmem:[%s3 + $0x1a0] sm:$0xff]
        %v2910 = vld [vmem:[%s3 + $0x1a8] sm:$0xff]
        %v2911 = vld [vmem:[%s3 + $0x1b0] sm:$0xff]
        %v2912 = vld [vmem:[%s3 + $0x1b8] sm:$0xff]
        %v2913 = vld [vmem:[%s3 + $0x1c0] sm:$0xff]
        %v2914 = vld [vmem:[%s3 + $0x1c8] sm:$0xff]
        %v2915 = vld [vmem:[%s3 + $0x1d0] sm:$0xff]
        %v2916 = vld [vmem:[%s3 + $0x1d8] sm:$0xff]
        %v2917 = vld [vmem:[%s3 + $0x1e0] sm:$0xff]
        %v2918 = vld [vmem:[%s3 + $0x1e8] sm:$0xff]
        %v2919 = vld [vmem:[%s3 + $0x1f0] sm:$0xff]
        %v2920 = vld [vmem:[%s3 + $0x1f8] sm:$0xff]
        %v2921 = vld [vmem:[%s3 + $0x200] sm:$0xff]
        %v2922 = vld [vmem:[%s3 + $0x208] sm:$0xff]
        %v2923 = vld [vmem:[%s3 + $0x210] sm:$0xff]
        %v2924 = vld [vmem:[%s3 + $0x218] sm:$0xff]
        %v2925 = vld [vmem:[%s3 + $0x220] sm:$0xff]
        %v2926 = vld [vmem:[%s3 + $0x228] sm:$0xff]
        %v2927 = vld [vmem:[%s3 + $0x230] sm:$0xff]
        %v2928 = vld [vmem:[%s3 + $0x238] sm:$0xff]
        %v2930 = vsel %vm1889, %v2841, 0
        %v2933 = vsel %vm1889, %v2846, 0
        %v2936 = vsel %vm1889, %v2851, 0
        %v2939 = vsel %vm1889, %v2856, 0
        %2941 = vmatprep.subr.mxu0 0.0
        %2942 = vmatpush1.msra.mxu0 %v2872
        %2943 = vmatprep.subr.mxu0 0.0
        %2944 = vmatpush1.msra.mxu0 %v2871
        %2945 = vmatprep.subr.mxu0 0.0
        %2946 = vmatpush1.msra.mxu0 %v2870
        %2947 = vmatprep.subr.mxu0 0.0
        %2948 = vmatpush1.msra.mxu0 %v2869
        %2949 = vmatprep.subr.mxu0 0.0
        %2950 = vmatpush1.msra.mxu0 %v2868
        %2951 = vmatprep.subr.mxu0 0.0
        %2952 = vmatpush1.msra.mxu0 %v2867
        %2953 = vmatprep.subr.mxu0 0.0
        %2954 = vmatpush1.msra.mxu0 %v2866
        %2955 = vmatprep.subr.mxu0 0.0
        %2956 = vmatpush1.msra.mxu0 %v2865
        %2957 = vmatprep.subr.mxu0 0.0
        %2958 = vmatpush1.msra.mxu0 %v2864
        %2959 = vmatprep.subr.mxu0 0.0
        %2960 = vmatpush1.msra.mxu0 %v2863
        %2961 = vmatprep.subr.mxu0 0.0
        %2962 = vmatpush1.msra.mxu0 %v2862
        %2963 = vmatprep.subr.mxu0 0.0
        %2964 = vmatpush1.msra.mxu0 %v2861
        %2965 = vmatprep.subr.mxu0 0.0
        %2966 = vmatpush1.msra.mxu0 %v2860
        %2967 = vmatprep.subr.mxu0 0.0
        %2968 = vmatpush1.msra.mxu0 %v2859
        %2969 = vmatprep.subr.mxu0 0.0
        %2970 = vmatpush1.msra.mxu0 %v2858
        %2971 = vmatprep.subr.mxu0 0.0
        %2972 = vmatpush1.msra.mxu0 %v2857
        %2973 = vmatprep.subr.mxu0 0.0
        %2974 = vmatpush2.msra.mxu0 %v2888
        %2975 = vmatprep.subr.mxu0 0.0
        %2976 = vmatpush2.msra.mxu0 %v2887
        %2977 = vmatprep.subr.mxu0 0.0
        %2978 = vmatpush2.msra.mxu0 %v2886
        %2979 = vmatprep.subr.mxu0 0.0
        %2980 = vmatpush2.msra.mxu0 %v2885
        %2981 = vmatprep.subr.mxu0 0.0
        %2982 = vmatpush2.msra.mxu0 %v2884
        %2983 = vmatprep.subr.mxu0 0.0
        %2984 = vmatpush2.msra.mxu0 %v2883
        %2985 = vmatprep.subr.mxu0 0.0
        %2986 = vmatpush2.msra.mxu0 %v2882
        %2987 = vmatprep.subr.mxu0 0.0
        %2988 = vmatpush2.msra.mxu0 %v2881
        %2989 = vmatprep.subr.mxu0 0.0
        %2990 = vmatpush2.msra.mxu0 %v2880
        %2991 = vmatprep.subr.mxu0 0.0
        %2992 = vmatpush2.msra.mxu0 %v2879
        %2993 = vmatprep.subr.mxu0 0.0
        %2994 = vmatpush2.msra.mxu0 %v2878
        %2995 = vmatprep.subr.mxu0 0.0
        %2996 = vmatpush2.msra.mxu0 %v2877
        %2997 = vmatprep.subr.mxu0 0.0
        %2998 = vmatpush2.msra.mxu0 %v2876
        %2999 = vmatprep.subr.mxu0 0.0
        %3000 = vmatpush2.msra.mxu0 %v2875
        %3001 = vmatprep.subr.mxu0 0.0
        %3002 = vmatpush2.msra.mxu0 %v2874
        %3003 = vmatprep.subr.mxu0 0.0
        %3004 = vmatpush2.msra.mxu0 %v2873
        %3005 = vmatprep.mubr.f32.mxu0 %v2838
        %3006 = vmatmul.mubr.f32.gmra.mxu0 %v2837
        %v3007 = vpop.f32.mrf.mxu0
        %v3008 = vadd.f32 0.0, %v3007
        %v3009 = vpop.f32.mrf.mxu0
        %3010 = vmatprep.mubr.f32.mxu0 %v2843
        %3011 = vmatmul.mubr.f32.gmra.mxu0 %v2842
        %v3012 = vpop.f32.mrf.mxu0
        %v3013 = vadd.f32 0.0, %v3012
        %v3014 = vpop.f32.mrf.mxu0
        %3015 = vmatprep.mubr.f32.mxu0 %v2848
        %3016 = vmatmul.mubr.f32.gmra.mxu0 %v2847
        %v3017 = vpop.f32.mrf.mxu0
        %v3018 = vadd.f32 0.0, %v3017
        %v3019 = vpop.f32.mrf.mxu0
        %3020 = vmatprep.mubr.f32.mxu0 %v2853
        %3021 = vmatmul.mubr.f32.gmra.mxu0 %v2852
        %v3022 = vpop.f32.mrf.mxu0
        %v3023 = vadd.f32 0.0, %v3022
        %v3024 = vpop.f32.mrf.mxu0
        %3025 = vdwg.mxu0
        %3026 = vmatprep.subr.mxu0 0.0
        %3027 = vmatpush1.msra.mxu0 %v2904
        %3028 = vmatprep.subr.mxu0 0.0
        %3029 = vmatpush1.msra.mxu0 %v2903
        %3030 = vmatprep.subr.mxu0 0.0
        %3031 = vmatpush1.msra.mxu0 %v2902
        %3032 = vmatprep.subr.mxu0 0.0
        %3033 = vmatpush1.msra.mxu0 %v2901
        %3034 = vmatprep.subr.mxu0 0.0
        %3035 = vmatpush1.msra.mxu0 %v2900
        %3036 = vmatprep.subr.mxu0 0.0
        %3037 = vmatpush1.msra.mxu0 %v2899
        %3038 = vmatprep.subr.mxu0 0.0
        %3039 = vmatpush1.msra.mxu0 %v2898
        %3040 = vmatprep.subr.mxu0 0.0
        %3041 = vmatpush1.msra.mxu0 %v2897
        %3042 = vmatprep.subr.mxu0 0.0
        %3043 = vmatpush1.msra.mxu0 %v2896
        %3044 = vmatprep.subr.mxu0 0.0
        %3045 = vmatpush1.msra.mxu0 %v2895
        %3046 = vmatprep.subr.mxu0 0.0
        %3047 = vmatpush1.msra.mxu0 %v2894
        %3048 = vmatprep.subr.mxu0 0.0
        %3049 = vmatpush1.msra.mxu0 %v2893
        %3050 = vmatprep.subr.mxu0 0.0
        %3051 = vmatpush1.msra.mxu0 %v2892
        %3052 = vmatprep.subr.mxu0 0.0
        %3053 = vmatpush1.msra.mxu0 %v2891
        %3054 = vmatprep.subr.mxu0 0.0
        %3055 = vmatpush1.msra.mxu0 %v2890
        %3056 = vmatprep.subr.mxu0 0.0
        %3057 = vmatpush1.msra.mxu0 %v2889
        %3058 = vmatprep.subr.mxu0 0.0
        %3059 = vmatpush2.msra.mxu0 %v2920
        %3060 = vmatprep.subr.mxu0 0.0
        %3061 = vmatpush2.msra.mxu0 %v2919
        %3062 = vmatprep.subr.mxu0 0.0
        %3063 = vmatpush2.msra.mxu0 %v2918
        %3064 = vmatprep.subr.mxu0 0.0
        %3065 = vmatpush2.msra.mxu0 %v2917
        %3066 = vmatprep.subr.mxu0 0.0
        %3067 = vmatpush2.msra.mxu0 %v2916
        %3068 = vmatprep.subr.mxu0 0.0
        %3069 = vmatpush2.msra.mxu0 %v2915
        %3070 = vmatprep.subr.mxu0 0.0
        %3071 = vmatpush2.msra.mxu0 %v2914
        %3072 = vmatprep.subr.mxu0 0.0
        %3073 = vmatpush2.msra.mxu0 %v2913
        %3074 = vmatprep.subr.mxu0 0.0
        %3075 = vmatpush2.msra.mxu0 %v2912
        %3076 = vmatprep.subr.mxu0 0.0
        %3077 = vmatpush2.msra.mxu0 %v2911
        %3078 = vmatprep.subr.mxu0 0.0
        %3079 = vmatpush2.msra.mxu0 %v2910
        %3080 = vmatprep.subr.mxu0 0.0
        %3081 = vmatpush2.msra.mxu0 %v2909
        %3082 = vmatprep.subr.mxu0 0.0
        %3083 = vmatpush2.msra.mxu0 %v2908
        %3084 = vmatprep.subr.mxu0 0.0
        %3085 = vmatpush2.msra.mxu0 %v2907
        %3086 = vmatprep.subr.mxu0 0.0
        %3087 = vmatpush2.msra.mxu0 %v2906
        %3088 = vmatprep.subr.mxu0 0.0
        %3089 = vmatpush2.msra.mxu0 %v2905
        %3090 = vmatprep.mubr.f32.mxu0 %v2840
        %3091 = vmatmul.mubr.f32.gmra.mxu0 %v2839
        %v3092 = vpop.f32.mrf.mxu0
        %v3093 = vadd.f32 %v3008, %v3092
        %v3094 = vpop.f32.mrf.mxu0
        %3095 = vmatprep.mubr.f32.mxu0 %v2845
        %3096 = vmatmul.mubr.f32.gmra.mxu0 %v2844
        %v3097 = vpop.f32.mrf.mxu0
        %v3098 = vadd.f32 %v3013, %v3097
        %v3099 = vpop.f32.mrf.mxu0
        %3100 = vmatprep.mubr.f32.mxu0 %v2850
        %3101 = vmatmul.mubr.f32.gmra.mxu0 %v2849
        %v3102 = vpop.f32.mrf.mxu0
        %v3103 = vadd.f32 %v3018, %v3102
        %v3104 = vpop.f32.mrf.mxu0
        %3105 = vmatprep.mubr.f32.mxu0 %v2855
        %3106 = vmatmul.mubr.f32.gmra.mxu0 %v2854
        %v3107 = vpop.f32.mrf.mxu0
        %v3108 = vadd.f32 %v3023, %v3107
        %v3109 = vpop.f32.mrf.mxu0
        %3110 = vdwg.mxu0
        %3111 = vmatprep.subr.mxu0 0.0
        %3112 = vmatpush1.msra.mxu0 0.0
        %3113 = vmatprep.subr.mxu0 0.0
        %3114 = vmatpush1.msra.mxu0 0.0
        %3115 = vmatprep.subr.mxu0 0.0
        %3116 = vmatpush1.msra.mxu0 0.0
        %3117 = vmatprep.subr.mxu0 0.0
        %3118 = vmatpush1.msra.mxu0 0.0
        %3119 = vmatprep.subr.mxu0 0.0
        %3120 = vmatpush1.msra.mxu0 0.0
        %3121 = vmatprep.subr.mxu0 0.0
        %3122 = vmatpush1.msra.mxu0 0.0
        %3123 = vmatprep.subr.mxu0 0.0
        %3124 = vmatpush1.msra.mxu0 0.0
        %3125 = vmatprep.subr.mxu0 0.0
        %3126 = vmatpush1.msra.mxu0 0.0
        %3127 = vmatprep.subr.mxu0 0.0
        %3128 = vmatpush1.msra.mxu0 %v2928
        %3129 = vmatprep.subr.mxu0 0.0
        %3130 = vmatpush1.msra.mxu0 %v2927
        %3131 = vmatprep.subr.mxu0 0.0
        %3132 = vmatpush1.msra.mxu0 %v2926
        %3133 = vmatprep.subr.mxu0 0.0
        %3134 = vmatpush1.msra.mxu0 %v2925
        %3135 = vmatprep.subr.mxu0 0.0
        %3136 = vmatpush1.msra.mxu0 %v2924
        %3137 = vmatprep.subr.mxu0 0.0
        %3138 = vmatpush1.msra.mxu0 %v2923
        %3139 = vmatprep.subr.mxu0 0.0
        %3140 = vmatpush1.msra.mxu0 %v2922
        %3141 = vmatprep.subr.mxu0 0.0
        %3142 = vmatpush1.msra.mxu0 %v2921
        %3143 = vmatprep.subr.mxu0 0.0
        %3144 = vmatpush2.msra.mxu0 0.0
        %3145 = vmatprep.subr.mxu0 0.0
        %3146 = vmatpush2.msra.mxu0 0.0
        %3147 = vmatprep.subr.mxu0 0.0
        %3148 = vmatpush2.msra.mxu0 0.0
        %3149 = vmatprep.subr.mxu0 0.0
        %3150 = vmatpush2.msra.mxu0 0.0
        %3151 = vmatprep.subr.mxu0 0.0
        %3152 = vmatpush2.msra.mxu0 0.0
        %3153 = vmatprep.subr.mxu0 0.0
        %3154 = vmatpush2.msra.mxu0 0.0
        %3155 = vmatprep.subr.mxu0 0.0
        %3156 = vmatpush2.msra.mxu0 0.0
        %3157 = vmatprep.subr.mxu0 0.0
        %3158 = vmatpush2.msra.mxu0 0.0
        %3159 = vmatprep.subr.mxu0 0.0
        %3160 = vmatpush2.msra.mxu0 0.0
        %3161 = vmatprep.subr.mxu0 0.0
        %3162 = vmatpush2.msra.mxu0 0.0
        %3163 = vmatprep.subr.mxu0 0.0
        %3164 = vmatpush2.msra.mxu0 0.0
        %3165 = vmatprep.subr.mxu0 0.0
        %3166 = vmatpush2.msra.mxu0 0.0
        %3167 = vmatprep.subr.mxu0 0.0
        %3168 = vmatpush2.msra.mxu0 0.0
        %3169 = vmatprep.subr.mxu0 0.0
        %3170 = vmatpush2.msra.mxu0 0.0
        %3171 = vmatprep.subr.mxu0 0.0
        %3172 = vmatpush2.msra.mxu0 0.0
        %3173 = vmatprep.subr.mxu0 0.0
        %3174 = vmatpush2.msra.mxu0 0.0
        %3175 = vmatprep.mubr.f32.mxu0 0.0
        %3176 = vmatmul.mubr.f32.gmra.mxu0 %v2930
        %v3177 = vpop.f32.mrf.mxu0
        %v3178 = vadd.f32 %v3093, %v3177
        %v3179 = vpop.f32.mrf.mxu0
        %3180 = vmatprep.mubr.f32.mxu0 0.0
        %3181 = vmatmul.mubr.f32.gmra.mxu0 %v2933
        %v3182 = vpop.f32.mrf.mxu0
        %v3183 = vadd.f32 %v3098, %v3182
        %v3184 = vpop.f32.mrf.mxu0
        %3185 = vmatprep.mubr.f32.mxu0 0.0
        %3186 = vmatmul.mubr.f32.gmra.mxu0 %v2936
        %v3187 = vpop.f32.mrf.mxu0
        %v3188 = vadd.f32 %v3103, %v3187
        %v3189 = vpop.f32.mrf.mxu0
        %3190 = vmatprep.mubr.f32.mxu0 0.0
        %3191 = vmatmul.mubr.f32.gmra.mxu0 %v2939
        %v3192 = vpop.f32.mrf.mxu0
        %v3193 = vadd.f32 %v3108, %v3192
        %v3194 = vpop.f32.mrf.mxu0
        %3195 = vdwg.mxu0
        %v3196 = vld [vmem:[%s4 + $0x4] sm:$0x1]
        %v3197 = vlaneseq
        %v3198 = vshrl.u32 %v3197, 7
        %v3199 = vsub.s32 0, %v3198
        %v3200 = vrot.slane %v3196, %v3199
        %v3201 = vmul.f32 %v3178, %v3200
        %v3202 = vmul.f32 %v3183, %v3200
        %v3203 = vmul.f32 %v3188, %v3200
        %v3204 = vmul.f32 %v3193, %v3200
        %v3205 = vld [vmem:[%s4 + $0x5] sm:$0x1]
        %v3206 = vlaneseq
        %v3207 = vshrl.u32 %v3206, 7
        %v3208 = vsub.s32 0, %v3207
        %v3209 = vrot.slane %v3205, %v3208
        %v3210 = vadd.f32 %v3201, %v3209
        %v3211 = vadd.f32 %v3202, %v3209
        %v3212 = vadd.f32 %v3203, %v3209
        %v3213 = vadd.f32 %v3204, %v3209
        %v3214 = vmax.f32 %v3210, 0.0
        %v3215 = vmax.f32 %v3211, 0.0
        %v3216 = vmax.f32 %v3212, 0.0
        %v3217 = vmax.f32 %v3213, 0.0
        %v3218 = vlaneseq
        %vm3219 = vcmp.ge.s32.totalorder %v3218, 0
        %vm3220 = vcmp.lt.s32.totalorder %v3218, 64
        %vm3221 = vmand %vm3219, %vm3220
        %3222 = vst.msk [vmem:[#allocation6] sm:$0x1] %vm3221, %v3214
        %v3225 = vunpack.c.l.s4 1966171168
        %v3226 = vunpack.c.0.s8 %v3225
        %v3227 = vlaneseq
        %v3228 = vshrl.u32 %v3227, 7
        %v3229 = vsub.s32 %v3226, %v3228
        %v3230 = vrot.slane %v3214, %v3229
        %v3231 = vcombine.high %v3230, %v3230
        %v3233 = vunpack.c.l.s4 1966171168
        %v3234 = vunpack.c.0.s8 %v3233
        %v3235 = vlaneseq
        %v3236 = vshrl.u32 %v3235, 7
        %v3237 = vsub.s32 %v3234, %v3236
        %v3238 = vrot.slane %v3230, %v3237
        %v3240 = vunpack.c.l.s4 1966171168
        %v3241 = vunpack.c.0.s8 %v3240
        %v3242 = vlaneseq
        %v3243 = vshrl.u32 %v3242, 7
        %v3244 = vsub.s32 %v3241, %v3243
        %v3245 = vrot.slane %v3231, %v3244
        %3246 = vrot.lane.b32.xlu0 %v3245, 64
        %v3247 = vpop.permute.xlu0 %3246
        %vm3249 = vcmp.ge.s32.totalorder %v3218, 64
        %vm3250 = vcmp.lt.s32.totalorder %v3218, 128
        %vm3251 = vmand %vm3249, %vm3250
        %3252 = vst.msk [vmem:[#allocation6] sm:$0x1] %vm3251, %v3247
        %v3253 = vcombine.high %v3238, %v3238
        %3255 = vst.msk [vmem:[#allocation6 + $0x1] sm:$0x1] %vm3221, %v3253
        %v3256 = vcombine.high %v3245, %v3245
        %3257 = vrot.lane.b32.xlu0 %v3256, 64
        %v3258 = vpop.permute.xlu0 %3257
        %3260 = vst.msk [vmem:[#allocation6 + $0x1] sm:$0x1] %vm3251, %v3258
        %v3261 = vcombine.high %v3214, %v3214
        %v3263 = vunpack.c.l.s4 1966171168
        %v3264 = vunpack.c.0.s8 %v3263
        %v3265 = vlaneseq
        %v3266 = vshrl.u32 %v3265, 7
        %v3267 = vsub.s32 %v3264, %v3266
        %v3268 = vrot.slane %v3261, %v3267
        %v3270 = vunpack.c.l.s4 1966171168
        %v3271 = vunpack.c.0.s8 %v3270
        %v3272 = vlaneseq
        %v3273 = vshrl.u32 %v3272, 7
        %v3274 = vsub.s32 %v3271, %v3273
        %v3275 = vrot.slane %v3268, %v3274
        %3277 = vst.msk [vmem:[#allocation6 + $0x2] sm:$0x1] %vm3221, %v3275
        %v3278 = vcombine.high %v3268, %v3268
        %v3280 = vunpack.c.l.s4 1966171168
        %v3281 = vunpack.c.0.s8 %v3280
        %v3282 = vlaneseq
        %v3283 = vshrl.u32 %v3282, 7
        %v3284 = vsub.s32 %v3281, %v3283
        %v3285 = vrot.slane %v3278, %v3284
        %3286 = vrot.lane.b32.xlu0 %v3285, 64
        %v3287 = vpop.permute.xlu0 %3286
        %3289 = vst.msk [vmem:[#allocation6 + $0x2] sm:$0x1] %vm3251, %v3287
        %v3290 = vcombine.high %v3275, %v3275
        %3292 = vst.msk [vmem:[#allocation6 + $0x3] sm:$0x1] %vm3221, %v3290
        %v3293 = vcombine.high %v3285, %v3285
        %3294 = vrot.lane.b32.xlu0 %v3293, 64
        %v3295 = vpop.permute.xlu0 %3294
        %3297 = vst.msk [vmem:[#allocation6 + $0x3] sm:$0x1] %vm3251, %v3295
        %3298 = vst.msk [vmem:[#allocation6 + $0x4] sm:$0x1] %vm3221, %v3215
        %v3301 = vunpack.c.l.s4 1966171168
        %v3302 = vunpack.c.0.s8 %v3301
        %v3303 = vlaneseq
        %v3304 = vshrl.u32 %v3303, 7
        %v3305 = vsub.s32 %v3302, %v3304
        %v3306 = vrot.slane %v3215, %v3305
        %v3307 = vcombine.high %v3306, %v3306
        %v3309 = vunpack.c.l.s4 1966171168
        %v3310 = vunpack.c.0.s8 %v3309
        %v3311 = vlaneseq
        %v3312 = vshrl.u32 %v3311, 7
        %v3313 = vsub.s32 %v3310, %v3312
        %v3314 = vrot.slane %v3306, %v3313
        %v3316 = vunpack.c.l.s4 1966171168
        %v3317 = vunpack.c.0.s8 %v3316
        %v3318 = vlaneseq
        %v3319 = vshrl.u32 %v3318, 7
        %v3320 = vsub.s32 %v3317, %v3319
        %v3321 = vrot.slane %v3307, %v3320
        %3322 = vrot.lane.b32.xlu0 %v3321, 64
        %v3323 = vpop.permute.xlu0 %3322
        %3325 = vst.msk [vmem:[#allocation6 + $0x4] sm:$0x1] %vm3251, %v3323
        %v3326 = vcombine.high %v3314, %v3314
        %3328 = vst.msk [vmem:[#allocation6 + $0x5] sm:$0x1] %vm3221, %v3326
        %v3329 = vcombine.high %v3321, %v3321
        %3330 = vrot.lane.b32.xlu0 %v3329, 64
        %v3331 = vpop.permute.xlu0 %3330
        %3333 = vst.msk [vmem:[#allocation6 + $0x5] sm:$0x1] %vm3251, %v3331
        %v3334 = vcombine.high %v3215, %v3215
        %v3336 = vunpack.c.l.s4 1966171168
        %v3337 = vunpack.c.0.s8 %v3336
        %v3338 = vlaneseq
        %v3339 = vshrl.u32 %v3338, 7
        %v3340 = vsub.s32 %v3337, %v3339
        %v3341 = vrot.slane %v3334, %v3340
        %v3343 = vunpack.c.l.s4 1966171168
        %v3344 = vunpack.c.0.s8 %v3343
        %v3345 = vlaneseq
        %v3346 = vshrl.u32 %v3345, 7
        %v3347 = vsub.s32 %v3344, %v3346
        %v3348 = vrot.slane %v3341, %v3347
        %3350 = vst.msk [vmem:[#allocation6 + $0x6] sm:$0x1] %vm3221, %v3348
        %v3351 = vcombine.high %v3341, %v3341
        %v3353 = vunpack.c.l.s4 1966171168
        %v3354 = vunpack.c.0.s8 %v3353
        %v3355 = vlaneseq
        %v3356 = vshrl.u32 %v3355, 7
        %v3357 = vsub.s32 %v3354, %v3356
        %v3358 = vrot.slane %v3351, %v3357
        %3359 = vrot.lane.b32.xlu0 %v3358, 64
        %v3360 = vpop.permute.xlu0 %3359
        %3362 = vst.msk [vmem:[#allocation6 + $0x6] sm:$0x1] %vm3251, %v3360
        %v3363 = vcombine.high %v3348, %v3348
        %3365 = vst.msk [vmem:[#allocation6 + $0x7] sm:$0x1] %vm3221, %v3363
        %v3366 = vcombine.high %v3358, %v3358
        %3367 = vrot.lane.b32.xlu0 %v3366, 64
        %v3368 = vpop.permute.xlu0 %3367
        %3370 = vst.msk [vmem:[#allocation6 + $0x7] sm:$0x1] %vm3251, %v3368
        %3371 = vst.msk [vmem:[#allocation6 + $0x8] sm:$0x1] %vm3221, %v3216
        %v3374 = vunpack.c.l.s4 1966171168
        %v3375 = vunpack.c.0.s8 %v3374
        %v3376 = vlaneseq
        %v3377 = vshrl.u32 %v3376, 7
        %v3378 = vsub.s32 %v3375, %v3377
        %v3379 = vrot.slane %v3216, %v3378
        %v3380 = vcombine.high %v3379, %v3379
        %v3382 = vunpack.c.l.s4 1966171168
        %v3383 = vunpack.c.0.s8 %v3382
        %v3384 = vlaneseq
        %v3385 = vshrl.u32 %v3384, 7
        %v3386 = vsub.s32 %v3383, %v3385
        %v3387 = vrot.slane %v3379, %v3386
        %v3389 = vunpack.c.l.s4 1966171168
        %v3390 = vunpack.c.0.s8 %v3389
        %v3391 = vlaneseq
        %v3392 = vshrl.u32 %v3391, 7
        %v3393 = vsub.s32 %v3390, %v3392
        %v3394 = vrot.slane %v3380, %v3393
        %3395 = vrot.lane.b32.xlu0 %v3394, 64
        %v3396 = vpop.permute.xlu0 %3395
        %3398 = vst.msk [vmem:[#allocation6 + $0x8] sm:$0x1] %vm3251, %v3396
        %v3399 = vcombine.high %v3387, %v3387
        %3401 = vst.msk [vmem:[#allocation6 + $0x9] sm:$0x1] %vm3221, %v3399
        %v3402 = vcombine.high %v3394, %v3394
        %3403 = vrot.lane.b32.xlu0 %v3402, 64
        %v3404 = vpop.permute.xlu0 %3403
        %3406 = vst.msk [vmem:[#allocation6 + $0x9] sm:$0x1] %vm3251, %v3404
        %v3407 = vcombine.high %v3216, %v3216
        %v3409 = vunpack.c.l.s4 1966171168
        %v3410 = vunpack.c.0.s8 %v3409
        %v3411 = vlaneseq
        %v3412 = vshrl.u32 %v3411, 7
        %v3413 = vsub.s32 %v3410, %v3412
        %v3414 = vrot.slane %v3407, %v3413
        %v3416 = vunpack.c.l.s4 1966171168
        %v3417 = vunpack.c.0.s8 %v3416
        %v3418 = vlaneseq
        %v3419 = vshrl.u32 %v3418, 7
        %v3420 = vsub.s32 %v3417, %v3419
        %v3421 = vrot.slane %v3414, %v3420
        %3423 = vst.msk [vmem:[#allocation6 + $0xa] sm:$0x1] %vm3221, %v3421
        %v3424 = vcombine.high %v3414, %v3414
        %v3426 = vunpack.c.l.s4 1966171168
        %v3427 = vunpack.c.0.s8 %v3426
        %v3428 = vlaneseq
        %v3429 = vshrl.u32 %v3428, 7
        %v3430 = vsub.s32 %v3427, %v3429
        %v3431 = vrot.slane %v3424, %v3430
        %3432 = vrot.lane.b32.xlu0 %v3431, 64
        %v3433 = vpop.permute.xlu0 %3432
        %3435 = vst.msk [vmem:[#allocation6 + $0xa] sm:$0x1] %vm3251, %v3433
        %v3436 = vcombine.high %v3421, %v3421
        %3438 = vst.msk [vmem:[#allocation6 + $0xb] sm:$0x1] %vm3221, %v3436
        %v3439 = vcombine.high %v3431, %v3431
        %3440 = vrot.lane.b32.xlu0 %v3439, 64
        %v3441 = vpop.permute.xlu0 %3440
        %3443 = vst.msk [vmem:[#allocation6 + $0xb] sm:$0x1] %vm3251, %v3441
        %3444 = vst.msk [vmem:[#allocation6 + $0xc] sm:$0x1] %vm3221, %v3217
        %v3447 = vunpack.c.l.s4 1966171168
        %v3448 = vunpack.c.0.s8 %v3447
        %v3449 = vlaneseq
        %v3450 = vshrl.u32 %v3449, 7
        %v3451 = vsub.s32 %v3448, %v3450
        %v3452 = vrot.slane %v3217, %v3451
        %v3453 = vcombine.high %v3452, %v3452
        %v3455 = vunpack.c.l.s4 1966171168
        %v3456 = vunpack.c.0.s8 %v3455
        %v3457 = vlaneseq
        %v3458 = vshrl.u32 %v3457, 7
        %v3459 = vsub.s32 %v3456, %v3458
        %v3460 = vrot.slane %v3452, %v3459
        %v3462 = vunpack.c.l.s4 1966171168
        %v3463 = vunpack.c.0.s8 %v3462
        %v3464 = vlaneseq
        %v3465 = vshrl.u32 %v3464, 7
        %v3466 = vsub.s32 %v3463, %v3465
        %v3467 = vrot.slane %v3453, %v3466
        %3468 = vrot.lane.b32.xlu0 %v3467, 64
        %v3469 = vpop.permute.xlu0 %3468
        %3471 = vst.msk [vmem:[#allocation6 + $0xc] sm:$0x1] %vm3251, %v3469
        %v3472 = vcombine.high %v3460, %v3460
        %3474 = vst.msk [vmem:[#allocation6 + $0xd] sm:$0x1] %vm3221, %v3472
        %v3475 = vcombine.high %v3467, %v3467
        %3476 = vrot.lane.b32.xlu0 %v3475, 64
        %v3477 = vpop.permute.xlu0 %3476
        %3479 = vst.msk [vmem:[#allocation6 + $0xd] sm:$0x1] %vm3251, %v3477
        %v3480 = vcombine.high %v3217, %v3217
        %v3482 = vunpack.c.l.s4 1966171168
        %v3483 = vunpack.c.0.s8 %v3482
        %v3484 = vlaneseq
        %v3485 = vshrl.u32 %v3484, 7
        %v3486 = vsub.s32 %v3483, %v3485
        %v3487 = vrot.slane %v3480, %v3486
        %v3489 = vunpack.c.l.s4 1966171168
        %v3490 = vunpack.c.0.s8 %v3489
        %v3491 = vlaneseq
        %v3492 = vshrl.u32 %v3491, 7
        %v3493 = vsub.s32 %v3490, %v3492
        %v3494 = vrot.slane %v3487, %v3493
        %3496 = vst.msk [vmem:[#allocation6 + $0xe] sm:$0x1] %vm3221, %v3494
        %v3497 = vcombine.high %v3487, %v3487
        %v3499 = vunpack.c.l.s4 1966171168
        %v3500 = vunpack.c.0.s8 %v3499
        %v3501 = vlaneseq
        %v3502 = vshrl.u32 %v3501, 7
        %v3503 = vsub.s32 %v3500, %v3502
        %v3504 = vrot.slane %v3497, %v3503
        %3505 = vrot.lane.b32.xlu0 %v3504, 64
        %v3506 = vpop.permute.xlu0 %3505
        %3508 = vst.msk [vmem:[#allocation6 + $0xe] sm:$0x1] %vm3251, %v3506
        %v3509 = vcombine.high %v3494, %v3494
        %3511 = vst.msk [vmem:[#allocation6 + $0xf] sm:$0x1] %vm3221, %v3509
        %v3512 = vcombine.high %v3504, %v3504
        %3513 = vrot.lane.b32.xlu0 %v3512, 64
        %v3514 = vpop.permute.xlu0 %3513
        %3516 = vst.msk [vmem:[#allocation6 + $0xf] sm:$0x1] %vm3251, %v3514
        %v3517 = vld [vmem:[#allocation6] sm:$0xff]
        %v3518 = vld [vmem:[#allocation6 + $0x8] sm:$0xff]
        %v3519 = vld [vmem:[%s6] sm:$0xff]
        %v3520 = vld [vmem:[%s6 + $0x8] sm:$0xff]
        %v3521 = vld [vmem:[%s6 + $0x10] sm:$0xff]
        %v3522 = vld [vmem:[%s6 + $0x18] sm:$0xff]
        %v3523 = vld [vmem:[%s6 + $0x20] sm:$0xff]
        %v3524 = vld [vmem:[%s6 + $0x28] sm:$0xff]
        %v3525 = vld [vmem:[%s6 + $0x30] sm:$0xff]
        %v3526 = vld [vmem:[%s6 + $0x38] sm:$0xff]
        %v3527 = vld [vmem:[%s6 + $0x40] sm:$0xff]
        %v3528 = vld [vmem:[%s6 + $0x48] sm:$0xff]
        %v3529 = vld [vmem:[%s6 + $0x50] sm:$0xff]
        %v3530 = vld [vmem:[%s6 + $0x58] sm:$0xff]
        %v3531 = vld [vmem:[%s6 + $0x60] sm:$0xff]
        %v3532 = vld [vmem:[%s6 + $0x68] sm:$0xff]
        %v3533 = vld [vmem:[%s6 + $0x70] sm:$0xff]
        %v3534 = vld [vmem:[%s6 + $0x78] sm:$0xff]
        %v3535 = vld [vmem:[%s6 + $0x80] sm:$0xff]
        %v3536 = vld [vmem:[%s6 + $0x88] sm:$0xff]
        %v3537 = vld [vmem:[%s6 + $0x90] sm:$0xff]
        %v3538 = vld [vmem:[%s6 + $0x98] sm:$0xff]
        %v3539 = vld [vmem:[%s6 + $0xa0] sm:$0xff]
        %v3540 = vld [vmem:[%s6 + $0xa8] sm:$0xff]
        %v3541 = vld [vmem:[%s6 + $0xb0] sm:$0xff]
        %v3542 = vld [vmem:[%s6 + $0xb8] sm:$0xff]
        %v3543 = vld [vmem:[%s6 + $0xc0] sm:$0xff]
        %v3544 = vld [vmem:[%s6 + $0xc8] sm:$0xff]
        %v3545 = vld [vmem:[%s6 + $0xd0] sm:$0xff]
        %v3546 = vld [vmem:[%s6 + $0xd8] sm:$0xff]
        %v3547 = vld [vmem:[%s6 + $0xe0] sm:$0xff]
        %v3548 = vld [vmem:[%s6 + $0xe8] sm:$0xff]
        %v3549 = vld [vmem:[%s6 + $0xf0] sm:$0xff]
        %v3550 = vld [vmem:[%s6 + $0xf8] sm:$0xff]
        %v3551 = vld [vmem:[%s6 + $0x100] sm:$0xff]
        %v3552 = vld [vmem:[%s6 + $0x108] sm:$0xff]
        %v3553 = vld [vmem:[%s6 + $0x110] sm:$0xff]
        %v3554 = vld [vmem:[%s6 + $0x118] sm:$0xff]
        %v3555 = vld [vmem:[%s6 + $0x120] sm:$0xff]
        %v3556 = vld [vmem:[%s6 + $0x128] sm:$0xff]
        %v3557 = vld [vmem:[%s6 + $0x130] sm:$0xff]
        %v3558 = vld [vmem:[%s6 + $0x138] sm:$0xff]
        %v3559 = vld [vmem:[%s6 + $0x140] sm:$0xff]
        %v3560 = vld [vmem:[%s6 + $0x148] sm:$0xff]
        %v3561 = vld [vmem:[%s6 + $0x150] sm:$0xff]
        %v3562 = vld [vmem:[%s6 + $0x158] sm:$0xff]
        %v3563 = vld [vmem:[%s6 + $0x160] sm:$0xff]
        %v3564 = vld [vmem:[%s6 + $0x168] sm:$0xff]
        %v3565 = vld [vmem:[%s6 + $0x170] sm:$0xff]
        %v3566 = vld [vmem:[%s6 + $0x178] sm:$0xff]
        %v3567 = vld [vmem:[%s6 + $0x180] sm:$0xff]
        %v3568 = vld [vmem:[%s6 + $0x188] sm:$0xff]
        %v3569 = vld [vmem:[%s6 + $0x190] sm:$0xff]
        %v3570 = vld [vmem:[%s6 + $0x198] sm:$0xff]
        %v3571 = vld [vmem:[%s6 + $0x1a0] sm:$0xff]
        %v3572 = vld [vmem:[%s6 + $0x1a8] sm:$0xff]
        %v3573 = vld [vmem:[%s6 + $0x1b0] sm:$0xff]
        %v3574 = vld [vmem:[%s6 + $0x1b8] sm:$0xff]
        %v3575 = vld [vmem:[%s6 + $0x1c0] sm:$0xff]
        %v3576 = vld [vmem:[%s6 + $0x1c8] sm:$0xff]
        %v3577 = vld [vmem:[%s6 + $0x1d0] sm:$0xff]
        %v3578 = vld [vmem:[%s6 + $0x1d8] sm:$0xff]
        %v3579 = vld [vmem:[%s6 + $0x1e0] sm:$0xff]
        %v3580 = vld [vmem:[%s6 + $0x1e8] sm:$0xff]
        %v3581 = vld [vmem:[%s6 + $0x1f0] sm:$0xff]
        %v3582 = vld [vmem:[%s6 + $0x1f8] sm:$0xff]
        %v3583 = vld [vmem:[%s6 + $0x200] sm:$0xff]
        %v3584 = vld [vmem:[%s6 + $0x208] sm:$0xff]
        %v3585 = vld [vmem:[%s6 + $0x210] sm:$0xff]
        %v3586 = vld [vmem:[%s6 + $0x218] sm:$0xff]
        %v3587 = vld [vmem:[%s6 + $0x220] sm:$0xff]
        %v3588 = vld [vmem:[%s6 + $0x228] sm:$0xff]
        %v3589 = vld [vmem:[%s6 + $0x230] sm:$0xff]
        %v3590 = vld [vmem:[%s6 + $0x238] sm:$0xff]
        %v3591 = vld [vmem:[%s6 + $0x240] sm:$0xff]
        %v3592 = vld [vmem:[%s6 + $0x248] sm:$0xff]
        %v3593 = vld [vmem:[%s6 + $0x250] sm:$0xff]
        %v3594 = vld [vmem:[%s6 + $0x258] sm:$0xff]
        %v3595 = vld [vmem:[%s6 + $0x260] sm:$0xff]
        %v3596 = vld [vmem:[%s6 + $0x268] sm:$0xff]
        %v3597 = vld [vmem:[%s6 + $0x270] sm:$0xff]
        %v3598 = vld [vmem:[%s6 + $0x278] sm:$0xff]
        %v3599 = vld [vmem:[%s6 + $0x280] sm:$0xff]
        %v3600 = vld [vmem:[%s6 + $0x288] sm:$0xff]
        %v3601 = vld [vmem:[%s6 + $0x290] sm:$0xff]
        %v3602 = vld [vmem:[%s6 + $0x298] sm:$0xff]
        %v3603 = vld [vmem:[%s6 + $0x2a0] sm:$0xff]
        %v3604 = vld [vmem:[%s6 + $0x2a8] sm:$0xff]
        %v3605 = vld [vmem:[%s6 + $0x2b0] sm:$0xff]
        %v3606 = vld [vmem:[%s6 + $0x2b8] sm:$0xff]
        %v3607 = vld [vmem:[%s6 + $0x2c0] sm:$0xff]
        %v3608 = vld [vmem:[%s6 + $0x2c8] sm:$0xff]
        %v3609 = vld [vmem:[%s6 + $0x2d0] sm:$0xff]
        %v3610 = vld [vmem:[%s6 + $0x2d8] sm:$0xff]
        %v3611 = vld [vmem:[%s6 + $0x2e0] sm:$0xff]
        %v3612 = vld [vmem:[%s6 + $0x2e8] sm:$0xff]
        %v3613 = vld [vmem:[%s6 + $0x2f0] sm:$0xff]
        %v3614 = vld [vmem:[%s6 + $0x2f8] sm:$0xff]
        %v3615 = vld [vmem:[%s6 + $0x300] sm:$0xff]
        %v3616 = vld [vmem:[%s6 + $0x308] sm:$0xff]
        %v3617 = vld [vmem:[%s6 + $0x310] sm:$0xff]
        %v3618 = vld [vmem:[%s6 + $0x318] sm:$0xff]
        %v3619 = vld [vmem:[%s6 + $0x320] sm:$0xff]
        %v3620 = vld [vmem:[%s6 + $0x328] sm:$0xff]
        %v3621 = vld [vmem:[%s6 + $0x330] sm:$0xff]
        %v3622 = vld [vmem:[%s6 + $0x338] sm:$0xff]
        %v3623 = vld [vmem:[%s6 + $0x340] sm:$0xff]
        %v3624 = vld [vmem:[%s6 + $0x348] sm:$0xff]
        %v3625 = vld [vmem:[%s6 + $0x350] sm:$0xff]
        %v3626 = vld [vmem:[%s6 + $0x358] sm:$0xff]
        %v3627 = vld [vmem:[%s6 + $0x360] sm:$0xff]
        %v3628 = vld [vmem:[%s6 + $0x368] sm:$0xff]
        %v3629 = vld [vmem:[%s6 + $0x370] sm:$0xff]
        %v3630 = vld [vmem:[%s6 + $0x378] sm:$0xff]
        %v3631 = vld [vmem:[%s6 + $0x380] sm:$0xff]
        %v3632 = vld [vmem:[%s6 + $0x388] sm:$0xff]
        %v3633 = vld [vmem:[%s6 + $0x390] sm:$0xff]
        %v3634 = vld [vmem:[%s6 + $0x398] sm:$0xff]
        %v3635 = vld [vmem:[%s6 + $0x3a0] sm:$0xff]
        %v3636 = vld [vmem:[%s6 + $0x3a8] sm:$0xff]
        %v3637 = vld [vmem:[%s6 + $0x3b0] sm:$0xff]
        %v3638 = vld [vmem:[%s6 + $0x3b8] sm:$0xff]
        %v3639 = vld [vmem:[%s6 + $0x3c0] sm:$0xff]
        %v3640 = vld [vmem:[%s6 + $0x3c8] sm:$0xff]
        %v3641 = vld [vmem:[%s6 + $0x3d0] sm:$0xff]
        %v3642 = vld [vmem:[%s6 + $0x3d8] sm:$0xff]
        %v3643 = vld [vmem:[%s6 + $0x3e0] sm:$0xff]
        %v3644 = vld [vmem:[%s6 + $0x3e8] sm:$0xff]
        %v3645 = vld [vmem:[%s6 + $0x3f0] sm:$0xff]
        %v3646 = vld [vmem:[%s6 + $0x3f8] sm:$0xff]
        %v3647 = vld [vmem:[%s6 + $0x400] sm:$0xff]
        %v3648 = vld [vmem:[%s6 + $0x408] sm:$0xff]
        %v3649 = vld [vmem:[%s6 + $0x410] sm:$0xff]
        %v3650 = vld [vmem:[%s6 + $0x418] sm:$0xff]
        %v3651 = vld [vmem:[%s6 + $0x420] sm:$0xff]
        %v3652 = vld [vmem:[%s6 + $0x428] sm:$0xff]
        %v3653 = vld [vmem:[%s6 + $0x430] sm:$0xff]
        %v3654 = vld [vmem:[%s6 + $0x438] sm:$0xff]
        %v3655 = vld [vmem:[%s6 + $0x440] sm:$0xff]
        %v3656 = vld [vmem:[%s6 + $0x448] sm:$0xff]
        %v3657 = vld [vmem:[%s6 + $0x450] sm:$0xff]
        %v3658 = vld [vmem:[%s6 + $0x458] sm:$0xff]
        %v3659 = vld [vmem:[%s6 + $0x460] sm:$0xff]
        %v3660 = vld [vmem:[%s6 + $0x468] sm:$0xff]
        %v3661 = vld [vmem:[%s6 + $0x470] sm:$0xff]
        %v3662 = vld [vmem:[%s6 + $0x478] sm:$0xff]
        %v3663 = vld [vmem:[%s6 + $0x480] sm:$0xff]
        %v3664 = vld [vmem:[%s6 + $0x488] sm:$0xff]
        %v3665 = vld [vmem:[%s6 + $0x490] sm:$0xff]
        %v3666 = vld [vmem:[%s6 + $0x498] sm:$0xff]
        %v3667 = vld [vmem:[%s6 + $0x4a0] sm:$0xff]
        %v3668 = vld [vmem:[%s6 + $0x4a8] sm:$0xff]
        %v3669 = vld [vmem:[%s6 + $0x4b0] sm:$0xff]
        %v3670 = vld [vmem:[%s6 + $0x4b8] sm:$0xff]
        %v3671 = vld [vmem:[%s6 + $0x4c0] sm:$0xff]
        %v3672 = vld [vmem:[%s6 + $0x4c8] sm:$0xff]
        %v3673 = vld [vmem:[%s6 + $0x4d0] sm:$0xff]
        %v3674 = vld [vmem:[%s6 + $0x4d8] sm:$0xff]
        %v3675 = vld [vmem:[%s6 + $0x4e0] sm:$0xff]
        %v3676 = vld [vmem:[%s6 + $0x4e8] sm:$0xff]
        %v3677 = vld [vmem:[%s6 + $0x4f0] sm:$0xff]
        %v3678 = vld [vmem:[%s6 + $0x4f8] sm:$0xff]
        %v3679 = vld [vmem:[%s6 + $0x500] sm:$0xff]
        %v3680 = vld [vmem:[%s6 + $0x508] sm:$0xff]
        %v3681 = vld [vmem:[%s6 + $0x510] sm:$0xff]
        %v3682 = vld [vmem:[%s6 + $0x518] sm:$0xff]
        %v3683 = vld [vmem:[%s6 + $0x520] sm:$0xff]
        %v3684 = vld [vmem:[%s6 + $0x528] sm:$0xff]
        %v3685 = vld [vmem:[%s6 + $0x530] sm:$0xff]
        %v3686 = vld [vmem:[%s6 + $0x538] sm:$0xff]
        %v3687 = vld [vmem:[%s6 + $0x540] sm:$0xff]
        %v3688 = vld [vmem:[%s6 + $0x548] sm:$0xff]
        %v3689 = vld [vmem:[%s6 + $0x550] sm:$0xff]
        %v3690 = vld [vmem:[%s6 + $0x558] sm:$0xff]
        %v3691 = vld [vmem:[%s6 + $0x560] sm:$0xff]
        %v3692 = vld [vmem:[%s6 + $0x568] sm:$0xff]
        %v3693 = vld [vmem:[%s6 + $0x570] sm:$0xff]
        %v3694 = vld [vmem:[%s6 + $0x578] sm:$0xff]
        %v3695 = vld [vmem:[%s6 + $0x580] sm:$0xff]
        %v3696 = vld [vmem:[%s6 + $0x588] sm:$0xff]
        %v3697 = vld [vmem:[%s6 + $0x590] sm:$0xff]
        %v3698 = vld [vmem:[%s6 + $0x598] sm:$0xff]
        %v3699 = vld [vmem:[%s6 + $0x5a0] sm:$0xff]
        %v3700 = vld [vmem:[%s6 + $0x5a8] sm:$0xff]
        %v3701 = vld [vmem:[%s6 + $0x5b0] sm:$0xff]
        %v3702 = vld [vmem:[%s6 + $0x5b8] sm:$0xff]
        %v3703 = vld [vmem:[%s6 + $0x5c0] sm:$0xff]
        %v3704 = vld [vmem:[%s6 + $0x5c8] sm:$0xff]
        %v3705 = vld [vmem:[%s6 + $0x5d0] sm:$0xff]
        %v3706 = vld [vmem:[%s6 + $0x5d8] sm:$0xff]
        %v3707 = vld [vmem:[%s6 + $0x5e0] sm:$0xff]
        %v3708 = vld [vmem:[%s6 + $0x5e8] sm:$0xff]
        %v3709 = vld [vmem:[%s6 + $0x5f0] sm:$0xff]
        %v3710 = vld [vmem:[%s6 + $0x5f8] sm:$0xff]
        %v3711 = vld [vmem:[%s6 + $0x600] sm:$0xff]
        %v3712 = vld [vmem:[%s6 + $0x608] sm:$0xff]
        %v3713 = vld [vmem:[%s6 + $0x610] sm:$0xff]
        %v3714 = vld [vmem:[%s6 + $0x618] sm:$0xff]
        %v3715 = vld [vmem:[%s6 + $0x620] sm:$0xff]
        %v3716 = vld [vmem:[%s6 + $0x628] sm:$0xff]
        %v3717 = vld [vmem:[%s6 + $0x630] sm:$0xff]
        %v3718 = vld [vmem:[%s6 + $0x638] sm:$0xff]
        %v3719 = vld [vmem:[%s6 + $0x640] sm:$0xff]
        %v3720 = vld [vmem:[%s6 + $0x648] sm:$0xff]
        %v3721 = vld [vmem:[%s6 + $0x650] sm:$0xff]
        %v3722 = vld [vmem:[%s6 + $0x658] sm:$0xff]
        %v3723 = vld [vmem:[%s6 + $0x660] sm:$0xff]
        %v3724 = vld [vmem:[%s6 + $0x668] sm:$0xff]
        %v3725 = vld [vmem:[%s6 + $0x670] sm:$0xff]
        %v3726 = vld [vmem:[%s6 + $0x678] sm:$0xff]
        %v3727 = vld [vmem:[%s6 + $0x680] sm:$0xff]
        %v3728 = vld [vmem:[%s6 + $0x688] sm:$0xff]
        %v3729 = vld [vmem:[%s6 + $0x690] sm:$0xff]
        %v3730 = vld [vmem:[%s6 + $0x698] sm:$0xff]
        %v3731 = vld [vmem:[%s6 + $0x6a0] sm:$0xff]
        %v3732 = vld [vmem:[%s6 + $0x6a8] sm:$0xff]
        %v3733 = vld [vmem:[%s6 + $0x6b0] sm:$0xff]
        %v3734 = vld [vmem:[%s6 + $0x6b8] sm:$0xff]
        %v3735 = vld [vmem:[%s6 + $0x6c0] sm:$0xff]
        %v3736 = vld [vmem:[%s6 + $0x6c8] sm:$0xff]
        %v3737 = vld [vmem:[%s6 + $0x6d0] sm:$0xff]
        %v3738 = vld [vmem:[%s6 + $0x6d8] sm:$0xff]
        %v3739 = vld [vmem:[%s6 + $0x6e0] sm:$0xff]
        %v3740 = vld [vmem:[%s6 + $0x6e8] sm:$0xff]
        %v3741 = vld [vmem:[%s6 + $0x6f0] sm:$0xff]
        %v3742 = vld [vmem:[%s6 + $0x6f8] sm:$0xff]
        %v3743 = vld [vmem:[%s6 + $0x700] sm:$0xff]
        %v3744 = vld [vmem:[%s6 + $0x708] sm:$0xff]
        %v3745 = vld [vmem:[%s6 + $0x710] sm:$0xff]
        %v3746 = vld [vmem:[%s6 + $0x718] sm:$0xff]
        %v3747 = vld [vmem:[%s6 + $0x720] sm:$0xff]
        %v3748 = vld [vmem:[%s6 + $0x728] sm:$0xff]
        %v3749 = vld [vmem:[%s6 + $0x730] sm:$0xff]
        %v3750 = vld [vmem:[%s6 + $0x738] sm:$0xff]
        %v3751 = vld [vmem:[%s6 + $0x740] sm:$0xff]
        %v3752 = vld [vmem:[%s6 + $0x748] sm:$0xff]
        %v3753 = vld [vmem:[%s6 + $0x750] sm:$0xff]
        %v3754 = vld [vmem:[%s6 + $0x758] sm:$0xff]
        %v3755 = vld [vmem:[%s6 + $0x760] sm:$0xff]
        %v3756 = vld [vmem:[%s6 + $0x768] sm:$0xff]
        %v3757 = vld [vmem:[%s6 + $0x770] sm:$0xff]
        %v3758 = vld [vmem:[%s6 + $0x778] sm:$0xff]
        %v3759 = vld [vmem:[%s6 + $0x780] sm:$0xff]
        %v3760 = vld [vmem:[%s6 + $0x788] sm:$0xff]
        %v3761 = vld [vmem:[%s6 + $0x790] sm:$0xff]
        %v3762 = vld [vmem:[%s6 + $0x798] sm:$0xff]
        %v3763 = vld [vmem:[%s6 + $0x7a0] sm:$0xff]
        %v3764 = vld [vmem:[%s6 + $0x7a8] sm:$0xff]
        %v3765 = vld [vmem:[%s6 + $0x7b0] sm:$0xff]
        %v3766 = vld [vmem:[%s6 + $0x7b8] sm:$0xff]
        %v3767 = vld [vmem:[%s6 + $0x7c0] sm:$0xff]
        %v3768 = vld [vmem:[%s6 + $0x7c8] sm:$0xff]
        %v3769 = vld [vmem:[%s6 + $0x7d0] sm:$0xff]
        %v3770 = vld [vmem:[%s6 + $0x7d8] sm:$0xff]
        %v3771 = vld [vmem:[%s6 + $0x7e0] sm:$0xff]
        %v3772 = vld [vmem:[%s6 + $0x7e8] sm:$0xff]
        %v3773 = vld [vmem:[%s6 + $0x7f0] sm:$0xff]
        %v3774 = vld [vmem:[%s6 + $0x7f8] sm:$0xff]
        %v3775 = vld [vmem:[%s7] sm:$0x1]
        %v3778 = vlaneseq
        %v3779 = vshrl.u32 %v3778, 7
        %v3780 = vsub.s32 0, %v3779
        %v3781 = vrot.slane %v3517, %v3780
        %v3782 = vlaneseq
        %v3783 = vshrl.u32 %v3782, 7
        %v3784 = vsub.s32 1, %v3783
        %v3785 = vrot.slane %v3517, %v3784
        %v3786 = vlaneseq
        %v3787 = vshrl.u32 %v3786, 7
        %v3788 = vsub.s32 2, %v3787
        %v3789 = vrot.slane %v3517, %v3788
        %v3790 = vlaneseq
        %v3791 = vshrl.u32 %v3790, 7
        %v3792 = vsub.s32 3, %v3791
        %v3793 = vrot.slane %v3517, %v3792
        %v3794 = vlaneseq
        %v3795 = vshrl.u32 %v3794, 7
        %v3796 = vsub.s32 4, %v3795
        %v3797 = vrot.slane %v3517, %v3796
        %v3798 = vlaneseq
        %v3799 = vshrl.u32 %v3798, 7
        %v3800 = vsub.s32 5, %v3799
        %v3801 = vrot.slane %v3517, %v3800
        %v3802 = vlaneseq
        %v3803 = vshrl.u32 %v3802, 7
        %v3804 = vsub.s32 6, %v3803
        %v3805 = vrot.slane %v3517, %v3804
        %v3806 = vlaneseq
        %v3807 = vshrl.u32 %v3806, 7
        %v3808 = vsub.s32 7, %v3807
        %v3809 = vrot.slane %v3517, %v3808
        %v3810 = vlaneseq
        %v3811 = vshrl.u32 %v3810, 7
        %v3812 = vsub.s32 0, %v3811
        %v3813 = vrot.slane %v3518, %v3812
        %v3814 = vlaneseq
        %v3815 = vshrl.u32 %v3814, 7
        %v3816 = vsub.s32 1, %v3815
        %v3817 = vrot.slane %v3518, %v3816
        %v3818 = vlaneseq
        %v3819 = vshrl.u32 %v3818, 7
        %v3820 = vsub.s32 2, %v3819
        %v3821 = vrot.slane %v3518, %v3820
        %v3822 = vlaneseq
        %v3823 = vshrl.u32 %v3822, 7
        %v3824 = vsub.s32 3, %v3823
        %v3825 = vrot.slane %v3518, %v3824
        %v3826 = vlaneseq
        %v3827 = vshrl.u32 %v3826, 7
        %v3828 = vsub.s32 4, %v3827
        %v3829 = vrot.slane %v3518, %v3828
        %v3830 = vlaneseq
        %v3831 = vshrl.u32 %v3830, 7
        %v3832 = vsub.s32 5, %v3831
        %v3833 = vrot.slane %v3518, %v3832
        %v3834 = vlaneseq
        %v3835 = vshrl.u32 %v3834, 7
        %v3836 = vsub.s32 6, %v3835
        %v3837 = vrot.slane %v3518, %v3836
        %v3838 = vlaneseq
        %v3839 = vshrl.u32 %v3838, 7
        %v3840 = vsub.s32 7, %v3839
        %v3841 = vrot.slane %v3518, %v3840
        %3858 = vmatprep.subr.mxu0 0.0
        %3859 = vmatpush1.msra.mxu0 %v3534
        %3860 = vmatprep.subr.mxu0 0.0
        %3861 = vmatpush1.msra.mxu0 %v3533
        %3862 = vmatprep.subr.mxu0 0.0
        %3863 = vmatpush1.msra.mxu0 %v3532
        %3864 = vmatprep.subr.mxu0 0.0
        %3865 = vmatpush1.msra.mxu0 %v3531
        %3866 = vmatprep.subr.mxu0 0.0
        %3867 = vmatpush1.msra.mxu0 %v3530
        %3868 = vmatprep.subr.mxu0 0.0
        %3869 = vmatpush1.msra.mxu0 %v3529
        %3870 = vmatprep.subr.mxu0 0.0
        %3871 = vmatpush1.msra.mxu0 %v3528
        %3872 = vmatprep.subr.mxu0 0.0
        %3873 = vmatpush1.msra.mxu0 %v3527
        %3874 = vmatprep.subr.mxu0 0.0
        %3875 = vmatpush1.msra.mxu0 %v3526
        %3876 = vmatprep.subr.mxu0 0.0
        %3877 = vmatpush1.msra.mxu0 %v3525
        %3878 = vmatprep.subr.mxu0 0.0
        %3879 = vmatpush1.msra.mxu0 %v3524
        %3880 = vmatprep.subr.mxu0 0.0
        %3881 = vmatpush1.msra.mxu0 %v3523
        %3882 = vmatprep.subr.mxu0 0.0
        %3883 = vmatpush1.msra.mxu0 %v3522
        %3884 = vmatprep.subr.mxu0 0.0
        %3885 = vmatpush1.msra.mxu0 %v3521
        %3886 = vmatprep.subr.mxu0 0.0
        %3887 = vmatpush1.msra.mxu0 %v3520
        %3888 = vmatprep.subr.mxu0 0.0
        %3889 = vmatpush1.msra.mxu0 %v3519
        %3890 = vmatprep.subr.mxu0 0.0
        %3891 = vmatpush2.msra.mxu0 %v3550
        %3892 = vmatprep.subr.mxu0 0.0
        %3893 = vmatpush2.msra.mxu0 %v3549
        %3894 = vmatprep.subr.mxu0 0.0
        %3895 = vmatpush2.msra.mxu0 %v3548
        %3896 = vmatprep.subr.mxu0 0.0
        %3897 = vmatpush2.msra.mxu0 %v3547
        %3898 = vmatprep.subr.mxu0 0.0
        %3899 = vmatpush2.msra.mxu0 %v3546
        %3900 = vmatprep.subr.mxu0 0.0
        %3901 = vmatpush2.msra.mxu0 %v3545
        %3902 = vmatprep.subr.mxu0 0.0
        %3903 = vmatpush2.msra.mxu0 %v3544
        %3904 = vmatprep.subr.mxu0 0.0
        %3905 = vmatpush2.msra.mxu0 %v3543
        %3906 = vmatprep.subr.mxu0 0.0
        %3907 = vmatpush2.msra.mxu0 %v3542
        %3908 = vmatprep.subr.mxu0 0.0
        %3909 = vmatpush2.msra.mxu0 %v3541
        %3910 = vmatprep.subr.mxu0 0.0
        %3911 = vmatpush2.msra.mxu0 %v3540
        %3912 = vmatprep.subr.mxu0 0.0
        %3913 = vmatpush2.msra.mxu0 %v3539
        %3914 = vmatprep.subr.mxu0 0.0
        %3915 = vmatpush2.msra.mxu0 %v3538
        %3916 = vmatprep.subr.mxu0 0.0
        %3917 = vmatpush2.msra.mxu0 %v3537
        %3918 = vmatprep.subr.mxu0 0.0
        %3919 = vmatpush2.msra.mxu0 %v3536
        %3920 = vmatprep.subr.mxu0 0.0
        %3921 = vmatpush2.msra.mxu0 %v3535
        %3922 = vmatprep.mubr.f32.mxu0 %v3785
        %3923 = vmatmul.mubr.f32.gmra.mxu0 %v3781
        %v3924 = vpop.f32.mrf.mxu0
        %v3925 = vadd.f32 %v3775, %v3924
        %v3926 = vpop.f32.mrf.mxu0
        %3927 = vdwg.mxu0
        %3928 = vmatprep.subr.mxu0 0.0
        %3929 = vmatpush1.msra.mxu0 %v3566
        %3930 = vmatprep.subr.mxu0 0.0
        %3931 = vmatpush1.msra.mxu0 %v3565
        %3932 = vmatprep.subr.mxu0 0.0
        %3933 = vmatpush1.msra.mxu0 %v3564
        %3934 = vmatprep.subr.mxu0 0.0
        %3935 = vmatpush1.msra.mxu0 %v3563
        %3936 = vmatprep.subr.mxu0 0.0
        %3937 = vmatpush1.msra.mxu0 %v3562
        %3938 = vmatprep.subr.mxu0 0.0
        %3939 = vmatpush1.msra.mxu0 %v3561
        %3940 = vmatprep.subr.mxu0 0.0
        %3941 = vmatpush1.msra.mxu0 %v3560
        %3942 = vmatprep.subr.mxu0 0.0
        %3943 = vmatpush1.msra.mxu0 %v3559
        %3944 = vmatprep.subr.mxu0 0.0
        %3945 = vmatpush1.msra.mxu0 %v3558
        %3946 = vmatprep.subr.mxu0 0.0
        %3947 = vmatpush1.msra.mxu0 %v3557
        %3948 = vmatprep.subr.mxu0 0.0
        %3949 = vmatpush1.msra.mxu0 %v3556
        %3950 = vmatprep.subr.mxu0 0.0
        %3951 = vmatpush1.msra.mxu0 %v3555
        %3952 = vmatprep.subr.mxu0 0.0
        %3953 = vmatpush1.msra.mxu0 %v3554
        %3954 = vmatprep.subr.mxu0 0.0
        %3955 = vmatpush1.msra.mxu0 %v3553
        %3956 = vmatprep.subr.mxu0 0.0
        %3957 = vmatpush1.msra.mxu0 %v3552
        %3958 = vmatprep.subr.mxu0 0.0
        %3959 = vmatpush1.msra.mxu0 %v3551
        %3960 = vmatprep.subr.mxu0 0.0
        %3961 = vmatpush2.msra.mxu0 %v3582
        %3962 = vmatprep.subr.mxu0 0.0
        %3963 = vmatpush2.msra.mxu0 %v3581
        %3964 = vmatprep.subr.mxu0 0.0
        %3965 = vmatpush2.msra.mxu0 %v3580
        %3966 = vmatprep.subr.mxu0 0.0
        %3967 = vmatpush2.msra.mxu0 %v3579
        %3968 = vmatprep.subr.mxu0 0.0
        %3969 = vmatpush2.msra.mxu0 %v3578
        %3970 = vmatprep.subr.mxu0 0.0
        %3971 = vmatpush2.msra.mxu0 %v3577
        %3972 = vmatprep.subr.mxu0 0.0
        %3973 = vmatpush2.msra.mxu0 %v3576
        %3974 = vmatprep.subr.mxu0 0.0
        %3975 = vmatpush2.msra.mxu0 %v3575
        %3976 = vmatprep.subr.mxu0 0.0
        %3977 = vmatpush2.msra.mxu0 %v3574
        %3978 = vmatprep.subr.mxu0 0.0
        %3979 = vmatpush2.msra.mxu0 %v3573
        %3980 = vmatprep.subr.mxu0 0.0
        %3981 = vmatpush2.msra.mxu0 %v3572
        %3982 = vmatprep.subr.mxu0 0.0
        %3983 = vmatpush2.msra.mxu0 %v3571
        %3984 = vmatprep.subr.mxu0 0.0
        %3985 = vmatpush2.msra.mxu0 %v3570
        %3986 = vmatprep.subr.mxu0 0.0
        %3987 = vmatpush2.msra.mxu0 %v3569
        %3988 = vmatprep.subr.mxu0 0.0
        %3989 = vmatpush2.msra.mxu0 %v3568
        %3990 = vmatprep.subr.mxu0 0.0
        %3991 = vmatpush2.msra.mxu0 %v3567
        %3992 = vmatprep.mubr.f32.mxu0 %v3793
        %3993 = vmatmul.mubr.f32.gmra.mxu0 %v3789
        %v3994 = vpop.f32.mrf.mxu0
        %v3995 = vadd.f32 %v3925, %v3994
        %v3996 = vpop.f32.mrf.mxu0
        %3997 = vdwg.mxu0
        %3998 = vmatprep.subr.mxu0 0.0
        %3999 = vmatpush1.msra.mxu0 %v3598
        %4000 = vmatprep.subr.mxu0 0.0
        %4001 = vmatpush1.msra.mxu0 %v3597
        %4002 = vmatprep.subr.mxu0 0.0
        %4003 = vmatpush1.msra.mxu0 %v3596
        %4004 = vmatprep.subr.mxu0 0.0
        %4005 = vmatpush1.msra.mxu0 %v3595
        %4006 = vmatprep.subr.mxu0 0.0
        %4007 = vmatpush1.msra.mxu0 %v3594
        %4008 = vmatprep.subr.mxu0 0.0
        %4009 = vmatpush1.msra.mxu0 %v3593
        %4010 = vmatprep.subr.mxu0 0.0
        %4011 = vmatpush1.msra.mxu0 %v3592
        %4012 = vmatprep.subr.mxu0 0.0
        %4013 = vmatpush1.msra.mxu0 %v3591
        %4014 = vmatprep.subr.mxu0 0.0
        %4015 = vmatpush1.msra.mxu0 %v3590
        %4016 = vmatprep.subr.mxu0 0.0
        %4017 = vmatpush1.msra.mxu0 %v3589
        %4018 = vmatprep.subr.mxu0 0.0
        %4019 = vmatpush1.msra.mxu0 %v3588
        %4020 = vmatprep.subr.mxu0 0.0
        %4021 = vmatpush1.msra.mxu0 %v3587
        %4022 = vmatprep.subr.mxu0 0.0
        %4023 = vmatpush1.msra.mxu0 %v3586
        %4024 = vmatprep.subr.mxu0 0.0
        %4025 = vmatpush1.msra.mxu0 %v3585
        %4026 = vmatprep.subr.mxu0 0.0
        %4027 = vmatpush1.msra.mxu0 %v3584
        %4028 = vmatprep.subr.mxu0 0.0
        %4029 = vmatpush1.msra.mxu0 %v3583
        %4030 = vmatprep.subr.mxu0 0.0
        %4031 = vmatpush2.msra.mxu0 %v3614
        %4032 = vmatprep.subr.mxu0 0.0
        %4033 = vmatpush2.msra.mxu0 %v3613
        %4034 = vmatprep.subr.mxu0 0.0
        %4035 = vmatpush2.msra.mxu0 %v3612
        %4036 = vmatprep.subr.mxu0 0.0
        %4037 = vmatpush2.msra.mxu0 %v3611
        %4038 = vmatprep.subr.mxu0 0.0
        %4039 = vmatpush2.msra.mxu0 %v3610
        %4040 = vmatprep.subr.mxu0 0.0
        %4041 = vmatpush2.msra.mxu0 %v3609
        %4042 = vmatprep.subr.mxu0 0.0
        %4043 = vmatpush2.msra.mxu0 %v3608
        %4044 = vmatprep.subr.mxu0 0.0
        %4045 = vmatpush2.msra.mxu0 %v3607
        %4046 = vmatprep.subr.mxu0 0.0
        %4047 = vmatpush2.msra.mxu0 %v3606
        %4048 = vmatprep.subr.mxu0 0.0
        %4049 = vmatpush2.msra.mxu0 %v3605
        %4050 = vmatprep.subr.mxu0 0.0
        %4051 = vmatpush2.msra.mxu0 %v3604
        %4052 = vmatprep.subr.mxu0 0.0
        %4053 = vmatpush2.msra.mxu0 %v3603
        %4054 = vmatprep.subr.mxu0 0.0
        %4055 = vmatpush2.msra.mxu0 %v3602
        %4056 = vmatprep.subr.mxu0 0.0
        %4057 = vmatpush2.msra.mxu0 %v3601
        %4058 = vmatprep.subr.mxu0 0.0
        %4059 = vmatpush2.msra.mxu0 %v3600
        %4060 = vmatprep.subr.mxu0 0.0
        %4061 = vmatpush2.msra.mxu0 %v3599
        %4062 = vmatprep.mubr.f32.mxu0 %v3801
        %4063 = vmatmul.mubr.f32.gmra.mxu0 %v3797
        %v4064 = vpop.f32.mrf.mxu0
        %v4065 = vadd.f32 %v3995, %v4064
        %v4066 = vpop.f32.mrf.mxu0
        %4067 = vdwg.mxu0
        %4068 = vmatprep.subr.mxu0 0.0
        %4069 = vmatpush1.msra.mxu0 %v3630
        %4070 = vmatprep.subr.mxu0 0.0
        %4071 = vmatpush1.msra.mxu0 %v3629
        %4072 = vmatprep.subr.mxu0 0.0
        %4073 = vmatpush1.msra.mxu0 %v3628
        %4074 = vmatprep.subr.mxu0 0.0
        %4075 = vmatpush1.msra.mxu0 %v3627
        %4076 = vmatprep.subr.mxu0 0.0
        %4077 = vmatpush1.msra.mxu0 %v3626
        %4078 = vmatprep.subr.mxu0 0.0
        %4079 = vmatpush1.msra.mxu0 %v3625
        %4080 = vmatprep.subr.mxu0 0.0
        %4081 = vmatpush1.msra.mxu0 %v3624
        %4082 = vmatprep.subr.mxu0 0.0
        %4083 = vmatpush1.msra.mxu0 %v3623
        %4084 = vmatprep.subr.mxu0 0.0
        %4085 = vmatpush1.msra.mxu0 %v3622
        %4086 = vmatprep.subr.mxu0 0.0
        %4087 = vmatpush1.msra.mxu0 %v3621
        %4088 = vmatprep.subr.mxu0 0.0
        %4089 = vmatpush1.msra.mxu0 %v3620
        %4090 = vmatprep.subr.mxu0 0.0
        %4091 = vmatpush1.msra.mxu0 %v3619
        %4092 = vmatprep.subr.mxu0 0.0
        %4093 = vmatpush1.msra.mxu0 %v3618
        %4094 = vmatprep.subr.mxu0 0.0
        %4095 = vmatpush1.msra.mxu0 %v3617
        %4096 = vmatprep.subr.mxu0 0.0
        %4097 = vmatpush1.msra.mxu0 %v3616
        %4098 = vmatprep.subr.mxu0 0.0
        %4099 = vmatpush1.msra.mxu0 %v3615
        %4100 = vmatprep.subr.mxu0 0.0
        %4101 = vmatpush2.msra.mxu0 %v3646
        %4102 = vmatprep.subr.mxu0 0.0
        %4103 = vmatpush2.msra.mxu0 %v3645
        %4104 = vmatprep.subr.mxu0 0.0
        %4105 = vmatpush2.msra.mxu0 %v3644
        %4106 = vmatprep.subr.mxu0 0.0
        %4107 = vmatpush2.msra.mxu0 %v3643
        %4108 = vmatprep.subr.mxu0 0.0
        %4109 = vmatpush2.msra.mxu0 %v3642
        %4110 = vmatprep.subr.mxu0 0.0
        %4111 = vmatpush2.msra.mxu0 %v3641
        %4112 = vmatprep.subr.mxu0 0.0
        %4113 = vmatpush2.msra.mxu0 %v3640
        %4114 = vmatprep.subr.mxu0 0.0
        %4115 = vmatpush2.msra.mxu0 %v3639
        %4116 = vmatprep.subr.mxu0 0.0
        %4117 = vmatpush2.msra.mxu0 %v3638
        %4118 = vmatprep.subr.mxu0 0.0
        %4119 = vmatpush2.msra.mxu0 %v3637
        %4120 = vmatprep.subr.mxu0 0.0
        %4121 = vmatpush2.msra.mxu0 %v3636
        %4122 = vmatprep.subr.mxu0 0.0
        %4123 = vmatpush2.msra.mxu0 %v3635
        %4124 = vmatprep.subr.mxu0 0.0
        %4125 = vmatpush2.msra.mxu0 %v3634
        %4126 = vmatprep.subr.mxu0 0.0
        %4127 = vmatpush2.msra.mxu0 %v3633
        %4128 = vmatprep.subr.mxu0 0.0
        %4129 = vmatpush2.msra.mxu0 %v3632
        %4130 = vmatprep.subr.mxu0 0.0
        %4131 = vmatpush2.msra.mxu0 %v3631
        %4132 = vmatprep.mubr.f32.mxu0 %v3809
        %4133 = vmatmul.mubr.f32.gmra.mxu0 %v3805
        %v4134 = vpop.f32.mrf.mxu0
        %v4135 = vadd.f32 %v4065, %v4134
        %v4136 = vpop.f32.mrf.mxu0
        %4137 = vdwg.mxu0
        %4138 = vmatprep.subr.mxu0 0.0
        %4139 = vmatpush1.msra.mxu0 %v3662
        %4140 = vmatprep.subr.mxu0 0.0
        %4141 = vmatpush1.msra.mxu0 %v3661
        %4142 = vmatprep.subr.mxu0 0.0
        %4143 = vmatpush1.msra.mxu0 %v3660
        %4144 = vmatprep.subr.mxu0 0.0
        %4145 = vmatpush1.msra.mxu0 %v3659
        %4146 = vmatprep.subr.mxu0 0.0
        %4147 = vmatpush1.msra.mxu0 %v3658
        %4148 = vmatprep.subr.mxu0 0.0
        %4149 = vmatpush1.msra.mxu0 %v3657
        %4150 = vmatprep.subr.mxu0 0.0
        %4151 = vmatpush1.msra.mxu0 %v3656
        %4152 = vmatprep.subr.mxu0 0.0
        %4153 = vmatpush1.msra.mxu0 %v3655
        %4154 = vmatprep.subr.mxu0 0.0
        %4155 = vmatpush1.msra.mxu0 %v3654
        %4156 = vmatprep.subr.mxu0 0.0
        %4157 = vmatpush1.msra.mxu0 %v3653
        %4158 = vmatprep.subr.mxu0 0.0
        %4159 = vmatpush1.msra.mxu0 %v3652
        %4160 = vmatprep.subr.mxu0 0.0
        %4161 = vmatpush1.msra.mxu0 %v3651
        %4162 = vmatprep.subr.mxu0 0.0
        %4163 = vmatpush1.msra.mxu0 %v3650
        %4164 = vmatprep.subr.mxu0 0.0
        %4165 = vmatpush1.msra.mxu0 %v3649
        %4166 = vmatprep.subr.mxu0 0.0
        %4167 = vmatpush1.msra.mxu0 %v3648
        %4168 = vmatprep.subr.mxu0 0.0
        %4169 = vmatpush1.msra.mxu0 %v3647
        %4170 = vmatprep.subr.mxu0 0.0
        %4171 = vmatpush2.msra.mxu0 %v3678
        %4172 = vmatprep.subr.mxu0 0.0
        %4173 = vmatpush2.msra.mxu0 %v3677
        %4174 = vmatprep.subr.mxu0 0.0
        %4175 = vmatpush2.msra.mxu0 %v3676
        %4176 = vmatprep.subr.mxu0 0.0
        %4177 = vmatpush2.msra.mxu0 %v3675
        %4178 = vmatprep.subr.mxu0 0.0
        %4179 = vmatpush2.msra.mxu0 %v3674
        %4180 = vmatprep.subr.mxu0 0.0
        %4181 = vmatpush2.msra.mxu0 %v3673
        %4182 = vmatprep.subr.mxu0 0.0
        %4183 = vmatpush2.msra.mxu0 %v3672
        %4184 = vmatprep.subr.mxu0 0.0
        %4185 = vmatpush2.msra.mxu0 %v3671
        %4186 = vmatprep.subr.mxu0 0.0
        %4187 = vmatpush2.msra.mxu0 %v3670
        %4188 = vmatprep.subr.mxu0 0.0
        %4189 = vmatpush2.msra.mxu0 %v3669
        %4190 = vmatprep.subr.mxu0 0.0
        %4191 = vmatpush2.msra.mxu0 %v3668
        %4192 = vmatprep.subr.mxu0 0.0
        %4193 = vmatpush2.msra.mxu0 %v3667
        %4194 = vmatprep.subr.mxu0 0.0
        %4195 = vmatpush2.msra.mxu0 %v3666
        %4196 = vmatprep.subr.mxu0 0.0
        %4197 = vmatpush2.msra.mxu0 %v3665
        %4198 = vmatprep.subr.mxu0 0.0
        %4199 = vmatpush2.msra.mxu0 %v3664
        %4200 = vmatprep.subr.mxu0 0.0
        %4201 = vmatpush2.msra.mxu0 %v3663
        %4202 = vmatprep.mubr.f32.mxu0 %v3817
        %4203 = vmatmul.mubr.f32.gmra.mxu0 %v3813
        %v4204 = vpop.f32.mrf.mxu0
        %v4205 = vadd.f32 %v4135, %v4204
        %v4206 = vpop.f32.mrf.mxu0
        %4207 = vdwg.mxu0
        %4208 = vmatprep.subr.mxu0 0.0
        %4209 = vmatpush1.msra.mxu0 %v3694
        %4210 = vmatprep.subr.mxu0 0.0
        %4211 = vmatpush1.msra.mxu0 %v3693
        %4212 = vmatprep.subr.mxu0 0.0
        %4213 = vmatpush1.msra.mxu0 %v3692
        %4214 = vmatprep.subr.mxu0 0.0
        %4215 = vmatpush1.msra.mxu0 %v3691
        %4216 = vmatprep.subr.mxu0 0.0
        %4217 = vmatpush1.msra.mxu0 %v3690
        %4218 = vmatprep.subr.mxu0 0.0
        %4219 = vmatpush1.msra.mxu0 %v3689
        %4220 = vmatprep.subr.mxu0 0.0
        %4221 = vmatpush1.msra.mxu0 %v3688
        %4222 = vmatprep.subr.mxu0 0.0
        %4223 = vmatpush1.msra.mxu0 %v3687
        %4224 = vmatprep.subr.mxu0 0.0
        %4225 = vmatpush1.msra.mxu0 %v3686
        %4226 = vmatprep.subr.mxu0 0.0
        %4227 = vmatpush1.msra.mxu0 %v3685
        %4228 = vmatprep.subr.mxu0 0.0
        %4229 = vmatpush1.msra.mxu0 %v3684
        %4230 = vmatprep.subr.mxu0 0.0
        %4231 = vmatpush1.msra.mxu0 %v3683
        %4232 = vmatprep.subr.mxu0 0.0
        %4233 = vmatpush1.msra.mxu0 %v3682
        %4234 = vmatprep.subr.mxu0 0.0
        %4235 = vmatpush1.msra.mxu0 %v3681
        %4236 = vmatprep.subr.mxu0 0.0
        %4237 = vmatpush1.msra.mxu0 %v3680
        %4238 = vmatprep.subr.mxu0 0.0
        %4239 = vmatpush1.msra.mxu0 %v3679
        %4240 = vmatprep.subr.mxu0 0.0
        %4241 = vmatpush2.msra.mxu0 %v3710
        %4242 = vmatprep.subr.mxu0 0.0
        %4243 = vmatpush2.msra.mxu0 %v3709
        %4244 = vmatprep.subr.mxu0 0.0
        %4245 = vmatpush2.msra.mxu0 %v3708
        %4246 = vmatprep.subr.mxu0 0.0
        %4247 = vmatpush2.msra.mxu0 %v3707
        %4248 = vmatprep.subr.mxu0 0.0
        %4249 = vmatpush2.msra.mxu0 %v3706
        %4250 = vmatprep.subr.mxu0 0.0
        %4251 = vmatpush2.msra.mxu0 %v3705
        %4252 = vmatprep.subr.mxu0 0.0
        %4253 = vmatpush2.msra.mxu0 %v3704
        %4254 = vmatprep.subr.mxu0 0.0
        %4255 = vmatpush2.msra.mxu0 %v3703
        %4256 = vmatprep.subr.mxu0 0.0
        %4257 = vmatpush2.msra.mxu0 %v3702
        %4258 = vmatprep.subr.mxu0 0.0
        %4259 = vmatpush2.msra.mxu0 %v3701
        %4260 = vmatprep.subr.mxu0 0.0
        %4261 = vmatpush2.msra.mxu0 %v3700
        %4262 = vmatprep.subr.mxu0 0.0
        %4263 = vmatpush2.msra.mxu0 %v3699
        %4264 = vmatprep.subr.mxu0 0.0
        %4265 = vmatpush2.msra.mxu0 %v3698
        %4266 = vmatprep.subr.mxu0 0.0
        %4267 = vmatpush2.msra.mxu0 %v3697
        %4268 = vmatprep.subr.mxu0 0.0
        %4269 = vmatpush2.msra.mxu0 %v3696
        %4270 = vmatprep.subr.mxu0 0.0
        %4271 = vmatpush2.msra.mxu0 %v3695
        %4272 = vmatprep.mubr.f32.mxu0 %v3825
        %4273 = vmatmul.mubr.f32.gmra.mxu0 %v3821
        %v4274 = vpop.f32.mrf.mxu0
        %v4275 = vadd.f32 %v4205, %v4274
        %v4276 = vpop.f32.mrf.mxu0
        %4277 = vdwg.mxu0
        %4278 = vmatprep.subr.mxu0 0.0
        %4279 = vmatpush1.msra.mxu0 %v3726
        %4280 = vmatprep.subr.mxu0 0.0
        %4281 = vmatpush1.msra.mxu0 %v3725
        %4282 = vmatprep.subr.mxu0 0.0
        %4283 = vmatpush1.msra.mxu0 %v3724
        %4284 = vmatprep.subr.mxu0 0.0
        %4285 = vmatpush1.msra.mxu0 %v3723
        %4286 = vmatprep.subr.mxu0 0.0
        %4287 = vmatpush1.msra.mxu0 %v3722
        %4288 = vmatprep.subr.mxu0 0.0
        %4289 = vmatpush1.msra.mxu0 %v3721
        %4290 = vmatprep.subr.mxu0 0.0
        %4291 = vmatpush1.msra.mxu0 %v3720
        %4292 = vmatprep.subr.mxu0 0.0
        %4293 = vmatpush1.msra.mxu0 %v3719
        %4294 = vmatprep.subr.mxu0 0.0
        %4295 = vmatpush1.msra.mxu0 %v3718
        %4296 = vmatprep.subr.mxu0 0.0
        %4297 = vmatpush1.msra.mxu0 %v3717
        %4298 = vmatprep.subr.mxu0 0.0
        %4299 = vmatpush1.msra.mxu0 %v3716
        %4300 = vmatprep.subr.mxu0 0.0
        %4301 = vmatpush1.msra.mxu0 %v3715
        %4302 = vmatprep.subr.mxu0 0.0
        %4303 = vmatpush1.msra.mxu0 %v3714
        %4304 = vmatprep.subr.mxu0 0.0
        %4305 = vmatpush1.msra.mxu0 %v3713
        %4306 = vmatprep.subr.mxu0 0.0
        %4307 = vmatpush1.msra.mxu0 %v3712
        %4308 = vmatprep.subr.mxu0 0.0
        %4309 = vmatpush1.msra.mxu0 %v3711
        %4310 = vmatprep.subr.mxu0 0.0
        %4311 = vmatpush2.msra.mxu0 %v3742
        %4312 = vmatprep.subr.mxu0 0.0
        %4313 = vmatpush2.msra.mxu0 %v3741
        %4314 = vmatprep.subr.mxu0 0.0
        %4315 = vmatpush2.msra.mxu0 %v3740
        %4316 = vmatprep.subr.mxu0 0.0
        %4317 = vmatpush2.msra.mxu0 %v3739
        %4318 = vmatprep.subr.mxu0 0.0
        %4319 = vmatpush2.msra.mxu0 %v3738
        %4320 = vmatprep.subr.mxu0 0.0
        %4321 = vmatpush2.msra.mxu0 %v3737
        %4322 = vmatprep.subr.mxu0 0.0
        %4323 = vmatpush2.msra.mxu0 %v3736
        %4324 = vmatprep.subr.mxu0 0.0
        %4325 = vmatpush2.msra.mxu0 %v3735
        %4326 = vmatprep.subr.mxu0 0.0
        %4327 = vmatpush2.msra.mxu0 %v3734
        %4328 = vmatprep.subr.mxu0 0.0
        %4329 = vmatpush2.msra.mxu0 %v3733
        %4330 = vmatprep.subr.mxu0 0.0
        %4331 = vmatpush2.msra.mxu0 %v3732
        %4332 = vmatprep.subr.mxu0 0.0
        %4333 = vmatpush2.msra.mxu0 %v3731
        %4334 = vmatprep.subr.mxu0 0.0
        %4335 = vmatpush2.msra.mxu0 %v3730
        %4336 = vmatprep.subr.mxu0 0.0
        %4337 = vmatpush2.msra.mxu0 %v3729
        %4338 = vmatprep.subr.mxu0 0.0
        %4339 = vmatpush2.msra.mxu0 %v3728
        %4340 = vmatprep.subr.mxu0 0.0
        %4341 = vmatpush2.msra.mxu0 %v3727
        %4342 = vmatprep.mubr.f32.mxu0 %v3833
        %4343 = vmatmul.mubr.f32.gmra.mxu0 %v3829
        %v4344 = vpop.f32.mrf.mxu0
        %v4345 = vadd.f32 %v4275, %v4344
        %v4346 = vpop.f32.mrf.mxu0
        %4347 = vdwg.mxu0
        %4348 = vmatprep.subr.mxu0 0.0
        %4349 = vmatpush1.msra.mxu0 %v3758
        %4350 = vmatprep.subr.mxu0 0.0
        %4351 = vmatpush1.msra.mxu0 %v3757
        %4352 = vmatprep.subr.mxu0 0.0
        %4353 = vmatpush1.msra.mxu0 %v3756
        %4354 = vmatprep.subr.mxu0 0.0
        %4355 = vmatpush1.msra.mxu0 %v3755
        %4356 = vmatprep.subr.mxu0 0.0
        %4357 = vmatpush1.msra.mxu0 %v3754
        %4358 = vmatprep.subr.mxu0 0.0
        %4359 = vmatpush1.msra.mxu0 %v3753
        %4360 = vmatprep.subr.mxu0 0.0
        %4361 = vmatpush1.msra.mxu0 %v3752
        %4362 = vmatprep.subr.mxu0 0.0
        %4363 = vmatpush1.msra.mxu0 %v3751
        %4364 = vmatprep.subr.mxu0 0.0
        %4365 = vmatpush1.msra.mxu0 %v3750
        %4366 = vmatprep.subr.mxu0 0.0
        %4367 = vmatpush1.msra.mxu0 %v3749
        %4368 = vmatprep.subr.mxu0 0.0
        %4369 = vmatpush1.msra.mxu0 %v3748
        %4370 = vmatprep.subr.mxu0 0.0
        %4371 = vmatpush1.msra.mxu0 %v3747
        %4372 = vmatprep.subr.mxu0 0.0
        %4373 = vmatpush1.msra.mxu0 %v3746
        %4374 = vmatprep.subr.mxu0 0.0
        %4375 = vmatpush1.msra.mxu0 %v3745
        %4376 = vmatprep.subr.mxu0 0.0
        %4377 = vmatpush1.msra.mxu0 %v3744
        %4378 = vmatprep.subr.mxu0 0.0
        %4379 = vmatpush1.msra.mxu0 %v3743
        %4380 = vmatprep.subr.mxu0 0.0
        %4381 = vmatpush2.msra.mxu0 %v3774
        %4382 = vmatprep.subr.mxu0 0.0
        %4383 = vmatpush2.msra.mxu0 %v3773
        %4384 = vmatprep.subr.mxu0 0.0
        %4385 = vmatpush2.msra.mxu0 %v3772
        %4386 = vmatprep.subr.mxu0 0.0
        %4387 = vmatpush2.msra.mxu0 %v3771
        %4388 = vmatprep.subr.mxu0 0.0
        %4389 = vmatpush2.msra.mxu0 %v3770
        %4390 = vmatprep.subr.mxu0 0.0
        %4391 = vmatpush2.msra.mxu0 %v3769
        %4392 = vmatprep.subr.mxu0 0.0
        %4393 = vmatpush2.msra.mxu0 %v3768
        %4394 = vmatprep.subr.mxu0 0.0
        %4395 = vmatpush2.msra.mxu0 %v3767
        %4396 = vmatprep.subr.mxu0 0.0
        %4397 = vmatpush2.msra.mxu0 %v3766
        %4398 = vmatprep.subr.mxu0 0.0
        %4399 = vmatpush2.msra.mxu0 %v3765
        %4400 = vmatprep.subr.mxu0 0.0
        %4401 = vmatpush2.msra.mxu0 %v3764
        %4402 = vmatprep.subr.mxu0 0.0
        %4403 = vmatpush2.msra.mxu0 %v3763
        %4404 = vmatprep.subr.mxu0 0.0
        %4405 = vmatpush2.msra.mxu0 %v3762
        %4406 = vmatprep.subr.mxu0 0.0
        %4407 = vmatpush2.msra.mxu0 %v3761
        %4408 = vmatprep.subr.mxu0 0.0
        %4409 = vmatpush2.msra.mxu0 %v3760
        %4410 = vmatprep.subr.mxu0 0.0
        %4411 = vmatpush2.msra.mxu0 %v3759
        %4412 = vmatprep.mubr.f32.mxu0 %v3841
        %4413 = vmatmul.mubr.f32.gmra.mxu0 %v3837
        %v4414 = vpop.f32.mrf.mxu0
        %v4415 = vadd.f32 %v4345, %v4414
        %v4416 = vpop.f32.mrf.mxu0
        %4417 = vdwg.mxu0
        %4418 = vst [vmem:[%s297] sm:$0x1] %v4415
        %s4419 = sand.u32 %s203, 1
        %s4420 = scalar_lea.sflag [#allocation8], %s4419
        %s4421 = sand.u32 %s203, 1
        %s4422 = scalar_lea.vmem [#allocation7], %s4421
        // Predicated region
        $region53: #{basenet_forward.1} parent=51 // pred_check
          %p4423 = pneg %p213
        $region54: #{basenet_forward.1} parent=51 // pred_check_branch
          %4425 = sbr.rel (%p4423) target = $region56
        $region55: #{basenet_forward.1} parent=51 // pred_region
          %s4427 = ssub.s32 16, 16
          %4428 = vsyncadd %s4420, %s4427
          %s4429 = smul.addr %s22, 16
          %s4430 = scalar_lea.hbm %s8, %s4429
          %s4432 = sshll.u32 %s4422, 4
          %s4433 = int_to_ptr.vmem [resolvable:$true] %s4432
          %4435 = dma.vmem_to_hbm [thread:$0]  %s4433, 16, %s4430, %s4420
        $region56: #{basenet_forward.1} parent=51 // pred_fallthru
          _
      $region52: #{basenet_forward.1} parent=5 // pred_fallthru
        _
      %p4436 = scmp.le.s32.totalorder 2, %s17
      // Predicated region
      $region57: #{basenet_forward.1} parent=5 // pred_check
        %p4437 = pneg %p4436
      $region58: #{basenet_forward.1} parent=5 // pred_check_branch
        %4439 = sbr.rel (%p4437) target = $region60
      $region59: #{basenet_forward.1} parent=5 // pred_region
        %s4440 = ssub.s32 %s17, 2
        // Predicated region
        $region61: #{basenet_forward.1} parent=59 // pred_check
          %p4441 = pneg %p219
        $region62: #{basenet_forward.1} parent=59 // pred_check_branch
          %4443 = sbr.rel (%p4441) target = $region64
        $region63: #{basenet_forward.1} parent=59 // pred_region
          %s4444 = sand.u32 %s204, 1
          %s4445 = scalar_lea.sflag [#allocation8], %s4444
          %s4446 = sand.u32 %s204, 1
          %s4447 = scalar_lea.vmem [#allocation7], %s4446
          %4448 = dma.done %s4445, 16
        $region64: #{basenet_forward.1} parent=59 // pred_fallthru
          _
      $region60: #{basenet_forward.1} parent=5 // pred_fallthru
        _
    $region6: #{basenet_forward.1} parent=1 // loop_footer
      %s21 = sadd.s32 1, %s17
    $region7: #{basenet_forward.1} parent=1 // loop_footer_branch
      %16 = sbr.rel target = $region3
    $region8: #{basenet_forward.1} parent=1 // loop_exit
      _
    %4449 = vsyncpa [#allocation8], 1
    %s4450 = scalar_lea.sflag [#allocation8], 1
    %4451 = vsyncpa %s4450, 1

</llo_original>
